<compile_context>
chip_gen: v7x
topology: tpu7x:2x2x1
jax: 0.10.0
libtpu: 0.0.40
codegen_flags: <defaults>
</compile_context>

<pallas_src>
import math
from functools import partial

import jax
import jax.numpy as jnp
from jax import lax
from jax.experimental import pallas as pl
from jax.experimental.pallas import tpu as pltpu


# ----------------------------------------------------------------------------------
# One-time (init-time) weight preprocessing: fold H taps + H padding into band matrices
# ----------------------------------------------------------------------------------
def _band_weight(w_kkio, h_in, pad):
    """Fold the kh taps (and a virtual H zero-padding of `pad`) of a (K,K,Cin,Cout)
    kernel into a banded matrix per kd tap.

    Returns (w2, h_out) with w2 of shape (K, h_in*Cin, h_out*Cout) such that
      out[..., ho*Cout+co] = sum_{hi,ci} in[..., hi*Cin+ci] * w2[kd, hi*Cin+ci, ho*Cout+co]
    implements   out[ho] = sum_kh x_padded[ho+kh] @ w[kd, kh]   (VALID conv over padded H).
    """
    K, K2, Cin, Cout = w_kkio.shape
    assert K == K2
    h_out = h_in + 2 * pad - K + 1
    hi = jnp.arange(h_in)[:, None]                    # (h_in, 1)
    ho = jnp.arange(h_out)[None, :]                   # (1, h_out)
    kh = hi + pad - ho                                # (h_in, h_out)
    valid = (kh >= 0) & (kh < K)
    kh_c = jnp.clip(kh, 0, K - 1)
    wg = w_kkio[:, kh_c, :, :]                        # (K, h_in, h_out, Cin, Cout)
    wg = jnp.where(valid[None, :, :, None, None], wg, 0.0)
    w2 = jnp.transpose(wg, (0, 1, 3, 2, 4)).reshape(K, h_in * Cin, h_out * Cout)
    return w2, h_out


def prepare_kernel_params(params, D, H, B):
    """Hoisted, one-time preprocessing (perf feedback: no per-forward weight massaging).

    Converts torch-layout weights to kernel-ready fused banded matrices (pre-broadcast
    over the folded batch B = N*W), biases tiled over Hout, plus static per-layer meta.
    """
    layers = []
    for (wt, b) in params["down"]:
        # torch Conv3d weight (O, I, k, k, 1) -> (k, k, I, O); VALID conv, no pad.
        w = jnp.transpose(wt[..., 0], (2, 3, 1, 0))
        layers.append((w, b, 0))
    for (wt, b) in params["up"]:
        # torch ConvTranspose3d weight (I, O, k, k, 1) -> (k, k, I, O), spatially
        # flipped; transposed conv == pad(k-1) + VALID conv with flipped kernel.
        w = jnp.transpose(wt[..., 0], (2, 3, 0, 1))[::-1, ::-1]
        layers.append((w, b, wt.shape[2] - 1))

    w2s, biases, meta = [], [], []
    d_cur, h_cur = D, H
    for (w, b, pad) in layers:
        K, _, Cin, Cout = w.shape
        w2, h_out = _band_weight(w, h_cur, pad)
        d_out = d_cur + 2 * pad - K + 1
        # Pre-broadcast over B so the in-kernel contraction is the flash-attention-style
        # batched matmul 'bdk,bkn->bdn' (well-supported Mosaic pattern).
        w2b = jnp.broadcast_to(w2[:, None], (K, B, h_cur * Cin, h_out * Cout)) + 0.0
        b_t = jnp.tile(b, h_out).reshape(1, 1, h_out * Cout)
        w2s.append(w2b)
        biases.append(b_t)
        meta.append((K, pad, d_out, h_cur * Cin, h_out * Cout, Cout))
        d_cur, h_cur = d_out, h_out

    return {"w2s": tuple(w2s), "biases": tuple(biases), "meta": tuple(meta)}


# ----------------------------------------------------------------------------------
# Fused forward: whole network in a single grid-less pallas_call
# ----------------------------------------------------------------------------------
@partial(jax.jit, static_argnums=(3,))
def _forward_impl(x_ncdhw, w2s, biases, meta):
    N, C, D, H, W = x_ncdhw.shape
    B = N * W
    n_layers = len(meta)
    d_fin, l_fin, c_fin = meta[-1][2], meta[-1][4], meta[-1][5]

    # NCDHW -> (N*W, D, H*C): W is purely batched (kernel size 1 along W); the last
    # axis is the (H-major, C-minor) flattening matched by the banded weights.
    x = jnp.transpose(x_ncdhw, (0, 4, 2, 3, 1)).reshape(B, D, H * C)

    def kernel(*refs):
        x_ref = refs[0]
        w_refs = refs[1:1 + n_layers]
        b_refs = refs[1 + n_layers:1 + 2 * n_layers]
        o_ref = refs[-1]

        a = x_ref[...]                                          # (B, D, H*C), f32
        for l in range(n_layers):
            K, dpad, d_out, l_in, l_out, _ = meta[l]
            if dpad:
                # Transposed-conv D padding, done on the VMEM-resident value
                # (H padding is already folded into the banded weights).
                z = jnp.zeros((B, dpad, l_in), a.dtype)
                a = jnp.concatenate([z, a, z], axis=1)
            acc = None
            for kd in range(K):                                  # K D-axis taps
                lhs = a[:, kd:kd + d_out, :]                     # (B, d_out, l_in)
                t = jnp.einsum("bdk,bkn->bdn", lhs, w_refs[l][kd],
                               preferred_element_type=jnp.float32)
                acc = t if acc is None else acc + t
            a = jax.nn.sigmoid(acc + b_refs[l][...])             # (B, d_out, l_out)
        o_ref[...] = a.astype(o_ref.dtype)

    vmem = pltpu.MemorySpace.VMEM
    out = pl.pallas_call(
        kernel,
        out_shape=jax.ShapeDtypeStruct((B, d_fin, l_fin), x.dtype),
        in_specs=[pl.BlockSpec(memory_space=vmem)] * (1 + 2 * n_layers),
        out_specs=pl.BlockSpec(memory_space=vmem),
    )(x, *w2s, *biases)

    h_fin = l_fin // c_fin
    # (N*W, D, H*C) -> NCDHW (cheap wrapper-side layout plumbing).
    return jnp.transpose(out.reshape(N, W, d_fin, h_fin, c_fin), (0, 4, 2, 3, 1))


def autoencoder_forward(x_ncdhw, kparams):
    return _forward_impl(x_ncdhw, kparams["w2s"], kparams["biases"], kparams["meta"])


# ----------------------------------------------------------------------------------
# Pure-JAX reference (independent path: lax.conv_general_dilated on raw torch params)
# ----------------------------------------------------------------------------------
def autoencoder_forward_ref(x_ncdhw, params):
    N, C, D, H, W = x_ncdhw.shape
    x = jnp.transpose(x_ncdhw, (0, 4, 2, 3, 1)).reshape(N * W, D, H, C)
    for (wt, b) in params["down"]:
        w = jnp.transpose(wt[..., 0], (2, 3, 1, 0))
        y = lax.conv_general_dilated(x, w, (1, 1), "VALID",
                                     dimension_numbers=("NHWC", "HWIO", "NHWC"))
        x = jax.nn.sigmoid(y + b)
    for (wt, b) in params["up"]:
        k = wt.shape[2]
        w = jnp.transpose(wt[..., 0], (2, 3, 0, 1))[::-1, ::-1]
        xp = jnp.pad(x, ((0, 0), (k - 1, k - 1), (k - 1, k - 1), (0, 0)))
        y = lax.conv_general_dilated(xp, w, (1, 1), "VALID",
                                     dimension_numbers=("NHWC", "HWIO", "NHWC"))
        x = jax.nn.sigmoid(y + b)
    Bf, Do, Ho, Co = x.shape
    return jnp.transpose(x.reshape(N, W, Do, Ho, Co), (0, 4, 2, 3, 1))


# ----------------------------------------------------------------------------------
# Deterministic synthetic parameters (same shapes / init stats as the torch module)
# ----------------------------------------------------------------------------------
def init_params(key, options, batch_size):
    n = len(options)
    keys = jax.random.split(key, 4 * n)
    ki = 0
    down, up = [], []

    in_c = batch_size
    for i in range(n):
        k, out_c, _ = options[i]
        w = 0.5 + 0.7 * jax.random.normal(keys[ki], (out_c, in_c, k, k, 1), jnp.float32); ki += 1
        bound = 1.0 / math.sqrt(in_c * k * k)
        b = jax.random.uniform(keys[ki], (out_c,), jnp.float32, -bound, bound); ki += 1
        down.append((w, b))
        in_c = out_c

    for i in range(n):
        if i != n - 1:
            k = options[n - 1 - i][0]
            cin = options[n - 1 - i][1]
            cout = options[n - 1 - i - 1][1]
        else:
            k = options[0][0]
            cin = options[0][1]
            cout = batch_size
        w = 0.5 + 0.7 * jax.random.normal(keys[ki], (cin, cout, k, k, 1), jnp.float32); ki += 1
        bound = 1.0 / math.sqrt(cin * k * k)
        b = jax.random.uniform(keys[ki], (cout,), jnp.float32, -bound, bound); ki += 1
        up.append((w, b))

    # NOTE: MaxPool3d / MaxUnpool3d layers exist in __init__ but are never called in forward.
    return {"down": down, "up": up}


if __name__ == "__main__":
    key = jax.random.PRNGKey(0)

    # options[i] = (kernel_size_wh, out_channels, pool_stride)  (pool layers unused in forward)
    options = [(3, 4, 2), (3, 8, 2)]
    N, batch_size, D, H, W = 1, 2, 16, 16, 4   # Conv3d(in=batch_size, ...) => C == batch_size

    params = init_params(key, options, batch_size)
    kparams = prepare_kernel_params(params, D, H, N * W)   # hoisted: done once, not per forward
    x = jax.random.normal(jax.random.fold_in(key, 999), (N, batch_size, D, H, W), jnp.float32)

    out = jax.block_until_ready(autoencoder_forward(x, kparams))
    ref = jax.block_until_ready(autoencoder_forward_ref(x, params))

    assert out.shape == (N, batch_size, D, H, W), out.shape
    assert jnp.allclose(out, ref, atol=1e-5, rtol=1e-5), float(jnp.max(jnp.abs(out - ref)))
    print("KERNEL_OK")
</pallas_src>

<mosaic_0001>
module attributes {stable_mosaic.version = 11 : i64} {
  func.func @kernel(%arg0: memref<4x16x32xf32, #tpu.memory_space<vmem>>, %arg1: memref<3x4x32x56xf32, #tpu.memory_space<vmem>>, %arg2: memref<3x4x56x96xf32, #tpu.memory_space<vmem>>, %arg3: memref<3x4x96x56xf32, #tpu.memory_space<vmem>>, %arg4: memref<3x4x56x32xf32, #tpu.memory_space<vmem>>, %arg5: memref<1x1x56xf32, #tpu.memory_space<vmem>>, %arg6: memref<1x1x96xf32, #tpu.memory_space<vmem>>, %arg7: memref<1x1x56xf32, #tpu.memory_space<vmem>>, %arg8: memref<1x1x32xf32, #tpu.memory_space<vmem>>, %arg9: memref<4x16x32xf32, #tpu.memory_space<vmem>>) attributes {dimension_semantics = [], scalar_prefetch = 0 : i64, scratch_operands = 0 : i64, tpu.core_type = #tpu.core_type<tc>} {
    %c0 = arith.constant 0 : index
    %c0_0 = arith.constant 0 : index
    %c0_1 = arith.constant 0 : index
    %0 = vector.load %arg0[%c0, %c0_0, %c0_1] : memref<4x16x32xf32, #tpu.memory_space<vmem>>, vector<4x16x32xf32>
    %1 = vector.extract_strided_slice %0 {offsets = [0, 0, 0], sizes = [4, 14, 32], strides = [1, 1, 1]} : vector<4x16x32xf32> to vector<4x14x32xf32>
    %c0_2 = arith.constant 0 : index
    %c0_3 = arith.constant 0 : index
    %c0_4 = arith.constant 0 : index
    %c0_5 = arith.constant 0 : index
    %2 = vector.load %arg1[%c0_2, %c0_3, %c0_4, %c0_5] : memref<3x4x32x56xf32, #tpu.memory_space<vmem>>, vector<1x4x32x56xf32>
    %3 = vector.shape_cast %2 : vector<1x4x32x56xf32> to vector<4x32x56xf32>
    "tpu.trace_start"() <{level = 10 : i32, message = "bdk,bkn->bdn"}> : () -> ()
    %cst = arith.constant dense<0.000000e+00> : vector<4x14x56xf32>
    %4 = tpu.matmul %1, %3, %cst {dimension_numbers = #tpu.dot_dimension_numbers<[2], [1], [1], [2], [0, 0, 0, 1, 1, 2], [0], [0]>} : vector<4x14x32xf32>, vector<4x32x56xf32>, vector<4x14x56xf32> -> vector<4x14x56xf32>
    "tpu.trace_stop"() : () -> ()
    %5 = vector.extract_strided_slice %0 {offsets = [0, 1, 0], sizes = [4, 14, 32], strides = [1, 1, 1]} : vector<4x16x32xf32> to vector<4x14x32xf32>
    %c1 = arith.constant 1 : index
    %c0_6 = arith.constant 0 : index
    %c0_7 = arith.constant 0 : index
    %c0_8 = arith.constant 0 : index
    %6 = vector.load %arg1[%c1, %c0_6, %c0_7, %c0_8] : memref<3x4x32x56xf32, #tpu.memory_space<vmem>>, vector<1x4x32x56xf32>
    %7 = vector.shape_cast %6 : vector<1x4x32x56xf32> to vector<4x32x56xf32>
    "tpu.trace_start"() <{level = 10 : i32, message = "bdk,bkn->bdn"}> : () -> ()
    %cst_9 = arith.constant dense<0.000000e+00> : vector<4x14x56xf32>
    %8 = tpu.matmul %5, %7, %cst_9 {dimension_numbers = #tpu.dot_dimension_numbers<[2], [1], [1], [2], [0, 0, 0, 1, 1, 2], [0], [0]>} : vector<4x14x32xf32>, vector<4x32x56xf32>, vector<4x14x56xf32> -> vector<4x14x56xf32>
    "tpu.trace_stop"() : () -> ()
    %9 = arith.addf %4, %8 : vector<4x14x56xf32>
    %10 = vector.extract_strided_slice %0 {offsets = [0, 2, 0], sizes = [4, 14, 32], strides = [1, 1, 1]} : vector<4x16x32xf32> to vector<4x14x32xf32>
    %c2 = arith.constant 2 : index
    %c0_10 = arith.constant 0 : index
    %c0_11 = arith.constant 0 : index
    %c0_12 = arith.constant 0 : index
    %11 = vector.load %arg1[%c2, %c0_10, %c0_11, %c0_12] : memref<3x4x32x56xf32, #tpu.memory_space<vmem>>, vector<1x4x32x56xf32>
    %12 = vector.shape_cast %11 : vector<1x4x32x56xf32> to vector<4x32x56xf32>
    "tpu.trace_start"() <{level = 10 : i32, message = "bdk,bkn->bdn"}> : () -> ()
    %cst_13 = arith.constant dense<0.000000e+00> : vector<4x14x56xf32>
    %13 = tpu.matmul %10, %12, %cst_13 {dimension_numbers = #tpu.dot_dimension_numbers<[2], [1], [1], [2], [0, 0, 0, 1, 1, 2], [0], [0]>} : vector<4x14x32xf32>, vector<4x32x56xf32>, vector<4x14x56xf32> -> vector<4x14x56xf32>
    "tpu.trace_stop"() : () -> ()
    %14 = arith.addf %9, %13 : vector<4x14x56xf32>
    %c0_14 = arith.constant 0 : index
    %c0_15 = arith.constant 0 : index
    %c0_16 = arith.constant 0 : index
    %15 = vector.load %arg5[%c0_14, %c0_15, %c0_16] : memref<1x1x56xf32, #tpu.memory_space<vmem>>, vector<1x1x56xf32>
    %16 = vector.broadcast %15 : vector<1x1x56xf32> to vector<4x14x56xf32>
    %17 = arith.addf %14, %16 : vector<4x14x56xf32>
    %18 = arith.negf %17 : vector<4x14x56xf32>
    %19 = math.exp %18 : vector<4x14x56xf32>
    %cst_17 = arith.constant 1.000000e+00 : f32
    %20 = vector.broadcast %cst_17 : f32 to vector<4x14x56xf32>
    %21 = arith.addf %20, %19 : vector<4x14x56xf32>
    %22 = arith.divf %20, %21 : vector<4x14x56xf32>
    %23 = vector.extract_strided_slice %22 {offsets = [0, 0, 0], sizes = [4, 12, 56], strides = [1, 1, 1]} : vector<4x14x56xf32> to vector<4x12x56xf32>
    %c0_18 = arith.constant 0 : index
    %c0_19 = arith.constant 0 : index
    %c0_20 = arith.constant 0 : index
    %c0_21 = arith.constant 0 : index
    %24 = vector.load %arg2[%c0_18, %c0_19, %c0_20, %c0_21] : memref<3x4x56x96xf32, #tpu.memory_space<vmem>>, vector<1x4x56x96xf32>
    %25 = vector.shape_cast %24 : vector<1x4x56x96xf32> to vector<4x56x96xf32>
    "tpu.trace_start"() <{level = 10 : i32, message = "bdk,bkn->bdn"}> : () -> ()
    %cst_22 = arith.constant dense<0.000000e+00> : vector<4x12x96xf32>
    %26 = tpu.matmul %23, %25, %cst_22 {dimension_numbers = #tpu.dot_dimension_numbers<[2], [1], [1], [2], [0, 0, 0, 1, 1, 2], [0], [0]>} : vector<4x12x56xf32>, vector<4x56x96xf32>, vector<4x12x96xf32> -> vector<4x12x96xf32>
    "tpu.trace_stop"() : () -> ()
    %27 = vector.extract_strided_slice %22 {offsets = [0, 1, 0], sizes = [4, 12, 56], strides = [1, 1, 1]} : vector<4x14x56xf32> to vector<4x12x56xf32>
    %c1_23 = arith.constant 1 : index
    %c0_24 = arith.constant 0 : index
    %c0_25 = arith.constant 0 : index
    %c0_26 = arith.constant 0 : index
    %28 = vector.load %arg2[%c1_23, %c0_24, %c0_25, %c0_26] : memref<3x4x56x96xf32, #tpu.memory_space<vmem>>, vector<1x4x56x96xf32>
    %29 = vector.shape_cast %28 : vector<1x4x56x96xf32> to vector<4x56x96xf32>
    "tpu.trace_start"() <{level = 10 : i32, message = "bdk,bkn->bdn"}> : () -> ()
    %cst_27 = arith.constant dense<0.000000e+00> : vector<4x12x96xf32>
    %30 = tpu.matmul %27, %29, %cst_27 {dimension_numbers = #tpu.dot_dimension_numbers<[2], [1], [1], [2], [0, 0, 0, 1, 1, 2], [0], [0]>} : vector<4x12x56xf32>, vector<4x56x96xf32>, vector<4x12x96xf32> -> vector<4x12x96xf32>
    "tpu.trace_stop"() : () -> ()
    %31 = arith.addf %26, %30 : vector<4x12x96xf32>
    %32 = vector.extract_strided_slice %22 {offsets = [0, 2, 0], sizes = [4, 12, 56], strides = [1, 1, 1]} : vector<4x14x56xf32> to vector<4x12x56xf32>
    %c2_28 = arith.constant 2 : index
    %c0_29 = arith.constant 0 : index
    %c0_30 = arith.constant 0 : index
    %c0_31 = arith.constant 0 : index
    %33 = vector.load %arg2[%c2_28, %c0_29, %c0_30, %c0_31] : memref<3x4x56x96xf32, #tpu.memory_space<vmem>>, vector<1x4x56x96xf32>
    %34 = vector.shape_cast %33 : vector<1x4x56x96xf32> to vector<4x56x96xf32>
    "tpu.trace_start"() <{level = 10 : i32, message = "bdk,bkn->bdn"}> : () -> ()
    %cst_32 = arith.constant dense<0.000000e+00> : vector<4x12x96xf32>
    %35 = tpu.matmul %32, %34, %cst_32 {dimension_numbers = #tpu.dot_dimension_numbers<[2], [1], [1], [2], [0, 0, 0, 1, 1, 2], [0], [0]>} : vector<4x12x56xf32>, vector<4x56x96xf32>, vector<4x12x96xf32> -> vector<4x12x96xf32>
    "tpu.trace_stop"() : () -> ()
    %36 = arith.addf %31, %35 : vector<4x12x96xf32>
    %c0_33 = arith.constant 0 : index
    %c0_34 = arith.constant 0 : index
    %c0_35 = arith.constant 0 : index
    %37 = vector.load %arg6[%c0_33, %c0_34, %c0_35] : memref<1x1x96xf32, #tpu.memory_space<vmem>>, vector<1x1x96xf32>
    %38 = vector.broadcast %37 : vector<1x1x96xf32> to vector<4x12x96xf32>
    %39 = arith.addf %36, %38 : vector<4x12x96xf32>
    %40 = arith.negf %39 : vector<4x12x96xf32>
    %41 = math.exp %40 : vector<4x12x96xf32>
    %cst_36 = arith.constant 1.000000e+00 : f32
    %42 = vector.broadcast %cst_36 : f32 to vector<4x12x96xf32>
    %43 = arith.addf %42, %41 : vector<4x12x96xf32>
    %44 = arith.divf %42, %43 : vector<4x12x96xf32>
    %cst_37 = arith.constant 0.000000e+00 : f32
    %45 = vector.broadcast %cst_37 : f32 to vector<4x2x96xf32>
    %46 = tpu.concatenate %45, %44, %45 in 1 : vector<4x2x96xf32>, vector<4x12x96xf32>, vector<4x2x96xf32> -> vector<4x16x96xf32>
    %47 = vector.extract_strided_slice %46 {offsets = [0, 0, 0], sizes = [4, 14, 96], strides = [1, 1, 1]} : vector<4x16x96xf32> to vector<4x14x96xf32>
    %c0_38 = arith.constant 0 : index
    %c0_39 = arith.constant 0 : index
    %c0_40 = arith.constant 0 : index
    %c0_41 = arith.constant 0 : index
    %48 = vector.load %arg3[%c0_38, %c0_39, %c0_40, %c0_41] : memref<3x4x96x56xf32, #tpu.memory_space<vmem>>, vector<1x4x96x56xf32>
    %49 = vector.shape_cast %48 : vector<1x4x96x56xf32> to vector<4x96x56xf32>
    "tpu.trace_start"() <{level = 10 : i32, message = "bdk,bkn->bdn"}> : () -> ()
    %cst_42 = arith.constant dense<0.000000e+00> : vector<4x14x56xf32>
    %50 = tpu.matmul %47, %49, %cst_42 {dimension_numbers = #tpu.dot_dimension_numbers<[2], [1], [1], [2], [0, 0, 0, 1, 1, 2], [0], [0]>} : vector<4x14x96xf32>, vector<4x96x56xf32>, vector<4x14x56xf32> -> vector<4x14x56xf32>
    "tpu.trace_stop"() : () -> ()
    %51 = vector.extract_strided_slice %46 {offsets = [0, 1, 0], sizes = [4, 14, 96], strides = [1, 1, 1]} : vector<4x16x96xf32> to vector<4x14x96xf32>
    %c1_43 = arith.constant 1 : index
    %c0_44 = arith.constant 0 : index
    %c0_45 = arith.constant 0 : index
    %c0_46 = arith.constant 0 : index
    %52 = vector.load %arg3[%c1_43, %c0_44, %c0_45, %c0_46] : memref<3x4x96x56xf32, #tpu.memory_space<vmem>>, vector<1x4x96x56xf32>
    %53 = vector.shape_cast %52 : vector<1x4x96x56xf32> to vector<4x96x56xf32>
    "tpu.trace_start"() <{level = 10 : i32, message = "bdk,bkn->bdn"}> : () -> ()
    %cst_47 = arith.constant dense<0.000000e+00> : vector<4x14x56xf32>
    %54 = tpu.matmul %51, %53, %cst_47 {dimension_numbers = #tpu.dot_dimension_numbers<[2], [1], [1], [2], [0, 0, 0, 1, 1, 2], [0], [0]>} : vector<4x14x96xf32>, vector<4x96x56xf32>, vector<4x14x56xf32> -> vector<4x14x56xf32>
    "tpu.trace_stop"() : () -> ()
    %55 = arith.addf %50, %54 : vector<4x14x56xf32>
    %56 = vector.extract_strided_slice %46 {offsets = [0, 2, 0], sizes = [4, 14, 96], strides = [1, 1, 1]} : vector<4x16x96xf32> to vector<4x14x96xf32>
    %c2_48 = arith.constant 2 : index
    %c0_49 = arith.constant 0 : index
    %c0_50 = arith.constant 0 : index
    %c0_51 = arith.constant 0 : index
    %57 = vector.load %arg3[%c2_48, %c0_49, %c0_50, %c0_51] : memref<3x4x96x56xf32, #tpu.memory_space<vmem>>, vector<1x4x96x56xf32>
    %58 = vector.shape_cast %57 : vector<1x4x96x56xf32> to vector<4x96x56xf32>
    "tpu.trace_start"() <{level = 10 : i32, message = "bdk,bkn->bdn"}> : () -> ()
    %cst_52 = arith.constant dense<0.000000e+00> : vector<4x14x56xf32>
    %59 = tpu.matmul %56, %58, %cst_52 {dimension_numbers = #tpu.dot_dimension_numbers<[2], [1], [1], [2], [0, 0, 0, 1, 1, 2], [0], [0]>} : vector<4x14x96xf32>, vector<4x96x56xf32>, vector<4x14x56xf32> -> vector<4x14x56xf32>
    "tpu.trace_stop"() : () -> ()
    %60 = arith.addf %55, %59 : vector<4x14x56xf32>
    %c0_53 = arith.constant 0 : index
    %c0_54 = arith.constant 0 : index
    %c0_55 = arith.constant 0 : index
    %61 = vector.load %arg7[%c0_53, %c0_54, %c0_55] : memref<1x1x56xf32, #tpu.memory_space<vmem>>, vector<1x1x56xf32>
    %62 = vector.broadcast %61 : vector<1x1x56xf32> to vector<4x14x56xf32>
    %63 = arith.addf %60, %62 : vector<4x14x56xf32>
    %64 = arith.negf %63 : vector<4x14x56xf32>
    %65 = math.exp %64 : vector<4x14x56xf32>
    %cst_56 = arith.constant 1.000000e+00 : f32
    %66 = vector.broadcast %cst_56 : f32 to vector<4x14x56xf32>
    %67 = arith.addf %66, %65 : vector<4x14x56xf32>
    %68 = arith.divf %66, %67 : vector<4x14x56xf32>
    %cst_57 = arith.constant 0.000000e+00 : f32
    %69 = vector.broadcast %cst_57 : f32 to vector<4x2x56xf32>
    %70 = tpu.concatenate %69, %68, %69 in 1 : vector<4x2x56xf32>, vector<4x14x56xf32>, vector<4x2x56xf32> -> vector<4x18x56xf32>
    %71 = vector.extract_strided_slice %70 {offsets = [0, 0, 0], sizes = [4, 16, 56], strides = [1, 1, 1]} : vector<4x18x56xf32> to vector<4x16x56xf32>
    %c0_58 = arith.constant 0 : index
    %c0_59 = arith.constant 0 : index
    %c0_60 = arith.constant 0 : index
    %c0_61 = arith.constant 0 : index
    %72 = vector.load %arg4[%c0_58, %c0_59, %c0_60, %c0_61] : memref<3x4x56x32xf32, #tpu.memory_space<vmem>>, vector<1x4x56x32xf32>
    %73 = vector.shape_cast %72 : vector<1x4x56x32xf32> to vector<4x56x32xf32>
    "tpu.trace_start"() <{level = 10 : i32, message = "bdk,bkn->bdn"}> : () -> ()
    %cst_62 = arith.constant dense<0.000000e+00> : vector<4x16x32xf32>
    %74 = tpu.matmul %71, %73, %cst_62 {dimension_numbers = #tpu.dot_dimension_numbers<[2], [1], [1], [2], [0, 0, 0, 1, 1, 2], [0], [0]>} : vector<4x16x56xf32>, vector<4x56x32xf32>, vector<4x16x32xf32> -> vector<4x16x32xf32>
    "tpu.trace_stop"() : () -> ()
    %75 = vector.extract_strided_slice %70 {offsets = [0, 1, 0], sizes = [4, 16, 56], strides = [1, 1, 1]} : vector<4x18x56xf32> to vector<4x16x56xf32>
    %c1_63 = arith.constant 1 : index
    %c0_64 = arith.constant 0 : index
    %c0_65 = arith.constant 0 : index
    %c0_66 = arith.constant 0 : index
    %76 = vector.load %arg4[%c1_63, %c0_64, %c0_65, %c0_66] : memref<3x4x56x32xf32, #tpu.memory_space<vmem>>, vector<1x4x56x32xf32>
    %77 = vector.shape_cast %76 : vector<1x4x56x32xf32> to vector<4x56x32xf32>
    "tpu.trace_start"() <{level = 10 : i32, message = "bdk,bkn->bdn"}> : () -> ()
    %cst_67 = arith.constant dense<0.000000e+00> : vector<4x16x32xf32>
    %78 = tpu.matmul %75, %77, %cst_67 {dimension_numbers = #tpu.dot_dimension_numbers<[2], [1], [1], [2], [0, 0, 0, 1, 1, 2], [0], [0]>} : vector<4x16x56xf32>, vector<4x56x32xf32>, vector<4x16x32xf32> -> vector<4x16x32xf32>
    "tpu.trace_stop"() : () -> ()
    %79 = arith.addf %74, %78 : vector<4x16x32xf32>
    %80 = vector.extract_strided_slice %70 {offsets = [0, 2, 0], sizes = [4, 16, 56], strides = [1, 1, 1]} : vector<4x18x56xf32> to vector<4x16x56xf32>
    %c2_68 = arith.constant 2 : index
    %c0_69 = arith.constant 0 : index
    %c0_70 = arith.constant 0 : index
    %c0_71 = arith.constant 0 : index
    %81 = vector.load %arg4[%c2_68, %c0_69, %c0_70, %c0_71] : memref<3x4x56x32xf32, #tpu.memory_space<vmem>>, vector<1x4x56x32xf32>
    %82 = vector.shape_cast %81 : vector<1x4x56x32xf32> to vector<4x56x32xf32>
    "tpu.trace_start"() <{level = 10 : i32, message = "bdk,bkn->bdn"}> : () -> ()
    %cst_72 = arith.constant dense<0.000000e+00> : vector<4x16x32xf32>
    %83 = tpu.matmul %80, %82, %cst_72 {dimension_numbers = #tpu.dot_dimension_numbers<[2], [1], [1], [2], [0, 0, 0, 1, 1, 2], [0], [0]>} : vector<4x16x56xf32>, vector<4x56x32xf32>, vector<4x16x32xf32> -> vector<4x16x32xf32>
    "tpu.trace_stop"() : () -> ()
    %84 = arith.addf %79, %83 : vector<4x16x32xf32>
    %c0_73 = arith.constant 0 : index
    %c0_74 = arith.constant 0 : index
    %c0_75 = arith.constant 0 : index
    %85 = vector.load %arg8[%c0_73, %c0_74, %c0_75] : memref<1x1x32xf32, #tpu.memory_space<vmem>>, vector<1x1x32xf32>
    %86 = vector.broadcast %85 : vector<1x1x32xf32> to vector<4x16x32xf32>
    %87 = arith.addf %84, %86 : vector<4x16x32xf32>
    %88 = arith.negf %87 : vector<4x16x32xf32>
    %89 = math.exp %88 : vector<4x16x32xf32>
    %cst_76 = arith.constant 1.000000e+00 : f32
    %90 = vector.broadcast %cst_76 : f32 to vector<4x16x32xf32>
    %91 = arith.addf %90, %89 : vector<4x16x32xf32>
    %92 = arith.divf %90, %91 : vector<4x16x32xf32>
    %c0_77 = arith.constant 0 : index
    %c0_78 = arith.constant 0 : index
    %c0_79 = arith.constant 0 : index
    %93 = vector.load %arg9[%c0_77, %c0_78, %c0_79] : memref<4x16x32xf32, #tpu.memory_space<vmem>>, vector<4x16x32xf32>
    tpu.vector_store %arg9[%c0_77, %c0_78, %c0_79], %92 {strides = array<i32>} : memref<4x16x32xf32, #tpu.memory_space<vmem>>, vector<4x16x32xf32>,
    return
  }
}

</mosaic_0001>

<llo_original>
// kernel: _forward_impl.1
$region0: #{_forward_impl.1}
  #allocation0 [shape = 'u32[]', space=smem, size = 0x4, offset = 0x4, fixed_abs, tag = 'smem constant byte address 0x4 - core index']
  #allocation1 [shape = 'u32[144,128]{1,0:T(1,128)}', space=vmem, size = 0x12000, scoped, tag = 'internal scratch']
  %s0 = inlined_call_operand.vmem [shape: f32[4,16,32], index: 0, kind: input, shape index: {}]
  %s1 = inlined_call_operand.vmem [shape: f32[3,4,32,56], index: 1, kind: input, shape index: {}]
  %s2 = inlined_call_operand.vmem [shape: f32[3,4,56,96], index: 2, kind: input, shape index: {}]
  %s3 = inlined_call_operand.vmem [shape: f32[3,4,96,56], index: 3, kind: input, shape index: {}]
  %s4 = inlined_call_operand.vmem [shape: f32[3,4,56,32], index: 4, kind: input, shape index: {}]
  %s5 = inlined_call_operand.vmem [shape: f32[1,1,56], index: 5, kind: input, shape index: {}]
  %s6 = inlined_call_operand.vmem [shape: f32[1,1,96], index: 6, kind: input, shape index: {}]
  %s7 = inlined_call_operand.vmem [shape: f32[1,1,56], index: 7, kind: input, shape index: {}]
  %s8 = inlined_call_operand.vmem [shape: f32[1,1,32], index: 8, kind: input, shape index: {}]
  %s9 = inlined_call_operand.vmem [shape: f32[4,16,32], index: 9, kind: output, shape index: {}]
  %s10 = sld [smem:[#allocation0]]
  $region46: #{_forward_impl.1} parent=0
    _
  %s12 = ssub.s32 1, %s10
  %s13 = scalar_select 0, %s12, %s10
  // Predicated region
  $region2: #{_forward_impl.1} parent=0 // pred_check
    _
  $region3: #{_forward_impl.1} parent=0 // pred_check_branch
    %15 = sbr.rel (0) target = $region5
  $region4: #{_forward_impl.1} parent=0 // pred_region
    _
  $region5: #{_forward_impl.1} parent=0 // pred_fallthru
    _
  // Predicated region
  $region6: #{_forward_impl.1} parent=0 // pred_check
    _
  $region7: #{_forward_impl.1} parent=0 // pred_check_branch
    %17 = sbr.rel (0) target = $region9
  $region8: #{_forward_impl.1} parent=0 // pred_region
    _
  $region9: #{_forward_impl.1} parent=0 // pred_fallthru
    _
  // Predicated region
  $region10: #{_forward_impl.1} parent=0 // pred_check
    _
  $region11: #{_forward_impl.1} parent=0 // pred_check_branch
    %19 = sbr.rel (0) target = $region13
  $region12: #{_forward_impl.1} parent=0 // pred_region
    _
  $region13: #{_forward_impl.1} parent=0 // pred_fallthru
    _
  // Predicated region
  $region14: #{_forward_impl.1} parent=0 // pred_check
    _
  $region15: #{_forward_impl.1} parent=0 // pred_check_branch
    %21 = sbr.rel (0) target = $region17
  $region16: #{_forward_impl.1} parent=0 // pred_region
    _
  $region17: #{_forward_impl.1} parent=0 // pred_fallthru
    _
  // Predicated region
  $region18: #{_forward_impl.1} parent=0 // pred_check
    _
  $region19: #{_forward_impl.1} parent=0 // pred_check_branch
    %23 = sbr.rel (0) target = $region21
  $region20: #{_forward_impl.1} parent=0 // pred_region
    _
  $region21: #{_forward_impl.1} parent=0 // pred_fallthru
    _
  // Predicated region
  $region22: #{_forward_impl.1} parent=0 // pred_check
    _
  $region23: #{_forward_impl.1} parent=0 // pred_check_branch
    %25 = sbr.rel (0) target = $region25
  $region24: #{_forward_impl.1} parent=0 // pred_region
    _
  $region25: #{_forward_impl.1} parent=0 // pred_fallthru
    _
  // Predicated region
  $region26: #{_forward_impl.1} parent=0 // pred_check
    _
  $region27: #{_forward_impl.1} parent=0 // pred_check_branch
    %27 = sbr.rel (0) target = $region29
  $region28: #{_forward_impl.1} parent=0 // pred_region
    _
  $region29: #{_forward_impl.1} parent=0 // pred_fallthru
    _
  // Predicated region
  $region30: #{_forward_impl.1} parent=0 // pred_check
    _
  $region31: #{_forward_impl.1} parent=0 // pred_check_branch
    %29 = sbr.rel (0) target = $region33
  $region32: #{_forward_impl.1} parent=0 // pred_region
    _
  $region33: #{_forward_impl.1} parent=0 // pred_fallthru
    _
  // Predicated region
  $region34: #{_forward_impl.1} parent=0 // pred_check
    _
  $region35: #{_forward_impl.1} parent=0 // pred_check_branch
    %31 = sbr.rel (0) target = $region37
  $region36: #{_forward_impl.1} parent=0 // pred_region
    _
  $region37: #{_forward_impl.1} parent=0 // pred_fallthru
    _
  %v32 = vld [vmem:[%s0] sm:$0xff]
  %v33 = vld [vmem:[%s0 + $0x8] sm:$0xff]
  %v34 = vld [vmem:[%s0 + $0x10] sm:$0xff]
  %v35 = vld [vmem:[%s0 + $0x18] sm:$0xff]
  %v36 = vld [vmem:[%s0 + $0x20] sm:$0xff]
  %v37 = vld [vmem:[%s0 + $0x28] sm:$0xff]
  %v38 = vld [vmem:[%s0 + $0x30] sm:$0xff]
  %v39 = vld [vmem:[%s0 + $0x38] sm:$0xff]
  %v40 = vld [vmem:[%s1] sm:$0xff]
  %v41 = vld [vmem:[%s1 + $0x8] sm:$0xff]
  %v42 = vld [vmem:[%s1 + $0x10] sm:$0xff]
  %v43 = vld [vmem:[%s1 + $0x18] sm:$0xff]
  %v44 = vld [vmem:[%s1 + $0x20] sm:$0xff]
  %v45 = vld [vmem:[%s1 + $0x28] sm:$0xff]
  %v46 = vld [vmem:[%s1 + $0x30] sm:$0xff]
  %v47 = vld [vmem:[%s1 + $0x38] sm:$0xff]
  %v48 = vld [vmem:[%s1 + $0x40] sm:$0xff]
  %v49 = vld [vmem:[%s1 + $0x48] sm:$0xff]
  %v50 = vld [vmem:[%s1 + $0x50] sm:$0xff]
  %v51 = vld [vmem:[%s1 + $0x58] sm:$0xff]
  %v52 = vld [vmem:[%s1 + $0x60] sm:$0xff]
  %v53 = vld [vmem:[%s1 + $0x68] sm:$0xff]
  %v54 = vld [vmem:[%s1 + $0x70] sm:$0xff]
  %v55 = vld [vmem:[%s1 + $0x78] sm:$0xff]
  %s56 = scalar_lea.vmem %s1, 128
  %v57 = vld [vmem:[%s56] sm:$0xff]
  %v58 = vld [vmem:[%s56 + $0x8] sm:$0xff]
  %v59 = vld [vmem:[%s56 + $0x10] sm:$0xff]
  %v60 = vld [vmem:[%s56 + $0x18] sm:$0xff]
  %v61 = vld [vmem:[%s56 + $0x20] sm:$0xff]
  %v62 = vld [vmem:[%s56 + $0x28] sm:$0xff]
  %v63 = vld [vmem:[%s56 + $0x30] sm:$0xff]
  %v64 = vld [vmem:[%s56 + $0x38] sm:$0xff]
  %v65 = vld [vmem:[%s56 + $0x40] sm:$0xff]
  %v66 = vld [vmem:[%s56 + $0x48] sm:$0xff]
  %v67 = vld [vmem:[%s56 + $0x50] sm:$0xff]
  %v68 = vld [vmem:[%s56 + $0x58] sm:$0xff]
  %v69 = vld [vmem:[%s56 + $0x60] sm:$0xff]
  %v70 = vld [vmem:[%s56 + $0x68] sm:$0xff]
  %v71 = vld [vmem:[%s56 + $0x70] sm:$0xff]
  %v72 = vld [vmem:[%s56 + $0x78] sm:$0xff]
  %vm75 = vcmask 1046528
  %v76 = vrot.slane %v32, 1
  %v77 = vrot.slane %v33, 1
  %v78 = vsel %vm75, %v76, %v77
  %vm79 = vcmask 261120
  %v80 = vsel %vm79, %v78, 0
  %v82 = vsel %vm79, %v77, 0
  %84 = vmatprep.subr.mxu0 0.0
  %85 = vmatpush1.msra.mxu0 %v57
  %86 = vmatprep.subr.mxu0 0.0
  %87 = vmatpush1.msra.mxu0 %v58
  %88 = vmatprep.subr.mxu0 0.0
  %89 = vmatpush1.msra.mxu0 %v59
  %90 = vmatprep.subr.mxu0 0.0
  %91 = vmatpush1.msra.mxu0 %v60
  %92 = vmatprep.subr.mxu0 0.0
  %93 = vmatpush1.msra.mxu0 0.0
  %94 = vmatprep.subr.mxu0 0.0
  %95 = vmatpush1.msra.mxu0 0.0
  %96 = vmatprep.subr.mxu0 0.0
  %97 = vmatpush1.msra.mxu0 0.0
  %98 = vmatprep.subr.mxu0 0.0
  %99 = vmatpush1.msra.mxu0 0.0
  %100 = vmatprep.subr.mxu0 0.0
  %101 = vmatpush1.msra.mxu0 0.0
  %102 = vmatprep.subr.mxu0 0.0
  %103 = vmatpush1.msra.mxu0 0.0
  %104 = vmatprep.subr.mxu0 0.0
  %105 = vmatpush1.msra.mxu0 0.0
  %106 = vmatprep.subr.mxu0 0.0
  %107 = vmatpush1.msra.mxu0 0.0
  %108 = vmatprep.subr.mxu0 0.0
  %109 = vmatpush1.msra.mxu0 0.0
  %110 = vmatprep.subr.mxu0 0.0
  %111 = vmatpush1.msra.mxu0 0.0
  %112 = vmatprep.subr.mxu0 0.0
  %113 = vmatpush1.msra.mxu0 0.0
  %114 = vmatprep.subr.mxu0 0.0
  %115 = vmatpush1.msra.mxu0 0.0
  %116 = vmatprep.subr.mxu0 0.0
  %117 = vmatpush1.msra.mxu0 0.0
  %118 = vmatprep.subr.mxu0 0.0
  %119 = vmatpush1.msra.mxu0 0.0
  %120 = vmatprep.subr.mxu0 0.0
  %121 = vmatpush1.msra.mxu0 0.0
  %122 = vmatprep.subr.mxu0 0.0
  %123 = vmatpush1.msra.mxu0 0.0
  %124 = vmatprep.subr.mxu0 0.0
  %125 = vmatpush1.msra.mxu0 0.0
  %126 = vmatprep.subr.mxu0 0.0
  %127 = vmatpush1.msra.mxu0 0.0
  %128 = vmatprep.subr.mxu0 0.0
  %129 = vmatpush1.msra.mxu0 0.0
  %130 = vmatprep.subr.mxu0 0.0
  %131 = vmatpush1.msra.mxu0 0.0
  %132 = vmatprep.subr.mxu0 0.0
  %133 = vmatpush1.msra.mxu0 0.0
  %134 = vmatprep.subr.mxu0 0.0
  %135 = vmatpush1.msra.mxu0 0.0
  %136 = vmatprep.subr.mxu0 0.0
  %137 = vmatpush1.msra.mxu0 0.0
  %138 = vmatprep.subr.mxu0 0.0
  %139 = vmatpush1.msra.mxu0 0.0
  %140 = vmatprep.subr.mxu0 0.0
  %141 = vmatpush1.msra.mxu0 0.0
  %142 = vmatprep.subr.mxu0 0.0
  %143 = vmatpush1.msra.mxu0 0.0
  %144 = vmatprep.subr.mxu0 0.0
  %145 = vmatpush1.msra.mxu0 0.0
  %146 = vmatprep.subr.mxu0 0.0
  %147 = vmatpush1.msra.mxu0 0.0
  %148 = vmatprep.mubr.f32.mxu0 0.0
  %149 = vmatmul.mubr.f32.gmra.mrb[0].mxu0 %v80
  %v150 = vpop.f32.mrb[0].mxu0
  %v151 = vadd.f32 0.0, %v150
  %v152 = vpop.f32.mrb[0].mxu0
  %153 = vmatprep.mubr.f32.mxu0 0.0
  %154 = vmatmul.mubr.f32.gmra.mrb[0].mxu0 %v82
  %v155 = vpop.f32.mrb[0].mxu0
  %v156 = vadd.f32 0.0, %v155
  %v157 = vpop.f32.mrb[0].mxu0
  %158 = vdwg.mxu0
  %v161 = vrot.slane %v34, 1
  %v162 = vrot.slane %v35, 1
  %v163 = vsel %vm75, %v161, %v162
  %v164 = vsel %vm79, %v163, 0
  %v166 = vsel %vm79, %v162, 0
  %168 = vmatprep.subr.mxu0 0.0
  %169 = vmatpush1.msra.mxu0 %v61
  %170 = vmatprep.subr.mxu0 0.0
  %171 = vmatpush1.msra.mxu0 %v62
  %172 = vmatprep.subr.mxu0 0.0
  %173 = vmatpush1.msra.mxu0 %v63
  %174 = vmatprep.subr.mxu0 0.0
  %175 = vmatpush1.msra.mxu0 %v64
  %176 = vmatprep.subr.mxu0 0.0
  %177 = vmatpush1.msra.mxu0 0.0
  %178 = vmatprep.subr.mxu0 0.0
  %179 = vmatpush1.msra.mxu0 0.0
  %180 = vmatprep.subr.mxu0 0.0
  %181 = vmatpush1.msra.mxu0 0.0
  %182 = vmatprep.subr.mxu0 0.0
  %183 = vmatpush1.msra.mxu0 0.0
  %184 = vmatprep.subr.mxu0 0.0
  %185 = vmatpush1.msra.mxu0 0.0
  %186 = vmatprep.subr.mxu0 0.0
  %187 = vmatpush1.msra.mxu0 0.0
  %188 = vmatprep.subr.mxu0 0.0
  %189 = vmatpush1.msra.mxu0 0.0
  %190 = vmatprep.subr.mxu0 0.0
  %191 = vmatpush1.msra.mxu0 0.0
  %192 = vmatprep.subr.mxu0 0.0
  %193 = vmatpush1.msra.mxu0 0.0
  %194 = vmatprep.subr.mxu0 0.0
  %195 = vmatpush1.msra.mxu0 0.0
  %196 = vmatprep.subr.mxu0 0.0
  %197 = vmatpush1.msra.mxu0 0.0
  %198 = vmatprep.subr.mxu0 0.0
  %199 = vmatpush1.msra.mxu0 0.0
  %200 = vmatprep.subr.mxu0 0.0
  %201 = vmatpush1.msra.mxu0 0.0
  %202 = vmatprep.subr.mxu0 0.0
  %203 = vmatpush1.msra.mxu0 0.0
  %204 = vmatprep.subr.mxu0 0.0
  %205 = vmatpush1.msra.mxu0 0.0
  %206 = vmatprep.subr.mxu0 0.0
  %207 = vmatpush1.msra.mxu0 0.0
  %208 = vmatprep.subr.mxu0 0.0
  %209 = vmatpush1.msra.mxu0 0.0
  %210 = vmatprep.subr.mxu0 0.0
  %211 = vmatpush1.msra.mxu0 0.0
  %212 = vmatprep.subr.mxu0 0.0
  %213 = vmatpush1.msra.mxu0 0.0
  %214 = vmatprep.subr.mxu0 0.0
  %215 = vmatpush1.msra.mxu0 0.0
  %216 = vmatprep.subr.mxu0 0.0
  %217 = vmatpush1.msra.mxu0 0.0
  %218 = vmatprep.subr.mxu0 0.0
  %219 = vmatpush1.msra.mxu0 0.0
  %220 = vmatprep.subr.mxu0 0.0
  %221 = vmatpush1.msra.mxu0 0.0
  %222 = vmatprep.subr.mxu0 0.0
  %223 = vmatpush1.msra.mxu0 0.0
  %224 = vmatprep.subr.mxu0 0.0
  %225 = vmatpush1.msra.mxu0 0.0
  %226 = vmatprep.subr.mxu0 0.0
  %227 = vmatpush1.msra.mxu0 0.0
  %228 = vmatprep.subr.mxu0 0.0
  %229 = vmatpush1.msra.mxu0 0.0
  %230 = vmatprep.subr.mxu0 0.0
  %231 = vmatpush1.msra.mxu0 0.0
  %232 = vmatprep.mubr.f32.mxu0 0.0
  %233 = vmatmul.mubr.f32.gmra.mrb[0].mxu0 %v164
  %v234 = vpop.f32.mrb[0].mxu0
  %v235 = vadd.f32 0.0, %v234
  %v236 = vpop.f32.mrb[0].mxu0
  %237 = vmatprep.mubr.f32.mxu0 0.0
  %238 = vmatmul.mubr.f32.gmra.mrb[0].mxu0 %v166
  %v239 = vpop.f32.mrb[0].mxu0
  %v240 = vadd.f32 0.0, %v239
  %v241 = vpop.f32.mrb[0].mxu0
  %242 = vdwg.mxu0
  %v245 = vrot.slane %v36, 1
  %v246 = vrot.slane %v37, 1
  %v247 = vsel %vm75, %v245, %v246
  %v248 = vsel %vm79, %v247, 0
  %v250 = vsel %vm79, %v246, 0
  %252 = vmatprep.subr.mxu0 0.0
  %253 = vmatpush1.msra.mxu0 %v65
  %254 = vmatprep.subr.mxu0 0.0
  %255 = vmatpush1.msra.mxu0 %v66
  %256 = vmatprep.subr.mxu0 0.0
  %257 = vmatpush1.msra.mxu0 %v67
  %258 = vmatprep.subr.mxu0 0.0
  %259 = vmatpush1.msra.mxu0 %v68
  %260 = vmatprep.subr.mxu0 0.0
  %261 = vmatpush1.msra.mxu0 0.0
  %262 = vmatprep.subr.mxu0 0.0
  %263 = vmatpush1.msra.mxu0 0.0
  %264 = vmatprep.subr.mxu0 0.0
  %265 = vmatpush1.msra.mxu0 0.0
  %266 = vmatprep.subr.mxu0 0.0
  %267 = vmatpush1.msra.mxu0 0.0
  %268 = vmatprep.subr.mxu0 0.0
  %269 = vmatpush1.msra.mxu0 0.0
  %270 = vmatprep.subr.mxu0 0.0
  %271 = vmatpush1.msra.mxu0 0.0
  %272 = vmatprep.subr.mxu0 0.0
  %273 = vmatpush1.msra.mxu0 0.0
  %274 = vmatprep.subr.mxu0 0.0
  %275 = vmatpush1.msra.mxu0 0.0
  %276 = vmatprep.subr.mxu0 0.0
  %277 = vmatpush1.msra.mxu0 0.0
  %278 = vmatprep.subr.mxu0 0.0
  %279 = vmatpush1.msra.mxu0 0.0
  %280 = vmatprep.subr.mxu0 0.0
  %281 = vmatpush1.msra.mxu0 0.0
  %282 = vmatprep.subr.mxu0 0.0
  %283 = vmatpush1.msra.mxu0 0.0
  %284 = vmatprep.subr.mxu0 0.0
  %285 = vmatpush1.msra.mxu0 0.0
  %286 = vmatprep.subr.mxu0 0.0
  %287 = vmatpush1.msra.mxu0 0.0
  %288 = vmatprep.subr.mxu0 0.0
  %289 = vmatpush1.msra.mxu0 0.0
  %290 = vmatprep.subr.mxu0 0.0
  %291 = vmatpush1.msra.mxu0 0.0
  %292 = vmatprep.subr.mxu0 0.0
  %293 = vmatpush1.msra.mxu0 0.0
  %294 = vmatprep.subr.mxu0 0.0
  %295 = vmatpush1.msra.mxu0 0.0
  %296 = vmatprep.subr.mxu0 0.0
  %297 = vmatpush1.msra.mxu0 0.0
  %298 = vmatprep.subr.mxu0 0.0
  %299 = vmatpush1.msra.mxu0 0.0
  %300 = vmatprep.subr.mxu0 0.0
  %301 = vmatpush1.msra.mxu0 0.0
  %302 = vmatprep.subr.mxu0 0.0
  %303 = vmatpush1.msra.mxu0 0.0
  %304 = vmatprep.subr.mxu0 0.0
  %305 = vmatpush1.msra.mxu0 0.0
  %306 = vmatprep.subr.mxu0 0.0
  %307 = vmatpush1.msra.mxu0 0.0
  %308 = vmatprep.subr.mxu0 0.0
  %309 = vmatpush1.msra.mxu0 0.0
  %310 = vmatprep.subr.mxu0 0.0
  %311 = vmatpush1.msra.mxu0 0.0
  %312 = vmatprep.subr.mxu0 0.0
  %313 = vmatpush1.msra.mxu0 0.0
  %314 = vmatprep.subr.mxu0 0.0
  %315 = vmatpush1.msra.mxu0 0.0
  %316 = vmatprep.mubr.f32.mxu0 0.0
  %317 = vmatmul.mubr.f32.gmra.mrb[0].mxu0 %v248
  %v318 = vpop.f32.mrb[0].mxu0
  %v319 = vadd.f32 0.0, %v318
  %v320 = vpop.f32.mrb[0].mxu0
  %321 = vmatprep.mubr.f32.mxu0 0.0
  %322 = vmatmul.mubr.f32.gmra.mrb[0].mxu0 %v250
  %v323 = vpop.f32.mrb[0].mxu0
  %v324 = vadd.f32 0.0, %v323
  %v325 = vpop.f32.mrb[0].mxu0
  %326 = vdwg.mxu0
  %v329 = vrot.slane %v38, 1
  %v330 = vrot.slane %v39, 1
  %v331 = vsel %vm75, %v329, %v330
  %v332 = vsel %vm79, %v331, 0
  %v334 = vsel %vm79, %v330, 0
  %336 = vmatprep.subr.mxu0 0.0
  %337 = vmatpush1.msra.mxu0 %v69
  %338 = vmatprep.subr.mxu0 0.0
  %339 = vmatpush1.msra.mxu0 %v70
  %340 = vmatprep.subr.mxu0 0.0
  %341 = vmatpush1.msra.mxu0 %v71
  %342 = vmatprep.subr.mxu0 0.0
  %343 = vmatpush1.msra.mxu0 %v72
  %344 = vmatprep.subr.mxu0 0.0
  %345 = vmatpush1.msra.mxu0 0.0
  %346 = vmatprep.subr.mxu0 0.0
  %347 = vmatpush1.msra.mxu0 0.0
  %348 = vmatprep.subr.mxu0 0.0
  %349 = vmatpush1.msra.mxu0 0.0
  %350 = vmatprep.subr.mxu0 0.0
  %351 = vmatpush1.msra.mxu0 0.0
  %352 = vmatprep.subr.mxu0 0.0
  %353 = vmatpush1.msra.mxu0 0.0
  %354 = vmatprep.subr.mxu0 0.0
  %355 = vmatpush1.msra.mxu0 0.0
  %356 = vmatprep.subr.mxu0 0.0
  %357 = vmatpush1.msra.mxu0 0.0
  %358 = vmatprep.subr.mxu0 0.0
  %359 = vmatpush1.msra.mxu0 0.0
  %360 = vmatprep.subr.mxu0 0.0
  %361 = vmatpush1.msra.mxu0 0.0
  %362 = vmatprep.subr.mxu0 0.0
  %363 = vmatpush1.msra.mxu0 0.0
  %364 = vmatprep.subr.mxu0 0.0
  %365 = vmatpush1.msra.mxu0 0.0
  %366 = vmatprep.subr.mxu0 0.0
  %367 = vmatpush1.msra.mxu0 0.0
  %368 = vmatprep.subr.mxu0 0.0
  %369 = vmatpush1.msra.mxu0 0.0
  %370 = vmatprep.subr.mxu0 0.0
  %371 = vmatpush1.msra.mxu0 0.0
  %372 = vmatprep.subr.mxu0 0.0
  %373 = vmatpush1.msra.mxu0 0.0
  %374 = vmatprep.subr.mxu0 0.0
  %375 = vmatpush1.msra.mxu0 0.0
  %376 = vmatprep.subr.mxu0 0.0
  %377 = vmatpush1.msra.mxu0 0.0
  %378 = vmatprep.subr.mxu0 0.0
  %379 = vmatpush1.msra.mxu0 0.0
  %380 = vmatprep.subr.mxu0 0.0
  %381 = vmatpush1.msra.mxu0 0.0
  %382 = vmatprep.subr.mxu0 0.0
  %383 = vmatpush1.msra.mxu0 0.0
  %384 = vmatprep.subr.mxu0 0.0
  %385 = vmatpush1.msra.mxu0 0.0
  %386 = vmatprep.subr.mxu0 0.0
  %387 = vmatpush1.msra.mxu0 0.0
  %388 = vmatprep.subr.mxu0 0.0
  %389 = vmatpush1.msra.mxu0 0.0
  %390 = vmatprep.subr.mxu0 0.0
  %391 = vmatpush1.msra.mxu0 0.0
  %392 = vmatprep.subr.mxu0 0.0
  %393 = vmatpush1.msra.mxu0 0.0
  %394 = vmatprep.subr.mxu0 0.0
  %395 = vmatpush1.msra.mxu0 0.0
  %396 = vmatprep.subr.mxu0 0.0
  %397 = vmatpush1.msra.mxu0 0.0
  %398 = vmatprep.subr.mxu0 0.0
  %399 = vmatpush1.msra.mxu0 0.0
  %400 = vmatprep.mubr.f32.mxu0 0.0
  %401 = vmatmul.mubr.f32.gmra.mrb[0].mxu0 %v332
  %v402 = vpop.f32.mrb[0].mxu0
  %v403 = vadd.f32 0.0, %v402
  %v404 = vpop.f32.mrb[0].mxu0
  %405 = vmatprep.mubr.f32.mxu0 0.0
  %406 = vmatmul.mubr.f32.gmra.mrb[0].mxu0 %v334
  %v407 = vpop.f32.mrb[0].mxu0
  %v408 = vadd.f32 0.0, %v407
  %v409 = vpop.f32.mrb[0].mxu0
  %410 = vdwg.mxu0
  %v411 = vsel %vm79, %v32, 0
  %v413 = vsel %vm79, %v33, 0
  %415 = vmatprep.subr.mxu0 0.0
  %416 = vmatpush1.msra.mxu0 %v40
  %417 = vmatprep.subr.mxu0 0.0
  %418 = vmatpush1.msra.mxu0 %v41
  %419 = vmatprep.subr.mxu0 0.0
  %420 = vmatpush1.msra.mxu0 %v42
  %421 = vmatprep.subr.mxu0 0.0
  %422 = vmatpush1.msra.mxu0 %v43
  %423 = vmatprep.subr.mxu0 0.0
  %424 = vmatpush1.msra.mxu0 0.0
  %425 = vmatprep.subr.mxu0 0.0
  %426 = vmatpush1.msra.mxu0 0.0
  %427 = vmatprep.subr.mxu0 0.0
  %428 = vmatpush1.msra.mxu0 0.0
  %429 = vmatprep.subr.mxu0 0.0
  %430 = vmatpush1.msra.mxu0 0.0
  %431 = vmatprep.subr.mxu0 0.0
  %432 = vmatpush1.msra.mxu0 0.0
  %433 = vmatprep.subr.mxu0 0.0
  %434 = vmatpush1.msra.mxu0 0.0
  %435 = vmatprep.subr.mxu0 0.0
  %436 = vmatpush1.msra.mxu0 0.0
  %437 = vmatprep.subr.mxu0 0.0
  %438 = vmatpush1.msra.mxu0 0.0
  %439 = vmatprep.subr.mxu0 0.0
  %440 = vmatpush1.msra.mxu0 0.0
  %441 = vmatprep.subr.mxu0 0.0
  %442 = vmatpush1.msra.mxu0 0.0
  %443 = vmatprep.subr.mxu0 0.0
  %444 = vmatpush1.msra.mxu0 0.0
  %445 = vmatprep.subr.mxu0 0.0
  %446 = vmatpush1.msra.mxu0 0.0
  %447 = vmatprep.subr.mxu0 0.0
  %448 = vmatpush1.msra.mxu0 0.0
  %449 = vmatprep.subr.mxu0 0.0
  %450 = vmatpush1.msra.mxu0 0.0
  %451 = vmatprep.subr.mxu0 0.0
  %452 = vmatpush1.msra.mxu0 0.0
  %453 = vmatprep.subr.mxu0 0.0
  %454 = vmatpush1.msra.mxu0 0.0
  %455 = vmatprep.subr.mxu0 0.0
  %456 = vmatpush1.msra.mxu0 0.0
  %457 = vmatprep.subr.mxu0 0.0
  %458 = vmatpush1.msra.mxu0 0.0
  %459 = vmatprep.subr.mxu0 0.0
  %460 = vmatpush1.msra.mxu0 0.0
  %461 = vmatprep.subr.mxu0 0.0
  %462 = vmatpush1.msra.mxu0 0.0
  %463 = vmatprep.subr.mxu0 0.0
  %464 = vmatpush1.msra.mxu0 0.0
  %465 = vmatprep.subr.mxu0 0.0
  %466 = vmatpush1.msra.mxu0 0.0
  %467 = vmatprep.subr.mxu0 0.0
  %468 = vmatpush1.msra.mxu0 0.0
  %469 = vmatprep.subr.mxu0 0.0
  %470 = vmatpush1.msra.mxu0 0.0
  %471 = vmatprep.subr.mxu0 0.0
  %472 = vmatpush1.msra.mxu0 0.0
  %473 = vmatprep.subr.mxu0 0.0
  %474 = vmatpush1.msra.mxu0 0.0
  %475 = vmatprep.subr.mxu0 0.0
  %476 = vmatpush1.msra.mxu0 0.0
  %477 = vmatprep.subr.mxu0 0.0
  %478 = vmatpush1.msra.mxu0 0.0
  %479 = vmatprep.mubr.f32.mxu0 0.0
  %480 = vmatmul.mubr.f32.gmra.mrb[0].mxu0 %v411
  %v481 = vpop.f32.mrb[0].mxu0
  %v482 = vadd.f32 %v151, %v481
  %v483 = vpop.f32.mrb[0].mxu0
  %484 = vmatprep.mubr.f32.mxu0 0.0
  %485 = vmatmul.mubr.f32.gmra.mrb[0].mxu0 %v413
  %v486 = vpop.f32.mrb[0].mxu0
  %v487 = vadd.f32 %v156, %v486
  %v488 = vpop.f32.mrb[0].mxu0
  %489 = vdwg.mxu0
  %v490 = vsel %vm79, %v34, 0
  %v492 = vsel %vm79, %v35, 0
  %494 = vmatprep.subr.mxu0 0.0
  %495 = vmatpush1.msra.mxu0 %v44
  %496 = vmatprep.subr.mxu0 0.0
  %497 = vmatpush1.msra.mxu0 %v45
  %498 = vmatprep.subr.mxu0 0.0
  %499 = vmatpush1.msra.mxu0 %v46
  %500 = vmatprep.subr.mxu0 0.0
  %501 = vmatpush1.msra.mxu0 %v47
  %502 = vmatprep.subr.mxu0 0.0
  %503 = vmatpush1.msra.mxu0 0.0
  %504 = vmatprep.subr.mxu0 0.0
  %505 = vmatpush1.msra.mxu0 0.0
  %506 = vmatprep.subr.mxu0 0.0
  %507 = vmatpush1.msra.mxu0 0.0
  %508 = vmatprep.subr.mxu0 0.0
  %509 = vmatpush1.msra.mxu0 0.0
  %510 = vmatprep.subr.mxu0 0.0
  %511 = vmatpush1.msra.mxu0 0.0
  %512 = vmatprep.subr.mxu0 0.0
  %513 = vmatpush1.msra.mxu0 0.0
  %514 = vmatprep.subr.mxu0 0.0
  %515 = vmatpush1.msra.mxu0 0.0
  %516 = vmatprep.subr.mxu0 0.0
  %517 = vmatpush1.msra.mxu0 0.0
  %518 = vmatprep.subr.mxu0 0.0
  %519 = vmatpush1.msra.mxu0 0.0
  %520 = vmatprep.subr.mxu0 0.0
  %521 = vmatpush1.msra.mxu0 0.0
  %522 = vmatprep.subr.mxu0 0.0
  %523 = vmatpush1.msra.mxu0 0.0
  %524 = vmatprep.subr.mxu0 0.0
  %525 = vmatpush1.msra.mxu0 0.0
  %526 = vmatprep.subr.mxu0 0.0
  %527 = vmatpush1.msra.mxu0 0.0
  %528 = vmatprep.subr.mxu0 0.0
  %529 = vmatpush1.msra.mxu0 0.0
  %530 = vmatprep.subr.mxu0 0.0
  %531 = vmatpush1.msra.mxu0 0.0
  %532 = vmatprep.subr.mxu0 0.0
  %533 = vmatpush1.msra.mxu0 0.0
  %534 = vmatprep.subr.mxu0 0.0
  %535 = vmatpush1.msra.mxu0 0.0
  %536 = vmatprep.subr.mxu0 0.0
  %537 = vmatpush1.msra.mxu0 0.0
  %538 = vmatprep.subr.mxu0 0.0
  %539 = vmatpush1.msra.mxu0 0.0
  %540 = vmatprep.subr.mxu0 0.0
  %541 = vmatpush1.msra.mxu0 0.0
  %542 = vmatprep.subr.mxu0 0.0
  %543 = vmatpush1.msra.mxu0 0.0
  %544 = vmatprep.subr.mxu0 0.0
  %545 = vmatpush1.msra.mxu0 0.0
  %546 = vmatprep.subr.mxu0 0.0
  %547 = vmatpush1.msra.mxu0 0.0
  %548 = vmatprep.subr.mxu0 0.0
  %549 = vmatpush1.msra.mxu0 0.0
  %550 = vmatprep.subr.mxu0 0.0
  %551 = vmatpush1.msra.mxu0 0.0
  %552 = vmatprep.subr.mxu0 0.0
  %553 = vmatpush1.msra.mxu0 0.0
  %554 = vmatprep.subr.mxu0 0.0
  %555 = vmatpush1.msra.mxu0 0.0
  %556 = vmatprep.subr.mxu0 0.0
  %557 = vmatpush1.msra.mxu0 0.0
  %558 = vmatprep.mubr.f32.mxu0 0.0
  %559 = vmatmul.mubr.f32.gmra.mrb[0].mxu0 %v490
  %v560 = vpop.f32.mrb[0].mxu0
  %v561 = vadd.f32 %v235, %v560
  %v562 = vpop.f32.mrb[0].mxu0
  %563 = vmatprep.mubr.f32.mxu0 0.0
  %564 = vmatmul.mubr.f32.gmra.mrb[0].mxu0 %v492
  %v565 = vpop.f32.mrb[0].mxu0
  %v566 = vadd.f32 %v240, %v565
  %v567 = vpop.f32.mrb[0].mxu0
  %568 = vdwg.mxu0
  %v569 = vsel %vm79, %v36, 0
  %v571 = vsel %vm79, %v37, 0
  %573 = vmatprep.subr.mxu0 0.0
  %574 = vmatpush1.msra.mxu0 %v48
  %575 = vmatprep.subr.mxu0 0.0
  %576 = vmatpush1.msra.mxu0 %v49
  %577 = vmatprep.subr.mxu0 0.0
  %578 = vmatpush1.msra.mxu0 %v50
  %579 = vmatprep.subr.mxu0 0.0
  %580 = vmatpush1.msra.mxu0 %v51
  %581 = vmatprep.subr.mxu0 0.0
  %582 = vmatpush1.msra.mxu0 0.0
  %583 = vmatprep.subr.mxu0 0.0
  %584 = vmatpush1.msra.mxu0 0.0
  %585 = vmatprep.subr.mxu0 0.0
  %586 = vmatpush1.msra.mxu0 0.0
  %587 = vmatprep.subr.mxu0 0.0
  %588 = vmatpush1.msra.mxu0 0.0
  %589 = vmatprep.subr.mxu0 0.0
  %590 = vmatpush1.msra.mxu0 0.0
  %591 = vmatprep.subr.mxu0 0.0
  %592 = vmatpush1.msra.mxu0 0.0
  %593 = vmatprep.subr.mxu0 0.0
  %594 = vmatpush1.msra.mxu0 0.0
  %595 = vmatprep.subr.mxu0 0.0
  %596 = vmatpush1.msra.mxu0 0.0
  %597 = vmatprep.subr.mxu0 0.0
  %598 = vmatpush1.msra.mxu0 0.0
  %599 = vmatprep.subr.mxu0 0.0
  %600 = vmatpush1.msra.mxu0 0.0
  %601 = vmatprep.subr.mxu0 0.0
  %602 = vmatpush1.msra.mxu0 0.0
  %603 = vmatprep.subr.mxu0 0.0
  %604 = vmatpush1.msra.mxu0 0.0
  %605 = vmatprep.subr.mxu0 0.0
  %606 = vmatpush1.msra.mxu0 0.0
  %607 = vmatprep.subr.mxu0 0.0
  %608 = vmatpush1.msra.mxu0 0.0
  %609 = vmatprep.subr.mxu0 0.0
  %610 = vmatpush1.msra.mxu0 0.0
  %611 = vmatprep.subr.mxu0 0.0
  %612 = vmatpush1.msra.mxu0 0.0
  %613 = vmatprep.subr.mxu0 0.0
  %614 = vmatpush1.msra.mxu0 0.0
  %615 = vmatprep.subr.mxu0 0.0
  %616 = vmatpush1.msra.mxu0 0.0
  %617 = vmatprep.subr.mxu0 0.0
  %618 = vmatpush1.msra.mxu0 0.0
  %619 = vmatprep.subr.mxu0 0.0
  %620 = vmatpush1.msra.mxu0 0.0
  %621 = vmatprep.subr.mxu0 0.0
  %622 = vmatpush1.msra.mxu0 0.0
  %623 = vmatprep.subr.mxu0 0.0
  %624 = vmatpush1.msra.mxu0 0.0
  %625 = vmatprep.subr.mxu0 0.0
  %626 = vmatpush1.msra.mxu0 0.0
  %627 = vmatprep.subr.mxu0 0.0
  %628 = vmatpush1.msra.mxu0 0.0
  %629 = vmatprep.subr.mxu0 0.0
  %630 = vmatpush1.msra.mxu0 0.0
  %631 = vmatprep.subr.mxu0 0.0
  %632 = vmatpush1.msra.mxu0 0.0
  %633 = vmatprep.subr.mxu0 0.0
  %634 = vmatpush1.msra.mxu0 0.0
  %635 = vmatprep.subr.mxu0 0.0
  %636 = vmatpush1.msra.mxu0 0.0
  %637 = vmatprep.mubr.f32.mxu0 0.0
  %638 = vmatmul.mubr.f32.gmra.mrb[0].mxu0 %v569
  %v639 = vpop.f32.mrb[0].mxu0
  %v640 = vadd.f32 %v319, %v639
  %v641 = vpop.f32.mrb[0].mxu0
  %642 = vmatprep.mubr.f32.mxu0 0.0
  %643 = vmatmul.mubr.f32.gmra.mrb[0].mxu0 %v571
  %v644 = vpop.f32.mrb[0].mxu0
  %v645 = vadd.f32 %v324, %v644
  %v646 = vpop.f32.mrb[0].mxu0
  %647 = vdwg.mxu0
  %v648 = vsel %vm79, %v38, 0
  %v650 = vsel %vm79, %v39, 0
  %652 = vmatprep.subr.mxu0 0.0
  %653 = vmatpush1.msra.mxu0 %v52
  %654 = vmatprep.subr.mxu0 0.0
  %655 = vmatpush1.msra.mxu0 %v53
  %656 = vmatprep.subr.mxu0 0.0
  %657 = vmatpush1.msra.mxu0 %v54
  %658 = vmatprep.subr.mxu0 0.0
  %659 = vmatpush1.msra.mxu0 %v55
  %660 = vmatprep.subr.mxu0 0.0
  %661 = vmatpush1.msra.mxu0 0.0
  %662 = vmatprep.subr.mxu0 0.0
  %663 = vmatpush1.msra.mxu0 0.0
  %664 = vmatprep.subr.mxu0 0.0
  %665 = vmatpush1.msra.mxu0 0.0
  %666 = vmatprep.subr.mxu0 0.0
  %667 = vmatpush1.msra.mxu0 0.0
  %668 = vmatprep.subr.mxu0 0.0
  %669 = vmatpush1.msra.mxu0 0.0
  %670 = vmatprep.subr.mxu0 0.0
  %671 = vmatpush1.msra.mxu0 0.0
  %672 = vmatprep.subr.mxu0 0.0
  %673 = vmatpush1.msra.mxu0 0.0
  %674 = vmatprep.subr.mxu0 0.0
  %675 = vmatpush1.msra.mxu0 0.0
  %676 = vmatprep.subr.mxu0 0.0
  %677 = vmatpush1.msra.mxu0 0.0
  %678 = vmatprep.subr.mxu0 0.0
  %679 = vmatpush1.msra.mxu0 0.0
  %680 = vmatprep.subr.mxu0 0.0
  %681 = vmatpush1.msra.mxu0 0.0
  %682 = vmatprep.subr.mxu0 0.0
  %683 = vmatpush1.msra.mxu0 0.0
  %684 = vmatprep.subr.mxu0 0.0
  %685 = vmatpush1.msra.mxu0 0.0
  %686 = vmatprep.subr.mxu0 0.0
  %687 = vmatpush1.msra.mxu0 0.0
  %688 = vmatprep.subr.mxu0 0.0
  %689 = vmatpush1.msra.mxu0 0.0
  %690 = vmatprep.subr.mxu0 0.0
  %691 = vmatpush1.msra.mxu0 0.0
  %692 = vmatprep.subr.mxu0 0.0
  %693 = vmatpush1.msra.mxu0 0.0
  %694 = vmatprep.subr.mxu0 0.0
  %695 = vmatpush1.msra.mxu0 0.0
  %696 = vmatprep.subr.mxu0 0.0
  %697 = vmatpush1.msra.mxu0 0.0
  %698 = vmatprep.subr.mxu0 0.0
  %699 = vmatpush1.msra.mxu0 0.0
  %700 = vmatprep.subr.mxu0 0.0
  %701 = vmatpush1.msra.mxu0 0.0
  %702 = vmatprep.subr.mxu0 0.0
  %703 = vmatpush1.msra.mxu0 0.0
  %704 = vmatprep.subr.mxu0 0.0
  %705 = vmatpush1.msra.mxu0 0.0
  %706 = vmatprep.subr.mxu0 0.0
  %707 = vmatpush1.msra.mxu0 0.0
  %708 = vmatprep.subr.mxu0 0.0
  %709 = vmatpush1.msra.mxu0 0.0
  %710 = vmatprep.subr.mxu0 0.0
  %711 = vmatpush1.msra.mxu0 0.0
  %712 = vmatprep.subr.mxu0 0.0
  %713 = vmatpush1.msra.mxu0 0.0
  %714 = vmatprep.subr.mxu0 0.0
  %715 = vmatpush1.msra.mxu0 0.0
  %716 = vmatprep.mubr.f32.mxu0 0.0
  %717 = vmatmul.mubr.f32.gmra.mrb[0].mxu0 %v648
  %v718 = vpop.f32.mrb[0].mxu0
  %v719 = vadd.f32 %v403, %v718
  %v720 = vpop.f32.mrb[0].mxu0
  %721 = vmatprep.mubr.f32.mxu0 0.0
  %722 = vmatmul.mubr.f32.gmra.mrb[0].mxu0 %v650
  %v723 = vpop.f32.mrb[0].mxu0
  %v724 = vadd.f32 %v408, %v723
  %v725 = vpop.f32.mrb[0].mxu0
  %726 = vdwg.mxu0
  %s727 = scalar_lea.vmem %s1, 256
  %v728 = vld [vmem:[%s727] sm:$0xff]
  %v729 = vld [vmem:[%s727 + $0x8] sm:$0xff]
  %v730 = vld [vmem:[%s727 + $0x10] sm:$0xff]
  %v731 = vld [vmem:[%s727 + $0x18] sm:$0xff]
  %v732 = vld [vmem:[%s727 + $0x20] sm:$0xff]
  %v733 = vld [vmem:[%s727 + $0x28] sm:$0xff]
  %v734 = vld [vmem:[%s727 + $0x30] sm:$0xff]
  %v735 = vld [vmem:[%s727 + $0x38] sm:$0xff]
  %v736 = vld [vmem:[%s727 + $0x40] sm:$0xff]
  %v737 = vld [vmem:[%s727 + $0x48] sm:$0xff]
  %v738 = vld [vmem:[%s727 + $0x50] sm:$0xff]
  %v739 = vld [vmem:[%s727 + $0x58] sm:$0xff]
  %v740 = vld [vmem:[%s727 + $0x60] sm:$0xff]
  %v741 = vld [vmem:[%s727 + $0x68] sm:$0xff]
  %v742 = vld [vmem:[%s727 + $0x70] sm:$0xff]
  %v743 = vld [vmem:[%s727 + $0x78] sm:$0xff]
  %vm744 = vcmask 1045504
  %v745 = vrot.slane %v32, 2
  %v746 = vrot.slane %v33, 2
  %v747 = vsel %vm744, %v745, %v746
  %v748 = vsel %vm79, %v747, 0
  %v750 = vsel %vm79, %v746, 0
  %752 = vmatprep.subr.mxu0 0.0
  %753 = vmatpush1.msra.mxu0 %v728
  %754 = vmatprep.subr.mxu0 0.0
  %755 = vmatpush1.msra.mxu0 %v729
  %756 = vmatprep.subr.mxu0 0.0
  %757 = vmatpush1.msra.mxu0 %v730
  %758 = vmatprep.subr.mxu0 0.0
  %759 = vmatpush1.msra.mxu0 %v731
  %760 = vmatprep.subr.mxu0 0.0
  %761 = vmatpush1.msra.mxu0 0.0
  %762 = vmatprep.subr.mxu0 0.0
  %763 = vmatpush1.msra.mxu0 0.0
  %764 = vmatprep.subr.mxu0 0.0
  %765 = vmatpush1.msra.mxu0 0.0
  %766 = vmatprep.subr.mxu0 0.0
  %767 = vmatpush1.msra.mxu0 0.0
  %768 = vmatprep.subr.mxu0 0.0
  %769 = vmatpush1.msra.mxu0 0.0
  %770 = vmatprep.subr.mxu0 0.0
  %771 = vmatpush1.msra.mxu0 0.0
  %772 = vmatprep.subr.mxu0 0.0
  %773 = vmatpush1.msra.mxu0 0.0
  %774 = vmatprep.subr.mxu0 0.0
  %775 = vmatpush1.msra.mxu0 0.0
  %776 = vmatprep.subr.mxu0 0.0
  %777 = vmatpush1.msra.mxu0 0.0
  %778 = vmatprep.subr.mxu0 0.0
  %779 = vmatpush1.msra.mxu0 0.0
  %780 = vmatprep.subr.mxu0 0.0
  %781 = vmatpush1.msra.mxu0 0.0
  %782 = vmatprep.subr.mxu0 0.0
  %783 = vmatpush1.msra.mxu0 0.0
  %784 = vmatprep.subr.mxu0 0.0
  %785 = vmatpush1.msra.mxu0 0.0
  %786 = vmatprep.subr.mxu0 0.0
  %787 = vmatpush1.msra.mxu0 0.0
  %788 = vmatprep.subr.mxu0 0.0
  %789 = vmatpush1.msra.mxu0 0.0
  %790 = vmatprep.subr.mxu0 0.0
  %791 = vmatpush1.msra.mxu0 0.0
  %792 = vmatprep.subr.mxu0 0.0
  %793 = vmatpush1.msra.mxu0 0.0
  %794 = vmatprep.subr.mxu0 0.0
  %795 = vmatpush1.msra.mxu0 0.0
  %796 = vmatprep.subr.mxu0 0.0
  %797 = vmatpush1.msra.mxu0 0.0
  %798 = vmatprep.subr.mxu0 0.0
  %799 = vmatpush1.msra.mxu0 0.0
  %800 = vmatprep.subr.mxu0 0.0
  %801 = vmatpush1.msra.mxu0 0.0
  %802 = vmatprep.subr.mxu0 0.0
  %803 = vmatpush1.msra.mxu0 0.0
  %804 = vmatprep.subr.mxu0 0.0
  %805 = vmatpush1.msra.mxu0 0.0
  %806 = vmatprep.subr.mxu0 0.0
  %807 = vmatpush1.msra.mxu0 0.0
  %808 = vmatprep.subr.mxu0 0.0
  %809 = vmatpush1.msra.mxu0 0.0
  %810 = vmatprep.subr.mxu0 0.0
  %811 = vmatpush1.msra.mxu0 0.0
  %812 = vmatprep.subr.mxu0 0.0
  %813 = vmatpush1.msra.mxu0 0.0
  %814 = vmatprep.subr.mxu0 0.0
  %815 = vmatpush1.msra.mxu0 0.0
  %816 = vmatprep.mubr.f32.mxu0 0.0
  %817 = vmatmul.mubr.f32.gmra.mrb[0].mxu0 %v748
  %v818 = vpop.f32.mrb[0].mxu0
  %v819 = vadd.f32 0.0, %v818
  %v820 = vpop.f32.mrb[0].mxu0
  %821 = vmatprep.mubr.f32.mxu0 0.0
  %822 = vmatmul.mubr.f32.gmra.mrb[0].mxu0 %v750
  %v823 = vpop.f32.mrb[0].mxu0
  %v824 = vadd.f32 0.0, %v823
  %v825 = vpop.f32.mrb[0].mxu0
  %826 = vdwg.mxu0
  %v827 = vrot.slane %v34, 2
  %v828 = vrot.slane %v35, 2
  %v829 = vsel %vm744, %v827, %v828
  %v830 = vsel %vm79, %v829, 0
  %v832 = vsel %vm79, %v828, 0
  %834 = vmatprep.subr.mxu0 0.0
  %835 = vmatpush1.msra.mxu0 %v732
  %836 = vmatprep.subr.mxu0 0.0
  %837 = vmatpush1.msra.mxu0 %v733
  %838 = vmatprep.subr.mxu0 0.0
  %839 = vmatpush1.msra.mxu0 %v734
  %840 = vmatprep.subr.mxu0 0.0
  %841 = vmatpush1.msra.mxu0 %v735
  %842 = vmatprep.subr.mxu0 0.0
  %843 = vmatpush1.msra.mxu0 0.0
  %844 = vmatprep.subr.mxu0 0.0
  %845 = vmatpush1.msra.mxu0 0.0
  %846 = vmatprep.subr.mxu0 0.0
  %847 = vmatpush1.msra.mxu0 0.0
  %848 = vmatprep.subr.mxu0 0.0
  %849 = vmatpush1.msra.mxu0 0.0
  %850 = vmatprep.subr.mxu0 0.0
  %851 = vmatpush1.msra.mxu0 0.0
  %852 = vmatprep.subr.mxu0 0.0
  %853 = vmatpush1.msra.mxu0 0.0
  %854 = vmatprep.subr.mxu0 0.0
  %855 = vmatpush1.msra.mxu0 0.0
  %856 = vmatprep.subr.mxu0 0.0
  %857 = vmatpush1.msra.mxu0 0.0
  %858 = vmatprep.subr.mxu0 0.0
  %859 = vmatpush1.msra.mxu0 0.0
  %860 = vmatprep.subr.mxu0 0.0
  %861 = vmatpush1.msra.mxu0 0.0
  %862 = vmatprep.subr.mxu0 0.0
  %863 = vmatpush1.msra.mxu0 0.0
  %864 = vmatprep.subr.mxu0 0.0
  %865 = vmatpush1.msra.mxu0 0.0
  %866 = vmatprep.subr.mxu0 0.0
  %867 = vmatpush1.msra.mxu0 0.0
  %868 = vmatprep.subr.mxu0 0.0
  %869 = vmatpush1.msra.mxu0 0.0
  %870 = vmatprep.subr.mxu0 0.0
  %871 = vmatpush1.msra.mxu0 0.0
  %872 = vmatprep.subr.mxu0 0.0
  %873 = vmatpush1.msra.mxu0 0.0
  %874 = vmatprep.subr.mxu0 0.0
  %875 = vmatpush1.msra.mxu0 0.0
  %876 = vmatprep.subr.mxu0 0.0
  %877 = vmatpush1.msra.mxu0 0.0
  %878 = vmatprep.subr.mxu0 0.0
  %879 = vmatpush1.msra.mxu0 0.0
  %880 = vmatprep.subr.mxu0 0.0
  %881 = vmatpush1.msra.mxu0 0.0
  %882 = vmatprep.subr.mxu0 0.0
  %883 = vmatpush1.msra.mxu0 0.0
  %884 = vmatprep.subr.mxu0 0.0
  %885 = vmatpush1.msra.mxu0 0.0
  %886 = vmatprep.subr.mxu0 0.0
  %887 = vmatpush1.msra.mxu0 0.0
  %888 = vmatprep.subr.mxu0 0.0
  %889 = vmatpush1.msra.mxu0 0.0
  %890 = vmatprep.subr.mxu0 0.0
  %891 = vmatpush1.msra.mxu0 0.0
  %892 = vmatprep.subr.mxu0 0.0
  %893 = vmatpush1.msra.mxu0 0.0
  %894 = vmatprep.subr.mxu0 0.0
  %895 = vmatpush1.msra.mxu0 0.0
  %896 = vmatprep.subr.mxu0 0.0
  %897 = vmatpush1.msra.mxu0 0.0
  %898 = vmatprep.mubr.f32.mxu0 0.0
  %899 = vmatmul.mubr.f32.gmra.mrb[0].mxu0 %v830
  %v900 = vpop.f32.mrb[0].mxu0
  %v901 = vadd.f32 0.0, %v900
  %v902 = vpop.f32.mrb[0].mxu0
  %903 = vmatprep.mubr.f32.mxu0 0.0
  %904 = vmatmul.mubr.f32.gmra.mrb[0].mxu0 %v832
  %v905 = vpop.f32.mrb[0].mxu0
  %v906 = vadd.f32 0.0, %v905
  %v907 = vpop.f32.mrb[0].mxu0
  %908 = vdwg.mxu0
  %v909 = vrot.slane %v36, 2
  %v910 = vrot.slane %v37, 2
  %v911 = vsel %vm744, %v909, %v910
  %v912 = vsel %vm79, %v911, 0
  %v914 = vsel %vm79, %v910, 0
  %916 = vmatprep.subr.mxu0 0.0
  %917 = vmatpush1.msra.mxu0 %v736
  %918 = vmatprep.subr.mxu0 0.0
  %919 = vmatpush1.msra.mxu0 %v737
  %920 = vmatprep.subr.mxu0 0.0
  %921 = vmatpush1.msra.mxu0 %v738
  %922 = vmatprep.subr.mxu0 0.0
  %923 = vmatpush1.msra.mxu0 %v739
  %924 = vmatprep.subr.mxu0 0.0
  %925 = vmatpush1.msra.mxu0 0.0
  %926 = vmatprep.subr.mxu0 0.0
  %927 = vmatpush1.msra.mxu0 0.0
  %928 = vmatprep.subr.mxu0 0.0
  %929 = vmatpush1.msra.mxu0 0.0
  %930 = vmatprep.subr.mxu0 0.0
  %931 = vmatpush1.msra.mxu0 0.0
  %932 = vmatprep.subr.mxu0 0.0
  %933 = vmatpush1.msra.mxu0 0.0
  %934 = vmatprep.subr.mxu0 0.0
  %935 = vmatpush1.msra.mxu0 0.0
  %936 = vmatprep.subr.mxu0 0.0
  %937 = vmatpush1.msra.mxu0 0.0
  %938 = vmatprep.subr.mxu0 0.0
  %939 = vmatpush1.msra.mxu0 0.0
  %940 = vmatprep.subr.mxu0 0.0
  %941 = vmatpush1.msra.mxu0 0.0
  %942 = vmatprep.subr.mxu0 0.0
  %943 = vmatpush1.msra.mxu0 0.0
  %944 = vmatprep.subr.mxu0 0.0
  %945 = vmatpush1.msra.mxu0 0.0
  %946 = vmatprep.subr.mxu0 0.0
  %947 = vmatpush1.msra.mxu0 0.0
  %948 = vmatprep.subr.mxu0 0.0
  %949 = vmatpush1.msra.mxu0 0.0
  %950 = vmatprep.subr.mxu0 0.0
  %951 = vmatpush1.msra.mxu0 0.0
  %952 = vmatprep.subr.mxu0 0.0
  %953 = vmatpush1.msra.mxu0 0.0
  %954 = vmatprep.subr.mxu0 0.0
  %955 = vmatpush1.msra.mxu0 0.0
  %956 = vmatprep.subr.mxu0 0.0
  %957 = vmatpush1.msra.mxu0 0.0
  %958 = vmatprep.subr.mxu0 0.0
  %959 = vmatpush1.msra.mxu0 0.0
  %960 = vmatprep.subr.mxu0 0.0
  %961 = vmatpush1.msra.mxu0 0.0
  %962 = vmatprep.subr.mxu0 0.0
  %963 = vmatpush1.msra.mxu0 0.0
  %964 = vmatprep.subr.mxu0 0.0
  %965 = vmatpush1.msra.mxu0 0.0
  %966 = vmatprep.subr.mxu0 0.0
  %967 = vmatpush1.msra.mxu0 0.0
  %968 = vmatprep.subr.mxu0 0.0
  %969 = vmatpush1.msra.mxu0 0.0
  %970 = vmatprep.subr.mxu0 0.0
  %971 = vmatpush1.msra.mxu0 0.0
  %972 = vmatprep.subr.mxu0 0.0
  %973 = vmatpush1.msra.mxu0 0.0
  %974 = vmatprep.subr.mxu0 0.0
  %975 = vmatpush1.msra.mxu0 0.0
  %976 = vmatprep.subr.mxu0 0.0
  %977 = vmatpush1.msra.mxu0 0.0
  %978 = vmatprep.subr.mxu0 0.0
  %979 = vmatpush1.msra.mxu0 0.0
  %980 = vmatprep.mubr.f32.mxu0 0.0
  %981 = vmatmul.mubr.f32.gmra.mrb[0].mxu0 %v912
  %v982 = vpop.f32.mrb[0].mxu0
  %v983 = vadd.f32 0.0, %v982
  %v984 = vpop.f32.mrb[0].mxu0
  %985 = vmatprep.mubr.f32.mxu0 0.0
  %986 = vmatmul.mubr.f32.gmra.mrb[0].mxu0 %v914
  %v987 = vpop.f32.mrb[0].mxu0
  %v988 = vadd.f32 0.0, %v987
  %v989 = vpop.f32.mrb[0].mxu0
  %990 = vdwg.mxu0
  %v991 = vrot.slane %v38, 2
  %v992 = vrot.slane %v39, 2
  %v993 = vsel %vm744, %v991, %v992
  %v994 = vsel %vm79, %v993, 0
  %v996 = vsel %vm79, %v992, 0
  %998 = vmatprep.subr.mxu0 0.0
  %999 = vmatpush1.msra.mxu0 %v740
  %1000 = vmatprep.subr.mxu0 0.0
  %1001 = vmatpush1.msra.mxu0 %v741
  %1002 = vmatprep.subr.mxu0 0.0
  %1003 = vmatpush1.msra.mxu0 %v742
  %1004 = vmatprep.subr.mxu0 0.0
  %1005 = vmatpush1.msra.mxu0 %v743
  %1006 = vmatprep.subr.mxu0 0.0
  %1007 = vmatpush1.msra.mxu0 0.0
  %1008 = vmatprep.subr.mxu0 0.0
  %1009 = vmatpush1.msra.mxu0 0.0
  %1010 = vmatprep.subr.mxu0 0.0
  %1011 = vmatpush1.msra.mxu0 0.0
  %1012 = vmatprep.subr.mxu0 0.0
  %1013 = vmatpush1.msra.mxu0 0.0
  %1014 = vmatprep.subr.mxu0 0.0
  %1015 = vmatpush1.msra.mxu0 0.0
  %1016 = vmatprep.subr.mxu0 0.0
  %1017 = vmatpush1.msra.mxu0 0.0
  %1018 = vmatprep.subr.mxu0 0.0
  %1019 = vmatpush1.msra.mxu0 0.0
  %1020 = vmatprep.subr.mxu0 0.0
  %1021 = vmatpush1.msra.mxu0 0.0
  %1022 = vmatprep.subr.mxu0 0.0
  %1023 = vmatpush1.msra.mxu0 0.0
  %1024 = vmatprep.subr.mxu0 0.0
  %1025 = vmatpush1.msra.mxu0 0.0
  %1026 = vmatprep.subr.mxu0 0.0
  %1027 = vmatpush1.msra.mxu0 0.0
  %1028 = vmatprep.subr.mxu0 0.0
  %1029 = vmatpush1.msra.mxu0 0.0
  %1030 = vmatprep.subr.mxu0 0.0
  %1031 = vmatpush1.msra.mxu0 0.0
  %1032 = vmatprep.subr.mxu0 0.0
  %1033 = vmatpush1.msra.mxu0 0.0
  %1034 = vmatprep.subr.mxu0 0.0
  %1035 = vmatpush1.msra.mxu0 0.0
  %1036 = vmatprep.subr.mxu0 0.0
  %1037 = vmatpush1.msra.mxu0 0.0
  %1038 = vmatprep.subr.mxu0 0.0
  %1039 = vmatpush1.msra.mxu0 0.0
  %1040 = vmatprep.subr.mxu0 0.0
  %1041 = vmatpush1.msra.mxu0 0.0
  %1042 = vmatprep.subr.mxu0 0.0
  %1043 = vmatpush1.msra.mxu0 0.0
  %1044 = vmatprep.subr.mxu0 0.0
  %1045 = vmatpush1.msra.mxu0 0.0
  %1046 = vmatprep.subr.mxu0 0.0
  %1047 = vmatpush1.msra.mxu0 0.0
  %1048 = vmatprep.subr.mxu0 0.0
  %1049 = vmatpush1.msra.mxu0 0.0
  %1050 = vmatprep.subr.mxu0 0.0
  %1051 = vmatpush1.msra.mxu0 0.0
  %1052 = vmatprep.subr.mxu0 0.0
  %1053 = vmatpush1.msra.mxu0 0.0
  %1054 = vmatprep.subr.mxu0 0.0
  %1055 = vmatpush1.msra.mxu0 0.0
  %1056 = vmatprep.subr.mxu0 0.0
  %1057 = vmatpush1.msra.mxu0 0.0
  %1058 = vmatprep.subr.mxu0 0.0
  %1059 = vmatpush1.msra.mxu0 0.0
  %1060 = vmatprep.subr.mxu0 0.0
  %1061 = vmatpush1.msra.mxu0 0.0
  %1062 = vmatprep.mubr.f32.mxu0 0.0
  %1063 = vmatmul.mubr.f32.gmra.mrb[0].mxu0 %v994
  %v1064 = vpop.f32.mrb[0].mxu0
  %v1065 = vadd.f32 0.0, %v1064
  %v1066 = vpop.f32.mrb[0].mxu0
  %1067 = vmatprep.mubr.f32.mxu0 0.0
  %1068 = vmatmul.mubr.f32.gmra.mrb[0].mxu0 %v996
  %v1069 = vpop.f32.mrb[0].mxu0
  %v1070 = vadd.f32 0.0, %v1069
  %v1071 = vpop.f32.mrb[0].mxu0
  %1072 = vdwg.mxu0
  %v1073 = vadd.f32 %v482, %v819
  %v1074 = vadd.f32 %v487, %v824
  %v1075 = vadd.f32 %v561, %v901
  %v1076 = vadd.f32 %v566, %v906
  %v1077 = vadd.f32 %v640, %v983
  %v1078 = vadd.f32 %v645, %v988
  %v1079 = vadd.f32 %v719, %v1065
  %v1080 = vadd.f32 %v724, %v1070
  %v1081 = vld [vmem:[%s5] sm:$0x1]
  %v1083 = vlaneseq
  %v1084 = vshrl.u32 %v1083, 7
  %v1085 = vsub.s32 0, %v1084
  %v1086 = vrot.slane %v1081, %v1085
  %v1088 = vadd.f32 %v1073, %v1086
  %v1089 = vadd.f32 %v1074, %v1086
  %v1090 = vadd.f32 %v1075, %v1086
  %v1091 = vadd.f32 %v1076, %v1086
  %v1092 = vadd.f32 %v1077, %v1086
  %v1093 = vadd.f32 %v1078, %v1086
  %v1094 = vadd.f32 %v1079, %v1086
  %v1095 = vadd.f32 %v1080, %v1086
  %v1096 = vxor.u32 %v1088, 2147483648
  %v1097 = vxor.u32 %v1089, 2147483648
  %v1098 = vxor.u32 %v1090, 2147483648
  %v1099 = vxor.u32 %v1091, 2147483648
  %v1100 = vxor.u32 %v1092, 2147483648
  %v1101 = vxor.u32 %v1093, 2147483648
  %v1102 = vxor.u32 %v1094, 2147483648
  %v1103 = vxor.u32 %v1095, 2147483648
  %v1104 = vmul.f32 %v1096, 1.442695
  %v1105 = vpow.pop %v1104
  %v1106 = vmul.f32 %v1097, 1.442695
  %v1107 = vpow.pop %v1106
  %v1108 = vmul.f32 %v1098, 1.442695
  %v1109 = vpow.pop %v1108
  %v1110 = vmul.f32 %v1099, 1.442695
  %v1111 = vpow.pop %v1110
  %v1112 = vmul.f32 %v1100, 1.442695
  %v1113 = vpow.pop %v1112
  %v1114 = vmul.f32 %v1101, 1.442695
  %v1115 = vpow.pop %v1114
  %v1116 = vmul.f32 %v1102, 1.442695
  %v1117 = vpow.pop %v1116
  %v1118 = vmul.f32 %v1103, 1.442695
  %v1119 = vpow.pop %v1118
  %v1120 = vadd.f32 %v1105, 1.0
  %v1121 = vadd.f32 %v1107, 1.0
  %v1122 = vadd.f32 %v1109, 1.0
  %v1123 = vadd.f32 %v1111, 1.0
  %v1124 = vadd.f32 %v1113, 1.0
  %v1125 = vadd.f32 %v1115, 1.0
  %v1126 = vadd.f32 %v1117, 1.0
  %v1127 = vadd.f32 %v1119, 1.0
  %v1128 = vrcp.pop %v1120
  %v1129 = vmul.f32 1.0, %v1128
  %v1130 = vrcp.pop %v1121
  %v1131 = vmul.f32 1.0, %v1130
  %v1132 = vrcp.pop %v1122
  %v1133 = vmul.f32 1.0, %v1132
  %v1134 = vrcp.pop %v1123
  %v1135 = vmul.f32 1.0, %v1134
  %v1136 = vrcp.pop %v1124
  %v1137 = vmul.f32 1.0, %v1136
  %v1138 = vrcp.pop %v1125
  %v1139 = vmul.f32 1.0, %v1138
  %v1140 = vrcp.pop %v1126
  %v1141 = vmul.f32 1.0, %v1140
  %v1142 = vrcp.pop %v1127
  %v1143 = vmul.f32 1.0, %v1142
  %v1144 = vld [vmem:[%s2] sm:$0xff]
  %v1145 = vld [vmem:[%s2 + $0x8] sm:$0xff]
  %v1146 = vld [vmem:[%s2 + $0x10] sm:$0xff]
  %v1147 = vld [vmem:[%s2 + $0x18] sm:$0xff]
  %v1148 = vld [vmem:[%s2 + $0x20] sm:$0xff]
  %v1149 = vld [vmem:[%s2 + $0x28] sm:$0xff]
  %v1150 = vld [vmem:[%s2 + $0x30] sm:$0xff]
  %v1151 = vld [vmem:[%s2 + $0x38] sm:$0xff]
  %v1152 = vld [vmem:[%s2 + $0x40] sm:$0xff]
  %v1153 = vld [vmem:[%s2 + $0x48] sm:$0xff]
  %v1154 = vld [vmem:[%s2 + $0x50] sm:$0xff]
  %v1155 = vld [vmem:[%s2 + $0x58] sm:$0xff]
  %v1156 = vld [vmem:[%s2 + $0x60] sm:$0xff]
  %v1157 = vld [vmem:[%s2 + $0x68] sm:$0xff]
  %v1158 = vld [vmem:[%s2 + $0x70] sm:$0xff]
  %v1159 = vld [vmem:[%s2 + $0x78] sm:$0xff]
  %v1160 = vld [vmem:[%s2 + $0x80] sm:$0xff]
  %v1161 = vld [vmem:[%s2 + $0x88] sm:$0xff]
  %v1162 = vld [vmem:[%s2 + $0x90] sm:$0xff]
  %v1163 = vld [vmem:[%s2 + $0x98] sm:$0xff]
  %v1164 = vld [vmem:[%s2 + $0xa0] sm:$0xff]
  %v1165 = vld [vmem:[%s2 + $0xa8] sm:$0xff]
  %v1166 = vld [vmem:[%s2 + $0xb0] sm:$0xff]
  %v1167 = vld [vmem:[%s2 + $0xb8] sm:$0xff]
  %v1168 = vld [vmem:[%s2 + $0xc0] sm:$0xff]
  %v1169 = vld [vmem:[%s2 + $0xc8] sm:$0xff]
  %v1170 = vld [vmem:[%s2 + $0xd0] sm:$0xff]
  %v1171 = vld [vmem:[%s2 + $0xd8] sm:$0xff]
  %s1172 = scalar_lea.vmem %s2, 224
  %v1173 = vld [vmem:[%s1172] sm:$0xff]
  %v1174 = vld [vmem:[%s1172 + $0x8] sm:$0xff]
  %v1175 = vld [vmem:[%s1172 + $0x10] sm:$0xff]
  %v1176 = vld [vmem:[%s1172 + $0x18] sm:$0xff]
  %v1177 = vld [vmem:[%s1172 + $0x20] sm:$0xff]
  %v1178 = vld [vmem:[%s1172 + $0x28] sm:$0xff]
  %v1179 = vld [vmem:[%s1172 + $0x30] sm:$0xff]
  %v1180 = vld [vmem:[%s1172 + $0x38] sm:$0xff]
  %v1181 = vld [vmem:[%s1172 + $0x40] sm:$0xff]
  %v1182 = vld [vmem:[%s1172 + $0x48] sm:$0xff]
  %v1183 = vld [vmem:[%s1172 + $0x50] sm:$0xff]
  %v1184 = vld [vmem:[%s1172 + $0x58] sm:$0xff]
  %v1185 = vld [vmem:[%s1172 + $0x60] sm:$0xff]
  %v1186 = vld [vmem:[%s1172 + $0x68] sm:$0xff]
  %v1187 = vld [vmem:[%s1172 + $0x70] sm:$0xff]
  %v1188 = vld [vmem:[%s1172 + $0x78] sm:$0xff]
  %v1189 = vld [vmem:[%s1172 + $0x80] sm:$0xff]
  %v1190 = vld [vmem:[%s1172 + $0x88] sm:$0xff]
  %v1191 = vld [vmem:[%s1172 + $0x90] sm:$0xff]
  %v1192 = vld [vmem:[%s1172 + $0x98] sm:$0xff]
  %v1193 = vld [vmem:[%s1172 + $0xa0] sm:$0xff]
  %v1194 = vld [vmem:[%s1172 + $0xa8] sm:$0xff]
  %v1195 = vld [vmem:[%s1172 + $0xb0] sm:$0xff]
  %v1196 = vld [vmem:[%s1172 + $0xb8] sm:$0xff]
  %v1197 = vld [vmem:[%s1172 + $0xc0] sm:$0xff]
  %v1198 = vld [vmem:[%s1172 + $0xc8] sm:$0xff]
  %v1199 = vld [vmem:[%s1172 + $0xd0] sm:$0xff]
  %v1200 = vld [vmem:[%s1172 + $0xd8] sm:$0xff]
  %v1203 = vrot.slane %v1129, 1
  %v1204 = vrot.slane %v1131, 1
  %v1205 = vsel %vm75, %v1203, %v1204
  %vm1206 = vcmask 457728
  %v1207 = vsel %vm1206, %v1205, 0
  %v1209 = vsel %vm1206, %v1204, 0
  %1211 = vmatprep.subr.mxu0 0.0
  %1212 = vmatpush1.msra.mxu0 %v1173
  %1213 = vmatprep.subr.mxu0 0.0
  %1214 = vmatpush1.msra.mxu0 %v1174
  %1215 = vmatprep.subr.mxu0 0.0
  %1216 = vmatpush1.msra.mxu0 %v1175
  %1217 = vmatprep.subr.mxu0 0.0
  %1218 = vmatpush1.msra.mxu0 %v1176
  %1219 = vmatprep.subr.mxu0 0.0
  %1220 = vmatpush1.msra.mxu0 %v1177
  %1221 = vmatprep.subr.mxu0 0.0
  %1222 = vmatpush1.msra.mxu0 %v1178
  %1223 = vmatprep.subr.mxu0 0.0
  %1224 = vmatpush1.msra.mxu0 %v1179
  %1225 = vmatprep.subr.mxu0 0.0
  %1226 = vmatpush1.msra.mxu0 0.0
  %1227 = vmatprep.subr.mxu0 0.0
  %1228 = vmatpush1.msra.mxu0 0.0
  %1229 = vmatprep.subr.mxu0 0.0
  %1230 = vmatpush1.msra.mxu0 0.0
  %1231 = vmatprep.subr.mxu0 0.0
  %1232 = vmatpush1.msra.mxu0 0.0
  %1233 = vmatprep.subr.mxu0 0.0
  %1234 = vmatpush1.msra.mxu0 0.0
  %1235 = vmatprep.subr.mxu0 0.0
  %1236 = vmatpush1.msra.mxu0 0.0
  %1237 = vmatprep.subr.mxu0 0.0
  %1238 = vmatpush1.msra.mxu0 0.0
  %1239 = vmatprep.subr.mxu0 0.0
  %1240 = vmatpush1.msra.mxu0 0.0
  %1241 = vmatprep.subr.mxu0 0.0
  %1242 = vmatpush1.msra.mxu0 0.0
  %1243 = vmatprep.subr.mxu0 0.0
  %1244 = vmatpush1.msra.mxu0 0.0
  %1245 = vmatprep.subr.mxu0 0.0
  %1246 = vmatpush1.msra.mxu0 0.0
  %1247 = vmatprep.subr.mxu0 0.0
  %1248 = vmatpush1.msra.mxu0 0.0
  %1249 = vmatprep.subr.mxu0 0.0
  %1250 = vmatpush1.msra.mxu0 0.0
  %1251 = vmatprep.subr.mxu0 0.0
  %1252 = vmatpush1.msra.mxu0 0.0
  %1253 = vmatprep.subr.mxu0 0.0
  %1254 = vmatpush1.msra.mxu0 0.0
  %1255 = vmatprep.subr.mxu0 0.0
  %1256 = vmatpush1.msra.mxu0 0.0
  %1257 = vmatprep.subr.mxu0 0.0
  %1258 = vmatpush1.msra.mxu0 0.0
  %1259 = vmatprep.subr.mxu0 0.0
  %1260 = vmatpush1.msra.mxu0 0.0
  %1261 = vmatprep.subr.mxu0 0.0
  %1262 = vmatpush1.msra.mxu0 0.0
  %1263 = vmatprep.subr.mxu0 0.0
  %1264 = vmatpush1.msra.mxu0 0.0
  %1265 = vmatprep.subr.mxu0 0.0
  %1266 = vmatpush1.msra.mxu0 0.0
  %1267 = vmatprep.subr.mxu0 0.0
  %1268 = vmatpush1.msra.mxu0 0.0
  %1269 = vmatprep.subr.mxu0 0.0
  %1270 = vmatpush1.msra.mxu0 0.0
  %1271 = vmatprep.subr.mxu0 0.0
  %1272 = vmatpush1.msra.mxu0 0.0
  %1273 = vmatprep.subr.mxu0 0.0
  %1274 = vmatpush1.msra.mxu0 0.0
  %1275 = vmatprep.mubr.f32.mxu0 0.0
  %1276 = vmatmul.mubr.f32.gmra.mrb[0].mxu0 %v1207
  %v1277 = vpop.f32.mrb[0].mxu0
  %v1278 = vadd.f32 0.0, %v1277
  %v1279 = vpop.f32.mrb[0].mxu0
  %1280 = vmatprep.mubr.f32.mxu0 0.0
  %1281 = vmatmul.mubr.f32.gmra.mrb[0].mxu0 %v1209
  %v1282 = vpop.f32.mrb[0].mxu0
  %v1283 = vadd.f32 0.0, %v1282
  %v1284 = vpop.f32.mrb[0].mxu0
  %1285 = vdwg.mxu0
  %v1288 = vrot.slane %v1133, 1
  %v1289 = vrot.slane %v1135, 1
  %v1290 = vsel %vm75, %v1288, %v1289
  %v1291 = vsel %vm1206, %v1290, 0
  %v1293 = vsel %vm1206, %v1289, 0
  %1295 = vmatprep.subr.mxu0 0.0
  %1296 = vmatpush1.msra.mxu0 %v1180
  %1297 = vmatprep.subr.mxu0 0.0
  %1298 = vmatpush1.msra.mxu0 %v1181
  %1299 = vmatprep.subr.mxu0 0.0
  %1300 = vmatpush1.msra.mxu0 %v1182
  %1301 = vmatprep.subr.mxu0 0.0
  %1302 = vmatpush1.msra.mxu0 %v1183
  %1303 = vmatprep.subr.mxu0 0.0
  %1304 = vmatpush1.msra.mxu0 %v1184
  %1305 = vmatprep.subr.mxu0 0.0
  %1306 = vmatpush1.msra.mxu0 %v1185
  %1307 = vmatprep.subr.mxu0 0.0
  %1308 = vmatpush1.msra.mxu0 %v1186
  %1309 = vmatprep.subr.mxu0 0.0
  %1310 = vmatpush1.msra.mxu0 0.0
  %1311 = vmatprep.subr.mxu0 0.0
  %1312 = vmatpush1.msra.mxu0 0.0
  %1313 = vmatprep.subr.mxu0 0.0
  %1314 = vmatpush1.msra.mxu0 0.0
  %1315 = vmatprep.subr.mxu0 0.0
  %1316 = vmatpush1.msra.mxu0 0.0
  %1317 = vmatprep.subr.mxu0 0.0
  %1318 = vmatpush1.msra.mxu0 0.0
  %1319 = vmatprep.subr.mxu0 0.0
  %1320 = vmatpush1.msra.mxu0 0.0
  %1321 = vmatprep.subr.mxu0 0.0
  %1322 = vmatpush1.msra.mxu0 0.0
  %1323 = vmatprep.subr.mxu0 0.0
  %1324 = vmatpush1.msra.mxu0 0.0
  %1325 = vmatprep.subr.mxu0 0.0
  %1326 = vmatpush1.msra.mxu0 0.0
  %1327 = vmatprep.subr.mxu0 0.0
  %1328 = vmatpush1.msra.mxu0 0.0
  %1329 = vmatprep.subr.mxu0 0.0
  %1330 = vmatpush1.msra.mxu0 0.0
  %1331 = vmatprep.subr.mxu0 0.0
  %1332 = vmatpush1.msra.mxu0 0.0
  %1333 = vmatprep.subr.mxu0 0.0
  %1334 = vmatpush1.msra.mxu0 0.0
  %1335 = vmatprep.subr.mxu0 0.0
  %1336 = vmatpush1.msra.mxu0 0.0
  %1337 = vmatprep.subr.mxu0 0.0
  %1338 = vmatpush1.msra.mxu0 0.0
  %1339 = vmatprep.subr.mxu0 0.0
  %1340 = vmatpush1.msra.mxu0 0.0
  %1341 = vmatprep.subr.mxu0 0.0
  %1342 = vmatpush1.msra.mxu0 0.0
  %1343 = vmatprep.subr.mxu0 0.0
  %1344 = vmatpush1.msra.mxu0 0.0
  %1345 = vmatprep.subr.mxu0 0.0
  %1346 = vmatpush1.msra.mxu0 0.0
  %1347 = vmatprep.subr.mxu0 0.0
  %1348 = vmatpush1.msra.mxu0 0.0
  %1349 = vmatprep.subr.mxu0 0.0
  %1350 = vmatpush1.msra.mxu0 0.0
  %1351 = vmatprep.subr.mxu0 0.0
  %1352 = vmatpush1.msra.mxu0 0.0
  %1353 = vmatprep.subr.mxu0 0.0
  %1354 = vmatpush1.msra.mxu0 0.0
  %1355 = vmatprep.subr.mxu0 0.0
  %1356 = vmatpush1.msra.mxu0 0.0
  %1357 = vmatprep.subr.mxu0 0.0
  %1358 = vmatpush1.msra.mxu0 0.0
  %1359 = vmatprep.mubr.f32.mxu0 0.0
  %1360 = vmatmul.mubr.f32.gmra.mrb[0].mxu0 %v1291
  %v1361 = vpop.f32.mrb[0].mxu0
  %v1362 = vadd.f32 0.0, %v1361
  %v1363 = vpop.f32.mrb[0].mxu0
  %1364 = vmatprep.mubr.f32.mxu0 0.0
  %1365 = vmatmul.mubr.f32.gmra.mrb[0].mxu0 %v1293
  %v1366 = vpop.f32.mrb[0].mxu0
  %v1367 = vadd.f32 0.0, %v1366
  %v1368 = vpop.f32.mrb[0].mxu0
  %1369 = vdwg.mxu0
  %v1372 = vrot.slane %v1137, 1
  %v1373 = vrot.slane %v1139, 1
  %v1374 = vsel %vm75, %v1372, %v1373
  %v1375 = vsel %vm1206, %v1374, 0
  %v1377 = vsel %vm1206, %v1373, 0
  %1379 = vmatprep.subr.mxu0 0.0
  %1380 = vmatpush1.msra.mxu0 %v1187
  %1381 = vmatprep.subr.mxu0 0.0
  %1382 = vmatpush1.msra.mxu0 %v1188
  %1383 = vmatprep.subr.mxu0 0.0
  %1384 = vmatpush1.msra.mxu0 %v1189
  %1385 = vmatprep.subr.mxu0 0.0
  %1386 = vmatpush1.msra.mxu0 %v1190
  %1387 = vmatprep.subr.mxu0 0.0
  %1388 = vmatpush1.msra.mxu0 %v1191
  %1389 = vmatprep.subr.mxu0 0.0
  %1390 = vmatpush1.msra.mxu0 %v1192
  %1391 = vmatprep.subr.mxu0 0.0
  %1392 = vmatpush1.msra.mxu0 %v1193
  %1393 = vmatprep.subr.mxu0 0.0
  %1394 = vmatpush1.msra.mxu0 0.0
  %1395 = vmatprep.subr.mxu0 0.0
  %1396 = vmatpush1.msra.mxu0 0.0
  %1397 = vmatprep.subr.mxu0 0.0
  %1398 = vmatpush1.msra.mxu0 0.0
  %1399 = vmatprep.subr.mxu0 0.0
  %1400 = vmatpush1.msra.mxu0 0.0
  %1401 = vmatprep.subr.mxu0 0.0
  %1402 = vmatpush1.msra.mxu0 0.0
  %1403 = vmatprep.subr.mxu0 0.0
  %1404 = vmatpush1.msra.mxu0 0.0
  %1405 = vmatprep.subr.mxu0 0.0
  %1406 = vmatpush1.msra.mxu0 0.0
  %1407 = vmatprep.subr.mxu0 0.0
  %1408 = vmatpush1.msra.mxu0 0.0
  %1409 = vmatprep.subr.mxu0 0.0
  %1410 = vmatpush1.msra.mxu0 0.0
  %1411 = vmatprep.subr.mxu0 0.0
  %1412 = vmatpush1.msra.mxu0 0.0
  %1413 = vmatprep.subr.mxu0 0.0
  %1414 = vmatpush1.msra.mxu0 0.0
  %1415 = vmatprep.subr.mxu0 0.0
  %1416 = vmatpush1.msra.mxu0 0.0
  %1417 = vmatprep.subr.mxu0 0.0
  %1418 = vmatpush1.msra.mxu0 0.0
  %1419 = vmatprep.subr.mxu0 0.0
  %1420 = vmatpush1.msra.mxu0 0.0
  %1421 = vmatprep.subr.mxu0 0.0
  %1422 = vmatpush1.msra.mxu0 0.0
  %1423 = vmatprep.subr.mxu0 0.0
  %1424 = vmatpush1.msra.mxu0 0.0
  %1425 = vmatprep.subr.mxu0 0.0
  %1426 = vmatpush1.msra.mxu0 0.0
  %1427 = vmatprep.subr.mxu0 0.0
  %1428 = vmatpush1.msra.mxu0 0.0
  %1429 = vmatprep.subr.mxu0 0.0
  %1430 = vmatpush1.msra.mxu0 0.0
  %1431 = vmatprep.subr.mxu0 0.0
  %1432 = vmatpush1.msra.mxu0 0.0
  %1433 = vmatprep.subr.mxu0 0.0
  %1434 = vmatpush1.msra.mxu0 0.0
  %1435 = vmatprep.subr.mxu0 0.0
  %1436 = vmatpush1.msra.mxu0 0.0
  %1437 = vmatprep.subr.mxu0 0.0
  %1438 = vmatpush1.msra.mxu0 0.0
  %1439 = vmatprep.subr.mxu0 0.0
  %1440 = vmatpush1.msra.mxu0 0.0
  %1441 = vmatprep.subr.mxu0 0.0
  %1442 = vmatpush1.msra.mxu0 0.0
  %1443 = vmatprep.mubr.f32.mxu0 0.0
  %1444 = vmatmul.mubr.f32.gmra.mrb[0].mxu0 %v1375
  %v1445 = vpop.f32.mrb[0].mxu0
  %v1446 = vadd.f32 0.0, %v1445
  %v1447 = vpop.f32.mrb[0].mxu0
  %1448 = vmatprep.mubr.f32.mxu0 0.0
  %1449 = vmatmul.mubr.f32.gmra.mrb[0].mxu0 %v1377
  %v1450 = vpop.f32.mrb[0].mxu0
  %v1451 = vadd.f32 0.0, %v1450
  %v1452 = vpop.f32.mrb[0].mxu0
  %1453 = vdwg.mxu0
  %v1456 = vrot.slane %v1141, 1
  %v1457 = vrot.slane %v1143, 1
  %v1458 = vsel %vm75, %v1456, %v1457
  %v1459 = vsel %vm1206, %v1458, 0
  %v1461 = vsel %vm1206, %v1457, 0
  %1463 = vmatprep.subr.mxu0 0.0
  %1464 = vmatpush1.msra.mxu0 %v1194
  %1465 = vmatprep.subr.mxu0 0.0
  %1466 = vmatpush1.msra.mxu0 %v1195
  %1467 = vmatprep.subr.mxu0 0.0
  %1468 = vmatpush1.msra.mxu0 %v1196
  %1469 = vmatprep.subr.mxu0 0.0
  %1470 = vmatpush1.msra.mxu0 %v1197
  %1471 = vmatprep.subr.mxu0 0.0
  %1472 = vmatpush1.msra.mxu0 %v1198
  %1473 = vmatprep.subr.mxu0 0.0
  %1474 = vmatpush1.msra.mxu0 %v1199
  %1475 = vmatprep.subr.mxu0 0.0
  %1476 = vmatpush1.msra.mxu0 %v1200
  %1477 = vmatprep.subr.mxu0 0.0
  %1478 = vmatpush1.msra.mxu0 0.0
  %1479 = vmatprep.subr.mxu0 0.0
  %1480 = vmatpush1.msra.mxu0 0.0
  %1481 = vmatprep.subr.mxu0 0.0
  %1482 = vmatpush1.msra.mxu0 0.0
  %1483 = vmatprep.subr.mxu0 0.0
  %1484 = vmatpush1.msra.mxu0 0.0
  %1485 = vmatprep.subr.mxu0 0.0
  %1486 = vmatpush1.msra.mxu0 0.0
  %1487 = vmatprep.subr.mxu0 0.0
  %1488 = vmatpush1.msra.mxu0 0.0
  %1489 = vmatprep.subr.mxu0 0.0
  %1490 = vmatpush1.msra.mxu0 0.0
  %1491 = vmatprep.subr.mxu0 0.0
  %1492 = vmatpush1.msra.mxu0 0.0
  %1493 = vmatprep.subr.mxu0 0.0
  %1494 = vmatpush1.msra.mxu0 0.0
  %1495 = vmatprep.subr.mxu0 0.0
  %1496 = vmatpush1.msra.mxu0 0.0
  %1497 = vmatprep.subr.mxu0 0.0
  %1498 = vmatpush1.msra.mxu0 0.0
  %1499 = vmatprep.subr.mxu0 0.0
  %1500 = vmatpush1.msra.mxu0 0.0
  %1501 = vmatprep.subr.mxu0 0.0
  %1502 = vmatpush1.msra.mxu0 0.0
  %1503 = vmatprep.subr.mxu0 0.0
  %1504 = vmatpush1.msra.mxu0 0.0
  %1505 = vmatprep.subr.mxu0 0.0
  %1506 = vmatpush1.msra.mxu0 0.0
  %1507 = vmatprep.subr.mxu0 0.0
  %1508 = vmatpush1.msra.mxu0 0.0
  %1509 = vmatprep.subr.mxu0 0.0
  %1510 = vmatpush1.msra.mxu0 0.0
  %1511 = vmatprep.subr.mxu0 0.0
  %1512 = vmatpush1.msra.mxu0 0.0
  %1513 = vmatprep.subr.mxu0 0.0
  %1514 = vmatpush1.msra.mxu0 0.0
  %1515 = vmatprep.subr.mxu0 0.0
  %1516 = vmatpush1.msra.mxu0 0.0
  %1517 = vmatprep.subr.mxu0 0.0
  %1518 = vmatpush1.msra.mxu0 0.0
  %1519 = vmatprep.subr.mxu0 0.0
  %1520 = vmatpush1.msra.mxu0 0.0
  %1521 = vmatprep.subr.mxu0 0.0
  %1522 = vmatpush1.msra.mxu0 0.0
  %1523 = vmatprep.subr.mxu0 0.0
  %1524 = vmatpush1.msra.mxu0 0.0
  %1525 = vmatprep.subr.mxu0 0.0
  %1526 = vmatpush1.msra.mxu0 0.0
  %1527 = vmatprep.mubr.f32.mxu0 0.0
  %1528 = vmatmul.mubr.f32.gmra.mrb[0].mxu0 %v1459
  %v1529 = vpop.f32.mrb[0].mxu0
  %v1530 = vadd.f32 0.0, %v1529
  %v1531 = vpop.f32.mrb[0].mxu0
  %1532 = vmatprep.mubr.f32.mxu0 0.0
  %1533 = vmatmul.mubr.f32.gmra.mrb[0].mxu0 %v1461
  %v1534 = vpop.f32.mrb[0].mxu0
  %v1535 = vadd.f32 0.0, %v1534
  %v1536 = vpop.f32.mrb[0].mxu0
  %1537 = vdwg.mxu0
  %v1538 = vsel %vm1206, %v1129, 0
  %v1540 = vsel %vm1206, %v1131, 0
  %1542 = vmatprep.subr.mxu0 0.0
  %1543 = vmatpush1.msra.mxu0 %v1144
  %1544 = vmatprep.subr.mxu0 0.0
  %1545 = vmatpush1.msra.mxu0 %v1145
  %1546 = vmatprep.subr.mxu0 0.0
  %1547 = vmatpush1.msra.mxu0 %v1146
  %1548 = vmatprep.subr.mxu0 0.0
  %1549 = vmatpush1.msra.mxu0 %v1147
  %1550 = vmatprep.subr.mxu0 0.0
  %1551 = vmatpush1.msra.mxu0 %v1148
  %1552 = vmatprep.subr.mxu0 0.0
  %1553 = vmatpush1.msra.mxu0 %v1149
  %1554 = vmatprep.subr.mxu0 0.0
  %1555 = vmatpush1.msra.mxu0 %v1150
  %1556 = vmatprep.subr.mxu0 0.0
  %1557 = vmatpush1.msra.mxu0 0.0
  %1558 = vmatprep.subr.mxu0 0.0
  %1559 = vmatpush1.msra.mxu0 0.0
  %1560 = vmatprep.subr.mxu0 0.0
  %1561 = vmatpush1.msra.mxu0 0.0
  %1562 = vmatprep.subr.mxu0 0.0
  %1563 = vmatpush1.msra.mxu0 0.0
  %1564 = vmatprep.subr.mxu0 0.0
  %1565 = vmatpush1.msra.mxu0 0.0
  %1566 = vmatprep.subr.mxu0 0.0
  %1567 = vmatpush1.msra.mxu0 0.0
  %1568 = vmatprep.subr.mxu0 0.0
  %1569 = vmatpush1.msra.mxu0 0.0
  %1570 = vmatprep.subr.mxu0 0.0
  %1571 = vmatpush1.msra.mxu0 0.0
  %1572 = vmatprep.subr.mxu0 0.0
  %1573 = vmatpush1.msra.mxu0 0.0
  %1574 = vmatprep.subr.mxu0 0.0
  %1575 = vmatpush1.msra.mxu0 0.0
  %1576 = vmatprep.subr.mxu0 0.0
  %1577 = vmatpush1.msra.mxu0 0.0
  %1578 = vmatprep.subr.mxu0 0.0
  %1579 = vmatpush1.msra.mxu0 0.0
  %1580 = vmatprep.subr.mxu0 0.0
  %1581 = vmatpush1.msra.mxu0 0.0
  %1582 = vmatprep.subr.mxu0 0.0
  %1583 = vmatpush1.msra.mxu0 0.0
  %1584 = vmatprep.subr.mxu0 0.0
  %1585 = vmatpush1.msra.mxu0 0.0
  %1586 = vmatprep.subr.mxu0 0.0
  %1587 = vmatpush1.msra.mxu0 0.0
  %1588 = vmatprep.subr.mxu0 0.0
  %1589 = vmatpush1.msra.mxu0 0.0
  %1590 = vmatprep.subr.mxu0 0.0
  %1591 = vmatpush1.msra.mxu0 0.0
  %1592 = vmatprep.subr.mxu0 0.0
  %1593 = vmatpush1.msra.mxu0 0.0
  %1594 = vmatprep.subr.mxu0 0.0
  %1595 = vmatpush1.msra.mxu0 0.0
  %1596 = vmatprep.subr.mxu0 0.0
  %1597 = vmatpush1.msra.mxu0 0.0
  %1598 = vmatprep.subr.mxu0 0.0
  %1599 = vmatpush1.msra.mxu0 0.0
  %1600 = vmatprep.subr.mxu0 0.0
  %1601 = vmatpush1.msra.mxu0 0.0
  %1602 = vmatprep.subr.mxu0 0.0
  %1603 = vmatpush1.msra.mxu0 0.0
  %1604 = vmatprep.subr.mxu0 0.0
  %1605 = vmatpush1.msra.mxu0 0.0
  %1606 = vmatprep.mubr.f32.mxu0 0.0
  %1607 = vmatmul.mubr.f32.gmra.mrb[0].mxu0 %v1538
  %v1608 = vpop.f32.mrb[0].mxu0
  %v1609 = vadd.f32 %v1278, %v1608
  %v1610 = vpop.f32.mrb[0].mxu0
  %1611 = vmatprep.mubr.f32.mxu0 0.0
  %1612 = vmatmul.mubr.f32.gmra.mrb[0].mxu0 %v1540
  %v1613 = vpop.f32.mrb[0].mxu0
  %v1614 = vadd.f32 %v1283, %v1613
  %v1615 = vpop.f32.mrb[0].mxu0
  %1616 = vdwg.mxu0
  %v1617 = vsel %vm1206, %v1133, 0
  %v1619 = vsel %vm1206, %v1135, 0
  %1621 = vmatprep.subr.mxu0 0.0
  %1622 = vmatpush1.msra.mxu0 %v1151
  %1623 = vmatprep.subr.mxu0 0.0
  %1624 = vmatpush1.msra.mxu0 %v1152
  %1625 = vmatprep.subr.mxu0 0.0
  %1626 = vmatpush1.msra.mxu0 %v1153
  %1627 = vmatprep.subr.mxu0 0.0
  %1628 = vmatpush1.msra.mxu0 %v1154
  %1629 = vmatprep.subr.mxu0 0.0
  %1630 = vmatpush1.msra.mxu0 %v1155
  %1631 = vmatprep.subr.mxu0 0.0
  %1632 = vmatpush1.msra.mxu0 %v1156
  %1633 = vmatprep.subr.mxu0 0.0
  %1634 = vmatpush1.msra.mxu0 %v1157
  %1635 = vmatprep.subr.mxu0 0.0
  %1636 = vmatpush1.msra.mxu0 0.0
  %1637 = vmatprep.subr.mxu0 0.0
  %1638 = vmatpush1.msra.mxu0 0.0
  %1639 = vmatprep.subr.mxu0 0.0
  %1640 = vmatpush1.msra.mxu0 0.0
  %1641 = vmatprep.subr.mxu0 0.0
  %1642 = vmatpush1.msra.mxu0 0.0
  %1643 = vmatprep.subr.mxu0 0.0
  %1644 = vmatpush1.msra.mxu0 0.0
  %1645 = vmatprep.subr.mxu0 0.0
  %1646 = vmatpush1.msra.mxu0 0.0
  %1647 = vmatprep.subr.mxu0 0.0
  %1648 = vmatpush1.msra.mxu0 0.0
  %1649 = vmatprep.subr.mxu0 0.0
  %1650 = vmatpush1.msra.mxu0 0.0
  %1651 = vmatprep.subr.mxu0 0.0
  %1652 = vmatpush1.msra.mxu0 0.0
  %1653 = vmatprep.subr.mxu0 0.0
  %1654 = vmatpush1.msra.mxu0 0.0
  %1655 = vmatprep.subr.mxu0 0.0
  %1656 = vmatpush1.msra.mxu0 0.0
  %1657 = vmatprep.subr.mxu0 0.0
  %1658 = vmatpush1.msra.mxu0 0.0
  %1659 = vmatprep.subr.mxu0 0.0
  %1660 = vmatpush1.msra.mxu0 0.0
  %1661 = vmatprep.subr.mxu0 0.0
  %1662 = vmatpush1.msra.mxu0 0.0
  %1663 = vmatprep.subr.mxu0 0.0
  %1664 = vmatpush1.msra.mxu0 0.0
  %1665 = vmatprep.subr.mxu0 0.0
  %1666 = vmatpush1.msra.mxu0 0.0
  %1667 = vmatprep.subr.mxu0 0.0
  %1668 = vmatpush1.msra.mxu0 0.0
  %1669 = vmatprep.subr.mxu0 0.0
  %1670 = vmatpush1.msra.mxu0 0.0
  %1671 = vmatprep.subr.mxu0 0.0
  %1672 = vmatpush1.msra.mxu0 0.0
  %1673 = vmatprep.subr.mxu0 0.0
  %1674 = vmatpush1.msra.mxu0 0.0
  %1675 = vmatprep.subr.mxu0 0.0
  %1676 = vmatpush1.msra.mxu0 0.0
  %1677 = vmatprep.subr.mxu0 0.0
  %1678 = vmatpush1.msra.mxu0 0.0
  %1679 = vmatprep.subr.mxu0 0.0
  %1680 = vmatpush1.msra.mxu0 0.0
  %1681 = vmatprep.subr.mxu0 0.0
  %1682 = vmatpush1.msra.mxu0 0.0
  %1683 = vmatprep.subr.mxu0 0.0
  %1684 = vmatpush1.msra.mxu0 0.0
  %1685 = vmatprep.mubr.f32.mxu0 0.0
  %1686 = vmatmul.mubr.f32.gmra.mrb[0].mxu0 %v1617
  %v1687 = vpop.f32.mrb[0].mxu0
  %v1688 = vadd.f32 %v1362, %v1687
  %v1689 = vpop.f32.mrb[0].mxu0
  %1690 = vmatprep.mubr.f32.mxu0 0.0
  %1691 = vmatmul.mubr.f32.gmra.mrb[0].mxu0 %v1619
  %v1692 = vpop.f32.mrb[0].mxu0
  %v1693 = vadd.f32 %v1367, %v1692
  %v1694 = vpop.f32.mrb[0].mxu0
  %1695 = vdwg.mxu0
  %v1696 = vsel %vm1206, %v1137, 0
  %v1698 = vsel %vm1206, %v1139, 0
  %1700 = vmatprep.subr.mxu0 0.0
  %1701 = vmatpush1.msra.mxu0 %v1158
  %1702 = vmatprep.subr.mxu0 0.0
  %1703 = vmatpush1.msra.mxu0 %v1159
  %1704 = vmatprep.subr.mxu0 0.0
  %1705 = vmatpush1.msra.mxu0 %v1160
  %1706 = vmatprep.subr.mxu0 0.0
  %1707 = vmatpush1.msra.mxu0 %v1161
  %1708 = vmatprep.subr.mxu0 0.0
  %1709 = vmatpush1.msra.mxu0 %v1162
  %1710 = vmatprep.subr.mxu0 0.0
  %1711 = vmatpush1.msra.mxu0 %v1163
  %1712 = vmatprep.subr.mxu0 0.0
  %1713 = vmatpush1.msra.mxu0 %v1164
  %1714 = vmatprep.subr.mxu0 0.0
  %1715 = vmatpush1.msra.mxu0 0.0
  %1716 = vmatprep.subr.mxu0 0.0
  %1717 = vmatpush1.msra.mxu0 0.0
  %1718 = vmatprep.subr.mxu0 0.0
  %1719 = vmatpush1.msra.mxu0 0.0
  %1720 = vmatprep.subr.mxu0 0.0
  %1721 = vmatpush1.msra.mxu0 0.0
  %1722 = vmatprep.subr.mxu0 0.0
  %1723 = vmatpush1.msra.mxu0 0.0
  %1724 = vmatprep.subr.mxu0 0.0
  %1725 = vmatpush1.msra.mxu0 0.0
  %1726 = vmatprep.subr.mxu0 0.0
  %1727 = vmatpush1.msra.mxu0 0.0
  %1728 = vmatprep.subr.mxu0 0.0
  %1729 = vmatpush1.msra.mxu0 0.0
  %1730 = vmatprep.subr.mxu0 0.0
  %1731 = vmatpush1.msra.mxu0 0.0
  %1732 = vmatprep.subr.mxu0 0.0
  %1733 = vmatpush1.msra.mxu0 0.0
  %1734 = vmatprep.subr.mxu0 0.0
  %1735 = vmatpush1.msra.mxu0 0.0
  %1736 = vmatprep.subr.mxu0 0.0
  %1737 = vmatpush1.msra.mxu0 0.0
  %1738 = vmatprep.subr.mxu0 0.0
  %1739 = vmatpush1.msra.mxu0 0.0
  %1740 = vmatprep.subr.mxu0 0.0
  %1741 = vmatpush1.msra.mxu0 0.0
  %1742 = vmatprep.subr.mxu0 0.0
  %1743 = vmatpush1.msra.mxu0 0.0
  %1744 = vmatprep.subr.mxu0 0.0
  %1745 = vmatpush1.msra.mxu0 0.0
  %1746 = vmatprep.subr.mxu0 0.0
  %1747 = vmatpush1.msra.mxu0 0.0
  %1748 = vmatprep.subr.mxu0 0.0
  %1749 = vmatpush1.msra.mxu0 0.0
  %1750 = vmatprep.subr.mxu0 0.0
  %1751 = vmatpush1.msra.mxu0 0.0
  %1752 = vmatprep.subr.mxu0 0.0
  %1753 = vmatpush1.msra.mxu0 0.0
  %1754 = vmatprep.subr.mxu0 0.0
  %1755 = vmatpush1.msra.mxu0 0.0
  %1756 = vmatprep.subr.mxu0 0.0
  %1757 = vmatpush1.msra.mxu0 0.0
  %1758 = vmatprep.subr.mxu0 0.0
  %1759 = vmatpush1.msra.mxu0 0.0
  %1760 = vmatprep.subr.mxu0 0.0
  %1761 = vmatpush1.msra.mxu0 0.0
  %1762 = vmatprep.subr.mxu0 0.0
  %1763 = vmatpush1.msra.mxu0 0.0
  %1764 = vmatprep.mubr.f32.mxu0 0.0
  %1765 = vmatmul.mubr.f32.gmra.mrb[0].mxu0 %v1696
  %v1766 = vpop.f32.mrb[0].mxu0
  %v1767 = vadd.f32 %v1446, %v1766
  %v1768 = vpop.f32.mrb[0].mxu0
  %1769 = vmatprep.mubr.f32.mxu0 0.0
  %1770 = vmatmul.mubr.f32.gmra.mrb[0].mxu0 %v1698
  %v1771 = vpop.f32.mrb[0].mxu0
  %v1772 = vadd.f32 %v1451, %v1771
  %v1773 = vpop.f32.mrb[0].mxu0
  %1774 = vdwg.mxu0
  %v1775 = vsel %vm1206, %v1141, 0
  %v1777 = vsel %vm1206, %v1143, 0
  %1779 = vmatprep.subr.mxu0 0.0
  %1780 = vmatpush1.msra.mxu0 %v1165
  %1781 = vmatprep.subr.mxu0 0.0
  %1782 = vmatpush1.msra.mxu0 %v1166
  %1783 = vmatprep.subr.mxu0 0.0
  %1784 = vmatpush1.msra.mxu0 %v1167
  %1785 = vmatprep.subr.mxu0 0.0
  %1786 = vmatpush1.msra.mxu0 %v1168
  %1787 = vmatprep.subr.mxu0 0.0
  %1788 = vmatpush1.msra.mxu0 %v1169
  %1789 = vmatprep.subr.mxu0 0.0
  %1790 = vmatpush1.msra.mxu0 %v1170
  %1791 = vmatprep.subr.mxu0 0.0
  %1792 = vmatpush1.msra.mxu0 %v1171
  %1793 = vmatprep.subr.mxu0 0.0
  %1794 = vmatpush1.msra.mxu0 0.0
  %1795 = vmatprep.subr.mxu0 0.0
  %1796 = vmatpush1.msra.mxu0 0.0
  %1797 = vmatprep.subr.mxu0 0.0
  %1798 = vmatpush1.msra.mxu0 0.0
  %1799 = vmatprep.subr.mxu0 0.0
  %1800 = vmatpush1.msra.mxu0 0.0
  %1801 = vmatprep.subr.mxu0 0.0
  %1802 = vmatpush1.msra.mxu0 0.0
  %1803 = vmatprep.subr.mxu0 0.0
  %1804 = vmatpush1.msra.mxu0 0.0
  %1805 = vmatprep.subr.mxu0 0.0
  %1806 = vmatpush1.msra.mxu0 0.0
  %1807 = vmatprep.subr.mxu0 0.0
  %1808 = vmatpush1.msra.mxu0 0.0
  %1809 = vmatprep.subr.mxu0 0.0
  %1810 = vmatpush1.msra.mxu0 0.0
  %1811 = vmatprep.subr.mxu0 0.0
  %1812 = vmatpush1.msra.mxu0 0.0
  %1813 = vmatprep.subr.mxu0 0.0
  %1814 = vmatpush1.msra.mxu0 0.0
  %1815 = vmatprep.subr.mxu0 0.0
  %1816 = vmatpush1.msra.mxu0 0.0
  %1817 = vmatprep.subr.mxu0 0.0
  %1818 = vmatpush1.msra.mxu0 0.0
  %1819 = vmatprep.subr.mxu0 0.0
  %1820 = vmatpush1.msra.mxu0 0.0
  %1821 = vmatprep.subr.mxu0 0.0
  %1822 = vmatpush1.msra.mxu0 0.0
  %1823 = vmatprep.subr.mxu0 0.0
  %1824 = vmatpush1.msra.mxu0 0.0
  %1825 = vmatprep.subr.mxu0 0.0
  %1826 = vmatpush1.msra.mxu0 0.0
  %1827 = vmatprep.subr.mxu0 0.0
  %1828 = vmatpush1.msra.mxu0 0.0
  %1829 = vmatprep.subr.mxu0 0.0
  %1830 = vmatpush1.msra.mxu0 0.0
  %1831 = vmatprep.subr.mxu0 0.0
  %1832 = vmatpush1.msra.mxu0 0.0
  %1833 = vmatprep.subr.mxu0 0.0
  %1834 = vmatpush1.msra.mxu0 0.0
  %1835 = vmatprep.subr.mxu0 0.0
  %1836 = vmatpush1.msra.mxu0 0.0
  %1837 = vmatprep.subr.mxu0 0.0
  %1838 = vmatpush1.msra.mxu0 0.0
  %1839 = vmatprep.subr.mxu0 0.0
  %1840 = vmatpush1.msra.mxu0 0.0
  %1841 = vmatprep.subr.mxu0 0.0
  %1842 = vmatpush1.msra.mxu0 0.0
  %1843 = vmatprep.mubr.f32.mxu0 0.0
  %1844 = vmatmul.mubr.f32.gmra.mrb[0].mxu0 %v1775
  %v1845 = vpop.f32.mrb[0].mxu0
  %v1846 = vadd.f32 %v1530, %v1845
  %v1847 = vpop.f32.mrb[0].mxu0
  %1848 = vmatprep.mubr.f32.mxu0 0.0
  %1849 = vmatmul.mubr.f32.gmra.mrb[0].mxu0 %v1777
  %v1850 = vpop.f32.mrb[0].mxu0
  %v1851 = vadd.f32 %v1535, %v1850
  %v1852 = vpop.f32.mrb[0].mxu0
  %1853 = vdwg.mxu0
  %s1854 = scalar_lea.vmem %s2, 448
  %v1855 = vld [vmem:[%s1854] sm:$0xff]
  %v1856 = vld [vmem:[%s1854 + $0x8] sm:$0xff]
  %v1857 = vld [vmem:[%s1854 + $0x10] sm:$0xff]
  %v1858 = vld [vmem:[%s1854 + $0x18] sm:$0xff]
  %v1859 = vld [vmem:[%s1854 + $0x20] sm:$0xff]
  %v1860 = vld [vmem:[%s1854 + $0x28] sm:$0xff]
  %v1861 = vld [vmem:[%s1854 + $0x30] sm:$0xff]
  %v1862 = vld [vmem:[%s1854 + $0x38] sm:$0xff]
  %v1863 = vld [vmem:[%s1854 + $0x40] sm:$0xff]
  %v1864 = vld [vmem:[%s1854 + $0x48] sm:$0xff]
  %v1865 = vld [vmem:[%s1854 + $0x50] sm:$0xff]
  %v1866 = vld [vmem:[%s1854 + $0x58] sm:$0xff]
  %v1867 = vld [vmem:[%s1854 + $0x60] sm:$0xff]
  %v1868 = vld [vmem:[%s1854 + $0x68] sm:$0xff]
  %v1869 = vld [vmem:[%s1854 + $0x70] sm:$0xff]
  %v1870 = vld [vmem:[%s1854 + $0x78] sm:$0xff]
  %v1871 = vld [vmem:[%s1854 + $0x80] sm:$0xff]
  %v1872 = vld [vmem:[%s1854 + $0x88] sm:$0xff]
  %v1873 = vld [vmem:[%s1854 + $0x90] sm:$0xff]
  %v1874 = vld [vmem:[%s1854 + $0x98] sm:$0xff]
  %v1875 = vld [vmem:[%s1854 + $0xa0] sm:$0xff]
  %v1876 = vld [vmem:[%s1854 + $0xa8] sm:$0xff]
  %v1877 = vld [vmem:[%s1854 + $0xb0] sm:$0xff]
  %v1878 = vld [vmem:[%s1854 + $0xb8] sm:$0xff]
  %v1879 = vld [vmem:[%s1854 + $0xc0] sm:$0xff]
  %v1880 = vld [vmem:[%s1854 + $0xc8] sm:$0xff]
  %v1881 = vld [vmem:[%s1854 + $0xd0] sm:$0xff]
  %v1882 = vld [vmem:[%s1854 + $0xd8] sm:$0xff]
  %v1883 = vrot.slane %v1129, 2
  %v1884 = vrot.slane %v1131, 2
  %v1885 = vsel %vm744, %v1883, %v1884
  %v1886 = vsel %vm1206, %v1885, 0
  %v1888 = vsel %vm1206, %v1884, 0
  %1890 = vmatprep.subr.mxu0 0.0
  %1891 = vmatpush1.msra.mxu0 %v1855
  %1892 = vmatprep.subr.mxu0 0.0
  %1893 = vmatpush1.msra.mxu0 %v1856
  %1894 = vmatprep.subr.mxu0 0.0
  %1895 = vmatpush1.msra.mxu0 %v1857
  %1896 = vmatprep.subr.mxu0 0.0
  %1897 = vmatpush1.msra.mxu0 %v1858
  %1898 = vmatprep.subr.mxu0 0.0
  %1899 = vmatpush1.msra.mxu0 %v1859
  %1900 = vmatprep.subr.mxu0 0.0
  %1901 = vmatpush1.msra.mxu0 %v1860
  %1902 = vmatprep.subr.mxu0 0.0
  %1903 = vmatpush1.msra.mxu0 %v1861
  %1904 = vmatprep.subr.mxu0 0.0
  %1905 = vmatpush1.msra.mxu0 0.0
  %1906 = vmatprep.subr.mxu0 0.0
  %1907 = vmatpush1.msra.mxu0 0.0
  %1908 = vmatprep.subr.mxu0 0.0
  %1909 = vmatpush1.msra.mxu0 0.0
  %1910 = vmatprep.subr.mxu0 0.0
  %1911 = vmatpush1.msra.mxu0 0.0
  %1912 = vmatprep.subr.mxu0 0.0
  %1913 = vmatpush1.msra.mxu0 0.0
  %1914 = vmatprep.subr.mxu0 0.0
  %1915 = vmatpush1.msra.mxu0 0.0
  %1916 = vmatprep.subr.mxu0 0.0
  %1917 = vmatpush1.msra.mxu0 0.0
  %1918 = vmatprep.subr.mxu0 0.0
  %1919 = vmatpush1.msra.mxu0 0.0
  %1920 = vmatprep.subr.mxu0 0.0
  %1921 = vmatpush1.msra.mxu0 0.0
  %1922 = vmatprep.subr.mxu0 0.0
  %1923 = vmatpush1.msra.mxu0 0.0
  %1924 = vmatprep.subr.mxu0 0.0
  %1925 = vmatpush1.msra.mxu0 0.0
  %1926 = vmatprep.subr.mxu0 0.0
  %1927 = vmatpush1.msra.mxu0 0.0
  %1928 = vmatprep.subr.mxu0 0.0
  %1929 = vmatpush1.msra.mxu0 0.0
  %1930 = vmatprep.subr.mxu0 0.0
  %1931 = vmatpush1.msra.mxu0 0.0
  %1932 = vmatprep.subr.mxu0 0.0
  %1933 = vmatpush1.msra.mxu0 0.0
  %1934 = vmatprep.subr.mxu0 0.0
  %1935 = vmatpush1.msra.mxu0 0.0
  %1936 = vmatprep.subr.mxu0 0.0
  %1937 = vmatpush1.msra.mxu0 0.0
  %1938 = vmatprep.subr.mxu0 0.0
  %1939 = vmatpush1.msra.mxu0 0.0
  %1940 = vmatprep.subr.mxu0 0.0
  %1941 = vmatpush1.msra.mxu0 0.0
  %1942 = vmatprep.subr.mxu0 0.0
  %1943 = vmatpush1.msra.mxu0 0.0
  %1944 = vmatprep.subr.mxu0 0.0
  %1945 = vmatpush1.msra.mxu0 0.0
  %1946 = vmatprep.subr.mxu0 0.0
  %1947 = vmatpush1.msra.mxu0 0.0
  %1948 = vmatprep.subr.mxu0 0.0
  %1949 = vmatpush1.msra.mxu0 0.0
  %1950 = vmatprep.subr.mxu0 0.0
  %1951 = vmatpush1.msra.mxu0 0.0
  %1952 = vmatprep.subr.mxu0 0.0
  %1953 = vmatpush1.msra.mxu0 0.0
  %1954 = vmatprep.mubr.f32.mxu0 0.0
  %1955 = vmatmul.mubr.f32.gmra.mrb[0].mxu0 %v1886
  %v1956 = vpop.f32.mrb[0].mxu0
  %v1957 = vadd.f32 0.0, %v1956
  %v1958 = vpop.f32.mrb[0].mxu0
  %1959 = vmatprep.mubr.f32.mxu0 0.0
  %1960 = vmatmul.mubr.f32.gmra.mrb[0].mxu0 %v1888
  %v1961 = vpop.f32.mrb[0].mxu0
  %v1962 = vadd.f32 0.0, %v1961
  %v1963 = vpop.f32.mrb[0].mxu0
  %1964 = vdwg.mxu0
  %v1965 = vrot.slane %v1133, 2
  %v1966 = vrot.slane %v1135, 2
  %v1967 = vsel %vm744, %v1965, %v1966
  %v1968 = vsel %vm1206, %v1967, 0
  %v1970 = vsel %vm1206, %v1966, 0
  %1972 = vmatprep.subr.mxu0 0.0
  %1973 = vmatpush1.msra.mxu0 %v1862
  %1974 = vmatprep.subr.mxu0 0.0
  %1975 = vmatpush1.msra.mxu0 %v1863
  %1976 = vmatprep.subr.mxu0 0.0
  %1977 = vmatpush1.msra.mxu0 %v1864
  %1978 = vmatprep.subr.mxu0 0.0
  %1979 = vmatpush1.msra.mxu0 %v1865
  %1980 = vmatprep.subr.mxu0 0.0
  %1981 = vmatpush1.msra.mxu0 %v1866
  %1982 = vmatprep.subr.mxu0 0.0
  %1983 = vmatpush1.msra.mxu0 %v1867
  %1984 = vmatprep.subr.mxu0 0.0
  %1985 = vmatpush1.msra.mxu0 %v1868
  %1986 = vmatprep.subr.mxu0 0.0
  %1987 = vmatpush1.msra.mxu0 0.0
  %1988 = vmatprep.subr.mxu0 0.0
  %1989 = vmatpush1.msra.mxu0 0.0
  %1990 = vmatprep.subr.mxu0 0.0
  %1991 = vmatpush1.msra.mxu0 0.0
  %1992 = vmatprep.subr.mxu0 0.0
  %1993 = vmatpush1.msra.mxu0 0.0
  %1994 = vmatprep.subr.mxu0 0.0
  %1995 = vmatpush1.msra.mxu0 0.0
  %1996 = vmatprep.subr.mxu0 0.0
  %1997 = vmatpush1.msra.mxu0 0.0
  %1998 = vmatprep.subr.mxu0 0.0
  %1999 = vmatpush1.msra.mxu0 0.0
  %2000 = vmatprep.subr.mxu0 0.0
  %2001 = vmatpush1.msra.mxu0 0.0
  %2002 = vmatprep.subr.mxu0 0.0
  %2003 = vmatpush1.msra.mxu0 0.0
  %2004 = vmatprep.subr.mxu0 0.0
  %2005 = vmatpush1.msra.mxu0 0.0
  %2006 = vmatprep.subr.mxu0 0.0
  %2007 = vmatpush1.msra.mxu0 0.0
  %2008 = vmatprep.subr.mxu0 0.0
  %2009 = vmatpush1.msra.mxu0 0.0
  %2010 = vmatprep.subr.mxu0 0.0
  %2011 = vmatpush1.msra.mxu0 0.0
  %2012 = vmatprep.subr.mxu0 0.0
  %2013 = vmatpush1.msra.mxu0 0.0
  %2014 = vmatprep.subr.mxu0 0.0
  %2015 = vmatpush1.msra.mxu0 0.0
  %2016 = vmatprep.subr.mxu0 0.0
  %2017 = vmatpush1.msra.mxu0 0.0
  %2018 = vmatprep.subr.mxu0 0.0
  %2019 = vmatpush1.msra.mxu0 0.0
  %2020 = vmatprep.subr.mxu0 0.0
  %2021 = vmatpush1.msra.mxu0 0.0
  %2022 = vmatprep.subr.mxu0 0.0
  %2023 = vmatpush1.msra.mxu0 0.0
  %2024 = vmatprep.subr.mxu0 0.0
  %2025 = vmatpush1.msra.mxu0 0.0
  %2026 = vmatprep.subr.mxu0 0.0
  %2027 = vmatpush1.msra.mxu0 0.0
  %2028 = vmatprep.subr.mxu0 0.0
  %2029 = vmatpush1.msra.mxu0 0.0
  %2030 = vmatprep.subr.mxu0 0.0
  %2031 = vmatpush1.msra.mxu0 0.0
  %2032 = vmatprep.subr.mxu0 0.0
  %2033 = vmatpush1.msra.mxu0 0.0
  %2034 = vmatprep.subr.mxu0 0.0
  %2035 = vmatpush1.msra.mxu0 0.0
  %2036 = vmatprep.mubr.f32.mxu0 0.0
  %2037 = vmatmul.mubr.f32.gmra.mrb[0].mxu0 %v1968
  %v2038 = vpop.f32.mrb[0].mxu0
  %v2039 = vadd.f32 0.0, %v2038
  %v2040 = vpop.f32.mrb[0].mxu0
  %2041 = vmatprep.mubr.f32.mxu0 0.0
  %2042 = vmatmul.mubr.f32.gmra.mrb[0].mxu0 %v1970
  %v2043 = vpop.f32.mrb[0].mxu0
  %v2044 = vadd.f32 0.0, %v2043
  %v2045 = vpop.f32.mrb[0].mxu0
  %2046 = vdwg.mxu0
  %v2047 = vrot.slane %v1137, 2
  %v2048 = vrot.slane %v1139, 2
  %v2049 = vsel %vm744, %v2047, %v2048
  %v2050 = vsel %vm1206, %v2049, 0
  %v2052 = vsel %vm1206, %v2048, 0
  %2054 = vmatprep.subr.mxu0 0.0
  %2055 = vmatpush1.msra.mxu0 %v1869
  %2056 = vmatprep.subr.mxu0 0.0
  %2057 = vmatpush1.msra.mxu0 %v1870
  %2058 = vmatprep.subr.mxu0 0.0
  %2059 = vmatpush1.msra.mxu0 %v1871
  %2060 = vmatprep.subr.mxu0 0.0
  %2061 = vmatpush1.msra.mxu0 %v1872
  %2062 = vmatprep.subr.mxu0 0.0
  %2063 = vmatpush1.msra.mxu0 %v1873
  %2064 = vmatprep.subr.mxu0 0.0
  %2065 = vmatpush1.msra.mxu0 %v1874
  %2066 = vmatprep.subr.mxu0 0.0
  %2067 = vmatpush1.msra.mxu0 %v1875
  %2068 = vmatprep.subr.mxu0 0.0
  %2069 = vmatpush1.msra.mxu0 0.0
  %2070 = vmatprep.subr.mxu0 0.0
  %2071 = vmatpush1.msra.mxu0 0.0
  %2072 = vmatprep.subr.mxu0 0.0
  %2073 = vmatpush1.msra.mxu0 0.0
  %2074 = vmatprep.subr.mxu0 0.0
  %2075 = vmatpush1.msra.mxu0 0.0
  %2076 = vmatprep.subr.mxu0 0.0
  %2077 = vmatpush1.msra.mxu0 0.0
  %2078 = vmatprep.subr.mxu0 0.0
  %2079 = vmatpush1.msra.mxu0 0.0
  %2080 = vmatprep.subr.mxu0 0.0
  %2081 = vmatpush1.msra.mxu0 0.0
  %2082 = vmatprep.subr.mxu0 0.0
  %2083 = vmatpush1.msra.mxu0 0.0
  %2084 = vmatprep.subr.mxu0 0.0
  %2085 = vmatpush1.msra.mxu0 0.0
  %2086 = vmatprep.subr.mxu0 0.0
  %2087 = vmatpush1.msra.mxu0 0.0
  %2088 = vmatprep.subr.mxu0 0.0
  %2089 = vmatpush1.msra.mxu0 0.0
  %2090 = vmatprep.subr.mxu0 0.0
  %2091 = vmatpush1.msra.mxu0 0.0
  %2092 = vmatprep.subr.mxu0 0.0
  %2093 = vmatpush1.msra.mxu0 0.0
  %2094 = vmatprep.subr.mxu0 0.0
  %2095 = vmatpush1.msra.mxu0 0.0
  %2096 = vmatprep.subr.mxu0 0.0
  %2097 = vmatpush1.msra.mxu0 0.0
  %2098 = vmatprep.subr.mxu0 0.0
  %2099 = vmatpush1.msra.mxu0 0.0
  %2100 = vmatprep.subr.mxu0 0.0
  %2101 = vmatpush1.msra.mxu0 0.0
  %2102 = vmatprep.subr.mxu0 0.0
  %2103 = vmatpush1.msra.mxu0 0.0
  %2104 = vmatprep.subr.mxu0 0.0
  %2105 = vmatpush1.msra.mxu0 0.0
  %2106 = vmatprep.subr.mxu0 0.0
  %2107 = vmatpush1.msra.mxu0 0.0
  %2108 = vmatprep.subr.mxu0 0.0
  %2109 = vmatpush1.msra.mxu0 0.0
  %2110 = vmatprep.subr.mxu0 0.0
  %2111 = vmatpush1.msra.mxu0 0.0
  %2112 = vmatprep.subr.mxu0 0.0
  %2113 = vmatpush1.msra.mxu0 0.0
  %2114 = vmatprep.subr.mxu0 0.0
  %2115 = vmatpush1.msra.mxu0 0.0
  %2116 = vmatprep.subr.mxu0 0.0
  %2117 = vmatpush1.msra.mxu0 0.0
  %2118 = vmatprep.mubr.f32.mxu0 0.0
  %2119 = vmatmul.mubr.f32.gmra.mrb[0].mxu0 %v2050
  %v2120 = vpop.f32.mrb[0].mxu0
  %v2121 = vadd.f32 0.0, %v2120
  %v2122 = vpop.f32.mrb[0].mxu0
  %2123 = vmatprep.mubr.f32.mxu0 0.0
  %2124 = vmatmul.mubr.f32.gmra.mrb[0].mxu0 %v2052
  %v2125 = vpop.f32.mrb[0].mxu0
  %v2126 = vadd.f32 0.0, %v2125
  %v2127 = vpop.f32.mrb[0].mxu0
  %2128 = vdwg.mxu0
  %v2129 = vrot.slane %v1141, 2
  %v2130 = vrot.slane %v1143, 2
  %v2131 = vsel %vm744, %v2129, %v2130
  %v2132 = vsel %vm1206, %v2131, 0
  %v2134 = vsel %vm1206, %v2130, 0
  %2136 = vmatprep.subr.mxu0 0.0
  %2137 = vmatpush1.msra.mxu0 %v1876
  %2138 = vmatprep.subr.mxu0 0.0
  %2139 = vmatpush1.msra.mxu0 %v1877
  %2140 = vmatprep.subr.mxu0 0.0
  %2141 = vmatpush1.msra.mxu0 %v1878
  %2142 = vmatprep.subr.mxu0 0.0
  %2143 = vmatpush1.msra.mxu0 %v1879
  %2144 = vmatprep.subr.mxu0 0.0
  %2145 = vmatpush1.msra.mxu0 %v1880
  %2146 = vmatprep.subr.mxu0 0.0
  %2147 = vmatpush1.msra.mxu0 %v1881
  %2148 = vmatprep.subr.mxu0 0.0
  %2149 = vmatpush1.msra.mxu0 %v1882
  %2150 = vmatprep.subr.mxu0 0.0
  %2151 = vmatpush1.msra.mxu0 0.0
  %2152 = vmatprep.subr.mxu0 0.0
  %2153 = vmatpush1.msra.mxu0 0.0
  %2154 = vmatprep.subr.mxu0 0.0
  %2155 = vmatpush1.msra.mxu0 0.0
  %2156 = vmatprep.subr.mxu0 0.0
  %2157 = vmatpush1.msra.mxu0 0.0
  %2158 = vmatprep.subr.mxu0 0.0
  %2159 = vmatpush1.msra.mxu0 0.0
  %2160 = vmatprep.subr.mxu0 0.0
  %2161 = vmatpush1.msra.mxu0 0.0
  %2162 = vmatprep.subr.mxu0 0.0
  %2163 = vmatpush1.msra.mxu0 0.0
  %2164 = vmatprep.subr.mxu0 0.0
  %2165 = vmatpush1.msra.mxu0 0.0
  %2166 = vmatprep.subr.mxu0 0.0
  %2167 = vmatpush1.msra.mxu0 0.0
  %2168 = vmatprep.subr.mxu0 0.0
  %2169 = vmatpush1.msra.mxu0 0.0
  %2170 = vmatprep.subr.mxu0 0.0
  %2171 = vmatpush1.msra.mxu0 0.0
  %2172 = vmatprep.subr.mxu0 0.0
  %2173 = vmatpush1.msra.mxu0 0.0
  %2174 = vmatprep.subr.mxu0 0.0
  %2175 = vmatpush1.msra.mxu0 0.0
  %2176 = vmatprep.subr.mxu0 0.0
  %2177 = vmatpush1.msra.mxu0 0.0
  %2178 = vmatprep.subr.mxu0 0.0
  %2179 = vmatpush1.msra.mxu0 0.0
  %2180 = vmatprep.subr.mxu0 0.0
  %2181 = vmatpush1.msra.mxu0 0.0
  %2182 = vmatprep.subr.mxu0 0.0
  %2183 = vmatpush1.msra.mxu0 0.0
  %2184 = vmatprep.subr.mxu0 0.0
  %2185 = vmatpush1.msra.mxu0 0.0
  %2186 = vmatprep.subr.mxu0 0.0
  %2187 = vmatpush1.msra.mxu0 0.0
  %2188 = vmatprep.subr.mxu0 0.0
  %2189 = vmatpush1.msra.mxu0 0.0
  %2190 = vmatprep.subr.mxu0 0.0
  %2191 = vmatpush1.msra.mxu0 0.0
  %2192 = vmatprep.subr.mxu0 0.0
  %2193 = vmatpush1.msra.mxu0 0.0
  %2194 = vmatprep.subr.mxu0 0.0
  %2195 = vmatpush1.msra.mxu0 0.0
  %2196 = vmatprep.subr.mxu0 0.0
  %2197 = vmatpush1.msra.mxu0 0.0
  %2198 = vmatprep.subr.mxu0 0.0
  %2199 = vmatpush1.msra.mxu0 0.0
  %2200 = vmatprep.mubr.f32.mxu0 0.0
  %2201 = vmatmul.mubr.f32.gmra.mrb[0].mxu0 %v2132
  %v2202 = vpop.f32.mrb[0].mxu0
  %v2203 = vadd.f32 0.0, %v2202
  %v2204 = vpop.f32.mrb[0].mxu0
  %2205 = vmatprep.mubr.f32.mxu0 0.0
  %2206 = vmatmul.mubr.f32.gmra.mrb[0].mxu0 %v2134
  %v2207 = vpop.f32.mrb[0].mxu0
  %v2208 = vadd.f32 0.0, %v2207
  %v2209 = vpop.f32.mrb[0].mxu0
  %2210 = vdwg.mxu0
  %v2211 = vadd.f32 %v1609, %v1957
  %v2212 = vadd.f32 %v1614, %v1962
  %v2213 = vadd.f32 %v1688, %v2039
  %v2214 = vadd.f32 %v1693, %v2044
  %v2215 = vadd.f32 %v1767, %v2121
  %v2216 = vadd.f32 %v1772, %v2126
  %v2217 = vadd.f32 %v1846, %v2203
  %v2218 = vadd.f32 %v1851, %v2208
  %v2219 = vld [vmem:[%s6] sm:$0x1]
  %v2221 = vlaneseq
  %v2222 = vshrl.u32 %v2221, 7
  %v2223 = vsub.s32 0, %v2222
  %v2224 = vrot.slane %v2219, %v2223
  %v2226 = vadd.f32 %v2211, %v2224
  %v2227 = vadd.f32 %v2212, %v2224
  %v2228 = vadd.f32 %v2213, %v2224
  %v2229 = vadd.f32 %v2214, %v2224
  %v2230 = vadd.f32 %v2215, %v2224
  %v2231 = vadd.f32 %v2216, %v2224
  %v2232 = vadd.f32 %v2217, %v2224
  %v2233 = vadd.f32 %v2218, %v2224
  %v2234 = vxor.u32 %v2226, 2147483648
  %v2235 = vxor.u32 %v2227, 2147483648
  %v2236 = vxor.u32 %v2228, 2147483648
  %v2237 = vxor.u32 %v2229, 2147483648
  %v2238 = vxor.u32 %v2230, 2147483648
  %v2239 = vxor.u32 %v2231, 2147483648
  %v2240 = vxor.u32 %v2232, 2147483648
  %v2241 = vxor.u32 %v2233, 2147483648
  %v2242 = vmul.f32 %v2234, 1.442695
  %v2243 = vpow.pop %v2242
  %v2244 = vmul.f32 %v2235, 1.442695
  %v2245 = vpow.pop %v2244
  %v2246 = vmul.f32 %v2236, 1.442695
  %v2247 = vpow.pop %v2246
  %v2248 = vmul.f32 %v2237, 1.442695
  %v2249 = vpow.pop %v2248
  %v2250 = vmul.f32 %v2238, 1.442695
  %v2251 = vpow.pop %v2250
  %v2252 = vmul.f32 %v2239, 1.442695
  %v2253 = vpow.pop %v2252
  %v2254 = vmul.f32 %v2240, 1.442695
  %v2255 = vpow.pop %v2254
  %v2256 = vmul.f32 %v2241, 1.442695
  %v2257 = vpow.pop %v2256
  %v2258 = vadd.f32 %v2243, 1.0
  %v2259 = vadd.f32 %v2245, 1.0
  %v2260 = vadd.f32 %v2247, 1.0
  %v2261 = vadd.f32 %v2249, 1.0
  %v2262 = vadd.f32 %v2251, 1.0
  %v2263 = vadd.f32 %v2253, 1.0
  %v2264 = vadd.f32 %v2255, 1.0
  %v2265 = vadd.f32 %v2257, 1.0
  %v2266 = vrcp.pop %v2258
  %v2267 = vmul.f32 1.0, %v2266
  %v2268 = vrcp.pop %v2259
  %v2269 = vmul.f32 1.0, %v2268
  %v2270 = vrcp.pop %v2260
  %v2271 = vmul.f32 1.0, %v2270
  %v2272 = vrcp.pop %v2261
  %v2273 = vmul.f32 1.0, %v2272
  %v2274 = vrcp.pop %v2262
  %v2275 = vmul.f32 1.0, %v2274
  %v2276 = vrcp.pop %v2263
  %v2277 = vmul.f32 1.0, %v2276
  %v2278 = vrcp.pop %v2264
  %v2279 = vmul.f32 1.0, %v2278
  %v2280 = vrcp.pop %v2265
  %v2281 = vmul.f32 1.0, %v2280
  %vm2290 = vcmask 1041408
  %v2291 = vrot.slane %v2267, 6
  %v2292 = vrot.slane %v2269, 6
  %v2293 = vsel %vm2290, %v2291, %v2292
  %v2294 = vrot.slane %v2271, 6
  %v2295 = vrot.slane %v2273, 6
  %v2296 = vsel %vm2290, %v2294, %v2295
  %v2297 = vrot.slane %v2275, 6
  %v2298 = vrot.slane %v2277, 6
  %v2299 = vsel %vm2290, %v2297, %v2298
  %v2300 = vrot.slane %v2279, 6
  %v2301 = vrot.slane %v2281, 6
  %v2302 = vsel %vm2290, %v2300, %v2301
  %v2311 = vsel %vm2290, 0.0, %v2291
  %v2312 = vsel %vm2290, 0.0, %v2294
  %v2313 = vsel %vm2290, 0.0, %v2297
  %v2314 = vsel %vm2290, 0.0, %v2300
  %v2315 = vsel %vm744, %v2293, 0.0
  %v2316 = vsel %vm744, %v2296, 0.0
  %v2317 = vsel %vm744, %v2299, 0.0
  %v2318 = vsel %vm744, %v2302, 0.0
  %v2319 = vld [vmem:[%s3] sm:$0xff]
  %v2320 = vld [vmem:[%s3 + $0x8] sm:$0xff]
  %v2321 = vld [vmem:[%s3 + $0x10] sm:$0xff]
  %v2322 = vld [vmem:[%s3 + $0x18] sm:$0xff]
  %v2323 = vld [vmem:[%s3 + $0x20] sm:$0xff]
  %v2324 = vld [vmem:[%s3 + $0x28] sm:$0xff]
  %v2325 = vld [vmem:[%s3 + $0x30] sm:$0xff]
  %v2326 = vld [vmem:[%s3 + $0x38] sm:$0xff]
  %v2327 = vld [vmem:[%s3 + $0x40] sm:$0xff]
  %v2328 = vld [vmem:[%s3 + $0x48] sm:$0xff]
  %v2329 = vld [vmem:[%s3 + $0x50] sm:$0xff]
  %v2330 = vld [vmem:[%s3 + $0x58] sm:$0xff]
  %v2331 = vld [vmem:[%s3 + $0x60] sm:$0xff]
  %v2332 = vld [vmem:[%s3 + $0x68] sm:$0xff]
  %v2333 = vld [vmem:[%s3 + $0x70] sm:$0xff]
  %v2334 = vld [vmem:[%s3 + $0x78] sm:$0xff]
  %v2335 = vld [vmem:[%s3 + $0x80] sm:$0xff]
  %v2336 = vld [vmem:[%s3 + $0x88] sm:$0xff]
  %v2337 = vld [vmem:[%s3 + $0x90] sm:$0xff]
  %v2338 = vld [vmem:[%s3 + $0x98] sm:$0xff]
  %v2339 = vld [vmem:[%s3 + $0xa0] sm:$0xff]
  %v2340 = vld [vmem:[%s3 + $0xa8] sm:$0xff]
  %v2341 = vld [vmem:[%s3 + $0xb0] sm:$0xff]
  %v2342 = vld [vmem:[%s3 + $0xb8] sm:$0xff]
  %v2343 = vld [vmem:[%s3 + $0xc0] sm:$0xff]
  %v2344 = vld [vmem:[%s3 + $0xc8] sm:$0xff]
  %v2345 = vld [vmem:[%s3 + $0xd0] sm:$0xff]
  %v2346 = vld [vmem:[%s3 + $0xd8] sm:$0xff]
  %v2347 = vld [vmem:[%s3 + $0xe0] sm:$0xff]
  %v2348 = vld [vmem:[%s3 + $0xe8] sm:$0xff]
  %v2349 = vld [vmem:[%s3 + $0xf0] sm:$0xff]
  %v2350 = vld [vmem:[%s3 + $0xf8] sm:$0xff]
  %v2351 = vld [vmem:[%s3 + $0x100] sm:$0xff]
  %v2352 = vld [vmem:[%s3 + $0x108] sm:$0xff]
  %v2353 = vld [vmem:[%s3 + $0x110] sm:$0xff]
  %v2354 = vld [vmem:[%s3 + $0x118] sm:$0xff]
  %v2355 = vld [vmem:[%s3 + $0x120] sm:$0xff]
  %v2356 = vld [vmem:[%s3 + $0x128] sm:$0xff]
  %v2357 = vld [vmem:[%s3 + $0x130] sm:$0xff]
  %v2358 = vld [vmem:[%s3 + $0x138] sm:$0xff]
  %v2359 = vld [vmem:[%s3 + $0x140] sm:$0xff]
  %v2360 = vld [vmem:[%s3 + $0x148] sm:$0xff]
  %v2361 = vld [vmem:[%s3 + $0x150] sm:$0xff]
  %v2362 = vld [vmem:[%s3 + $0x158] sm:$0xff]
  %v2363 = vld [vmem:[%s3 + $0x160] sm:$0xff]
  %v2364 = vld [vmem:[%s3 + $0x168] sm:$0xff]
  %v2365 = vld [vmem:[%s3 + $0x170] sm:$0xff]
  %v2366 = vld [vmem:[%s3 + $0x178] sm:$0xff]
  %s2367 = scalar_lea.vmem %s3, 384
  %v2368 = vld [vmem:[%s2367] sm:$0xff]
  %v2369 = vld [vmem:[%s2367 + $0x8] sm:$0xff]
  %v2370 = vld [vmem:[%s2367 + $0x10] sm:$0xff]
  %v2371 = vld [vmem:[%s2367 + $0x18] sm:$0xff]
  %v2372 = vld [vmem:[%s2367 + $0x20] sm:$0xff]
  %v2373 = vld [vmem:[%s2367 + $0x28] sm:$0xff]
  %v2374 = vld [vmem:[%s2367 + $0x30] sm:$0xff]
  %v2375 = vld [vmem:[%s2367 + $0x38] sm:$0xff]
  %v2376 = vld [vmem:[%s2367 + $0x40] sm:$0xff]
  %v2377 = vld [vmem:[%s2367 + $0x48] sm:$0xff]
  %v2378 = vld [vmem:[%s2367 + $0x50] sm:$0xff]
  %v2379 = vld [vmem:[%s2367 + $0x58] sm:$0xff]
  %v2380 = vld [vmem:[%s2367 + $0x60] sm:$0xff]
  %v2381 = vld [vmem:[%s2367 + $0x68] sm:$0xff]
  %v2382 = vld [vmem:[%s2367 + $0x70] sm:$0xff]
  %v2383 = vld [vmem:[%s2367 + $0x78] sm:$0xff]
  %v2384 = vld [vmem:[%s2367 + $0x80] sm:$0xff]
  %v2385 = vld [vmem:[%s2367 + $0x88] sm:$0xff]
  %v2386 = vld [vmem:[%s2367 + $0x90] sm:$0xff]
  %v2387 = vld [vmem:[%s2367 + $0x98] sm:$0xff]
  %v2388 = vld [vmem:[%s2367 + $0xa0] sm:$0xff]
  %v2389 = vld [vmem:[%s2367 + $0xa8] sm:$0xff]
  %v2390 = vld [vmem:[%s2367 + $0xb0] sm:$0xff]
  %v2391 = vld [vmem:[%s2367 + $0xb8] sm:$0xff]
  %v2392 = vld [vmem:[%s2367 + $0xc0] sm:$0xff]
  %v2393 = vld [vmem:[%s2367 + $0xc8] sm:$0xff]
  %v2394 = vld [vmem:[%s2367 + $0xd0] sm:$0xff]
  %v2395 = vld [vmem:[%s2367 + $0xd8] sm:$0xff]
  %v2396 = vld [vmem:[%s2367 + $0xe0] sm:$0xff]
  %v2397 = vld [vmem:[%s2367 + $0xe8] sm:$0xff]
  %v2398 = vld [vmem:[%s2367 + $0xf0] sm:$0xff]
  %v2399 = vld [vmem:[%s2367 + $0xf8] sm:$0xff]
  %v2400 = vld [vmem:[%s2367 + $0x100] sm:$0xff]
  %v2401 = vld [vmem:[%s2367 + $0x108] sm:$0xff]
  %v2402 = vld [vmem:[%s2367 + $0x110] sm:$0xff]
  %v2403 = vld [vmem:[%s2367 + $0x118] sm:$0xff]
  %v2404 = vld [vmem:[%s2367 + $0x120] sm:$0xff]
  %v2405 = vld [vmem:[%s2367 + $0x128] sm:$0xff]
  %v2406 = vld [vmem:[%s2367 + $0x130] sm:$0xff]
  %v2407 = vld [vmem:[%s2367 + $0x138] sm:$0xff]
  %v2408 = vld [vmem:[%s2367 + $0x140] sm:$0xff]
  %v2409 = vld [vmem:[%s2367 + $0x148] sm:$0xff]
  %v2410 = vld [vmem:[%s2367 + $0x150] sm:$0xff]
  %v2411 = vld [vmem:[%s2367 + $0x158] sm:$0xff]
  %v2412 = vld [vmem:[%s2367 + $0x160] sm:$0xff]
  %v2413 = vld [vmem:[%s2367 + $0x168] sm:$0xff]
  %v2414 = vld [vmem:[%s2367 + $0x170] sm:$0xff]
  %v2415 = vld [vmem:[%s2367 + $0x178] sm:$0xff]
  %v2418 = vrot.slane %v2311, 1
  %v2419 = vrot.slane %v2315, 1
  %v2420 = vsel %vm75, %v2418, %v2419
  %vm2421 = vcmask 785408
  %v2422 = vsel %vm2421, %v2420, 0
  %v2424 = vsel %vm2421, %v2419, 0
  %2426 = vmatprep.subr.mxu0 0.0
  %2427 = vmatpush1.msra.mxu0 %v2368
  %2428 = vmatprep.subr.mxu0 0.0
  %2429 = vmatpush1.msra.mxu0 %v2369
  %2430 = vmatprep.subr.mxu0 0.0
  %2431 = vmatpush1.msra.mxu0 %v2370
  %2432 = vmatprep.subr.mxu0 0.0
  %2433 = vmatpush1.msra.mxu0 %v2371
  %2434 = vmatprep.subr.mxu0 0.0
  %2435 = vmatpush1.msra.mxu0 %v2372
  %2436 = vmatprep.subr.mxu0 0.0
  %2437 = vmatpush1.msra.mxu0 %v2373
  %2438 = vmatprep.subr.mxu0 0.0
  %2439 = vmatpush1.msra.mxu0 %v2374
  %2440 = vmatprep.subr.mxu0 0.0
  %2441 = vmatpush1.msra.mxu0 %v2375
  %2442 = vmatprep.subr.mxu0 0.0
  %2443 = vmatpush1.msra.mxu0 %v2376
  %2444 = vmatprep.subr.mxu0 0.0
  %2445 = vmatpush1.msra.mxu0 %v2377
  %2446 = vmatprep.subr.mxu0 0.0
  %2447 = vmatpush1.msra.mxu0 %v2378
  %2448 = vmatprep.subr.mxu0 0.0
  %2449 = vmatpush1.msra.mxu0 %v2379
  %2450 = vmatprep.subr.mxu0 0.0
  %2451 = vmatpush1.msra.mxu0 0.0
  %2452 = vmatprep.subr.mxu0 0.0
  %2453 = vmatpush1.msra.mxu0 0.0
  %2454 = vmatprep.subr.mxu0 0.0
  %2455 = vmatpush1.msra.mxu0 0.0
  %2456 = vmatprep.subr.mxu0 0.0
  %2457 = vmatpush1.msra.mxu0 0.0
  %2458 = vmatprep.subr.mxu0 0.0
  %2459 = vmatpush1.msra.mxu0 0.0
  %2460 = vmatprep.subr.mxu0 0.0
  %2461 = vmatpush1.msra.mxu0 0.0
  %2462 = vmatprep.subr.mxu0 0.0
  %2463 = vmatpush1.msra.mxu0 0.0
  %2464 = vmatprep.subr.mxu0 0.0
  %2465 = vmatpush1.msra.mxu0 0.0
  %2466 = vmatprep.subr.mxu0 0.0
  %2467 = vmatpush1.msra.mxu0 0.0
  %2468 = vmatprep.subr.mxu0 0.0
  %2469 = vmatpush1.msra.mxu0 0.0
  %2470 = vmatprep.subr.mxu0 0.0
  %2471 = vmatpush1.msra.mxu0 0.0
  %2472 = vmatprep.subr.mxu0 0.0
  %2473 = vmatpush1.msra.mxu0 0.0
  %2474 = vmatprep.subr.mxu0 0.0
  %2475 = vmatpush1.msra.mxu0 0.0
  %2476 = vmatprep.subr.mxu0 0.0
  %2477 = vmatpush1.msra.mxu0 0.0
  %2478 = vmatprep.subr.mxu0 0.0
  %2479 = vmatpush1.msra.mxu0 0.0
  %2480 = vmatprep.subr.mxu0 0.0
  %2481 = vmatpush1.msra.mxu0 0.0
  %2482 = vmatprep.subr.mxu0 0.0
  %2483 = vmatpush1.msra.mxu0 0.0
  %2484 = vmatprep.subr.mxu0 0.0
  %2485 = vmatpush1.msra.mxu0 0.0
  %2486 = vmatprep.subr.mxu0 0.0
  %2487 = vmatpush1.msra.mxu0 0.0
  %2488 = vmatprep.subr.mxu0 0.0
  %2489 = vmatpush1.msra.mxu0 0.0
  %2490 = vmatprep.mubr.f32.mxu0 0.0
  %2491 = vmatmul.mubr.f32.gmra.mrb[0].mxu0 %v2422
  %v2492 = vpop.f32.mrb[0].mxu0
  %v2493 = vadd.f32 0.0, %v2492
  %v2494 = vpop.f32.mrb[0].mxu0
  %2495 = vmatprep.mubr.f32.mxu0 0.0
  %2496 = vmatmul.mubr.f32.gmra.mrb[0].mxu0 %v2424
  %v2497 = vpop.f32.mrb[0].mxu0
  %v2498 = vadd.f32 0.0, %v2497
  %v2499 = vpop.f32.mrb[0].mxu0
  %2500 = vdwg.mxu0
  %v2503 = vrot.slane %v2312, 1
  %v2504 = vrot.slane %v2316, 1
  %v2505 = vsel %vm75, %v2503, %v2504
  %v2506 = vsel %vm2421, %v2505, 0
  %v2508 = vsel %vm2421, %v2504, 0
  %2510 = vmatprep.subr.mxu0 0.0
  %2511 = vmatpush1.msra.mxu0 %v2380
  %2512 = vmatprep.subr.mxu0 0.0
  %2513 = vmatpush1.msra.mxu0 %v2381
  %2514 = vmatprep.subr.mxu0 0.0
  %2515 = vmatpush1.msra.mxu0 %v2382
  %2516 = vmatprep.subr.mxu0 0.0
  %2517 = vmatpush1.msra.mxu0 %v2383
  %2518 = vmatprep.subr.mxu0 0.0
  %2519 = vmatpush1.msra.mxu0 %v2384
  %2520 = vmatprep.subr.mxu0 0.0
  %2521 = vmatpush1.msra.mxu0 %v2385
  %2522 = vmatprep.subr.mxu0 0.0
  %2523 = vmatpush1.msra.mxu0 %v2386
  %2524 = vmatprep.subr.mxu0 0.0
  %2525 = vmatpush1.msra.mxu0 %v2387
  %2526 = vmatprep.subr.mxu0 0.0
  %2527 = vmatpush1.msra.mxu0 %v2388
  %2528 = vmatprep.subr.mxu0 0.0
  %2529 = vmatpush1.msra.mxu0 %v2389
  %2530 = vmatprep.subr.mxu0 0.0
  %2531 = vmatpush1.msra.mxu0 %v2390
  %2532 = vmatprep.subr.mxu0 0.0
  %2533 = vmatpush1.msra.mxu0 %v2391
  %2534 = vmatprep.subr.mxu0 0.0
  %2535 = vmatpush1.msra.mxu0 0.0
  %2536 = vmatprep.subr.mxu0 0.0
  %2537 = vmatpush1.msra.mxu0 0.0
  %2538 = vmatprep.subr.mxu0 0.0
  %2539 = vmatpush1.msra.mxu0 0.0
  %2540 = vmatprep.subr.mxu0 0.0
  %2541 = vmatpush1.msra.mxu0 0.0
  %2542 = vmatprep.subr.mxu0 0.0
  %2543 = vmatpush1.msra.mxu0 0.0
  %2544 = vmatprep.subr.mxu0 0.0
  %2545 = vmatpush1.msra.mxu0 0.0
  %2546 = vmatprep.subr.mxu0 0.0
  %2547 = vmatpush1.msra.mxu0 0.0
  %2548 = vmatprep.subr.mxu0 0.0
  %2549 = vmatpush1.msra.mxu0 0.0
  %2550 = vmatprep.subr.mxu0 0.0
  %2551 = vmatpush1.msra.mxu0 0.0
  %2552 = vmatprep.subr.mxu0 0.0
  %2553 = vmatpush1.msra.mxu0 0.0
  %2554 = vmatprep.subr.mxu0 0.0
  %2555 = vmatpush1.msra.mxu0 0.0
  %2556 = vmatprep.subr.mxu0 0.0
  %2557 = vmatpush1.msra.mxu0 0.0
  %2558 = vmatprep.subr.mxu0 0.0
  %2559 = vmatpush1.msra.mxu0 0.0
  %2560 = vmatprep.subr.mxu0 0.0
  %2561 = vmatpush1.msra.mxu0 0.0
  %2562 = vmatprep.subr.mxu0 0.0
  %2563 = vmatpush1.msra.mxu0 0.0
  %2564 = vmatprep.subr.mxu0 0.0
  %2565 = vmatpush1.msra.mxu0 0.0
  %2566 = vmatprep.subr.mxu0 0.0
  %2567 = vmatpush1.msra.mxu0 0.0
  %2568 = vmatprep.subr.mxu0 0.0
  %2569 = vmatpush1.msra.mxu0 0.0
  %2570 = vmatprep.subr.mxu0 0.0
  %2571 = vmatpush1.msra.mxu0 0.0
  %2572 = vmatprep.subr.mxu0 0.0
  %2573 = vmatpush1.msra.mxu0 0.0
  %2574 = vmatprep.mubr.f32.mxu0 0.0
  %2575 = vmatmul.mubr.f32.gmra.mrb[0].mxu0 %v2506
  %v2576 = vpop.f32.mrb[0].mxu0
  %v2577 = vadd.f32 0.0, %v2576
  %v2578 = vpop.f32.mrb[0].mxu0
  %2579 = vmatprep.mubr.f32.mxu0 0.0
  %2580 = vmatmul.mubr.f32.gmra.mrb[0].mxu0 %v2508
  %v2581 = vpop.f32.mrb[0].mxu0
  %v2582 = vadd.f32 0.0, %v2581
  %v2583 = vpop.f32.mrb[0].mxu0
  %2584 = vdwg.mxu0
  %v2587 = vrot.slane %v2313, 1
  %v2588 = vrot.slane %v2317, 1
  %v2589 = vsel %vm75, %v2587, %v2588
  %v2590 = vsel %vm2421, %v2589, 0
  %v2592 = vsel %vm2421, %v2588, 0
  %2594 = vmatprep.subr.mxu0 0.0
  %2595 = vmatpush1.msra.mxu0 %v2392
  %2596 = vmatprep.subr.mxu0 0.0
  %2597 = vmatpush1.msra.mxu0 %v2393
  %2598 = vmatprep.subr.mxu0 0.0
  %2599 = vmatpush1.msra.mxu0 %v2394
  %2600 = vmatprep.subr.mxu0 0.0
  %2601 = vmatpush1.msra.mxu0 %v2395
  %2602 = vmatprep.subr.mxu0 0.0
  %2603 = vmatpush1.msra.mxu0 %v2396
  %2604 = vmatprep.subr.mxu0 0.0
  %2605 = vmatpush1.msra.mxu0 %v2397
  %2606 = vmatprep.subr.mxu0 0.0
  %2607 = vmatpush1.msra.mxu0 %v2398
  %2608 = vmatprep.subr.mxu0 0.0
  %2609 = vmatpush1.msra.mxu0 %v2399
  %2610 = vmatprep.subr.mxu0 0.0
  %2611 = vmatpush1.msra.mxu0 %v2400
  %2612 = vmatprep.subr.mxu0 0.0
  %2613 = vmatpush1.msra.mxu0 %v2401
  %2614 = vmatprep.subr.mxu0 0.0
  %2615 = vmatpush1.msra.mxu0 %v2402
  %2616 = vmatprep.subr.mxu0 0.0
  %2617 = vmatpush1.msra.mxu0 %v2403
  %2618 = vmatprep.subr.mxu0 0.0
  %2619 = vmatpush1.msra.mxu0 0.0
  %2620 = vmatprep.subr.mxu0 0.0
  %2621 = vmatpush1.msra.mxu0 0.0
  %2622 = vmatprep.subr.mxu0 0.0
  %2623 = vmatpush1.msra.mxu0 0.0
  %2624 = vmatprep.subr.mxu0 0.0
  %2625 = vmatpush1.msra.mxu0 0.0
  %2626 = vmatprep.subr.mxu0 0.0
  %2627 = vmatpush1.msra.mxu0 0.0
  %2628 = vmatprep.subr.mxu0 0.0
  %2629 = vmatpush1.msra.mxu0 0.0
  %2630 = vmatprep.subr.mxu0 0.0
  %2631 = vmatpush1.msra.mxu0 0.0
  %2632 = vmatprep.subr.mxu0 0.0
  %2633 = vmatpush1.msra.mxu0 0.0
  %2634 = vmatprep.subr.mxu0 0.0
  %2635 = vmatpush1.msra.mxu0 0.0
  %2636 = vmatprep.subr.mxu0 0.0
  %2637 = vmatpush1.msra.mxu0 0.0
  %2638 = vmatprep.subr.mxu0 0.0
  %2639 = vmatpush1.msra.mxu0 0.0
  %2640 = vmatprep.subr.mxu0 0.0
  %2641 = vmatpush1.msra.mxu0 0.0
  %2642 = vmatprep.subr.mxu0 0.0
  %2643 = vmatpush1.msra.mxu0 0.0
  %2644 = vmatprep.subr.mxu0 0.0
  %2645 = vmatpush1.msra.mxu0 0.0
  %2646 = vmatprep.subr.mxu0 0.0
  %2647 = vmatpush1.msra.mxu0 0.0
  %2648 = vmatprep.subr.mxu0 0.0
  %2649 = vmatpush1.msra.mxu0 0.0
  %2650 = vmatprep.subr.mxu0 0.0
  %2651 = vmatpush1.msra.mxu0 0.0
  %2652 = vmatprep.subr.mxu0 0.0
  %2653 = vmatpush1.msra.mxu0 0.0
  %2654 = vmatprep.subr.mxu0 0.0
  %2655 = vmatpush1.msra.mxu0 0.0
  %2656 = vmatprep.subr.mxu0 0.0
  %2657 = vmatpush1.msra.mxu0 0.0
  %2658 = vmatprep.mubr.f32.mxu0 0.0
  %2659 = vmatmul.mubr.f32.gmra.mrb[0].mxu0 %v2590
  %v2660 = vpop.f32.mrb[0].mxu0
  %v2661 = vadd.f32 0.0, %v2660
  %v2662 = vpop.f32.mrb[0].mxu0
  %2663 = vmatprep.mubr.f32.mxu0 0.0
  %2664 = vmatmul.mubr.f32.gmra.mrb[0].mxu0 %v2592
  %v2665 = vpop.f32.mrb[0].mxu0
  %v2666 = vadd.f32 0.0, %v2665
  %v2667 = vpop.f32.mrb[0].mxu0
  %2668 = vdwg.mxu0
  %v2671 = vrot.slane %v2314, 1
  %v2672 = vrot.slane %v2318, 1
  %v2673 = vsel %vm75, %v2671, %v2672
  %v2674 = vsel %vm2421, %v2673, 0
  %v2676 = vsel %vm2421, %v2672, 0
  %2678 = vmatprep.subr.mxu0 0.0
  %2679 = vmatpush1.msra.mxu0 %v2404
  %2680 = vmatprep.subr.mxu0 0.0
  %2681 = vmatpush1.msra.mxu0 %v2405
  %2682 = vmatprep.subr.mxu0 0.0
  %2683 = vmatpush1.msra.mxu0 %v2406
  %2684 = vmatprep.subr.mxu0 0.0
  %2685 = vmatpush1.msra.mxu0 %v2407
  %2686 = vmatprep.subr.mxu0 0.0
  %2687 = vmatpush1.msra.mxu0 %v2408
  %2688 = vmatprep.subr.mxu0 0.0
  %2689 = vmatpush1.msra.mxu0 %v2409
  %2690 = vmatprep.subr.mxu0 0.0
  %2691 = vmatpush1.msra.mxu0 %v2410
  %2692 = vmatprep.subr.mxu0 0.0
  %2693 = vmatpush1.msra.mxu0 %v2411
  %2694 = vmatprep.subr.mxu0 0.0
  %2695 = vmatpush1.msra.mxu0 %v2412
  %2696 = vmatprep.subr.mxu0 0.0
  %2697 = vmatpush1.msra.mxu0 %v2413
  %2698 = vmatprep.subr.mxu0 0.0
  %2699 = vmatpush1.msra.mxu0 %v2414
  %2700 = vmatprep.subr.mxu0 0.0
  %2701 = vmatpush1.msra.mxu0 %v2415
  %2702 = vmatprep.subr.mxu0 0.0
  %2703 = vmatpush1.msra.mxu0 0.0
  %2704 = vmatprep.subr.mxu0 0.0
  %2705 = vmatpush1.msra.mxu0 0.0
  %2706 = vmatprep.subr.mxu0 0.0
  %2707 = vmatpush1.msra.mxu0 0.0
  %2708 = vmatprep.subr.mxu0 0.0
  %2709 = vmatpush1.msra.mxu0 0.0
  %2710 = vmatprep.subr.mxu0 0.0
  %2711 = vmatpush1.msra.mxu0 0.0
  %2712 = vmatprep.subr.mxu0 0.0
  %2713 = vmatpush1.msra.mxu0 0.0
  %2714 = vmatprep.subr.mxu0 0.0
  %2715 = vmatpush1.msra.mxu0 0.0
  %2716 = vmatprep.subr.mxu0 0.0
  %2717 = vmatpush1.msra.mxu0 0.0
  %2718 = vmatprep.subr.mxu0 0.0
  %2719 = vmatpush1.msra.mxu0 0.0
  %2720 = vmatprep.subr.mxu0 0.0
  %2721 = vmatpush1.msra.mxu0 0.0
  %2722 = vmatprep.subr.mxu0 0.0
  %2723 = vmatpush1.msra.mxu0 0.0
  %2724 = vmatprep.subr.mxu0 0.0
  %2725 = vmatpush1.msra.mxu0 0.0
  %2726 = vmatprep.subr.mxu0 0.0
  %2727 = vmatpush1.msra.mxu0 0.0
  %2728 = vmatprep.subr.mxu0 0.0
  %2729 = vmatpush1.msra.mxu0 0.0
  %2730 = vmatprep.subr.mxu0 0.0
  %2731 = vmatpush1.msra.mxu0 0.0
  %2732 = vmatprep.subr.mxu0 0.0
  %2733 = vmatpush1.msra.mxu0 0.0
  %2734 = vmatprep.subr.mxu0 0.0
  %2735 = vmatpush1.msra.mxu0 0.0
  %2736 = vmatprep.subr.mxu0 0.0
  %2737 = vmatpush1.msra.mxu0 0.0
  %2738 = vmatprep.subr.mxu0 0.0
  %2739 = vmatpush1.msra.mxu0 0.0
  %2740 = vmatprep.subr.mxu0 0.0
  %2741 = vmatpush1.msra.mxu0 0.0
  %2742 = vmatprep.mubr.f32.mxu0 0.0
  %2743 = vmatmul.mubr.f32.gmra.mrb[0].mxu0 %v2674
  %v2744 = vpop.f32.mrb[0].mxu0
  %v2745 = vadd.f32 0.0, %v2744
  %v2746 = vpop.f32.mrb[0].mxu0
  %2747 = vmatprep.mubr.f32.mxu0 0.0
  %2748 = vmatmul.mubr.f32.gmra.mrb[0].mxu0 %v2676
  %v2749 = vpop.f32.mrb[0].mxu0
  %v2750 = vadd.f32 0.0, %v2749
  %v2751 = vpop.f32.mrb[0].mxu0
  %2752 = vdwg.mxu0
  %v2753 = vsel %vm2421, %v2311, 0
  %v2755 = vsel %vm2421, %v2315, 0
  %2757 = vmatprep.subr.mxu0 0.0
  %2758 = vmatpush1.msra.mxu0 %v2319
  %2759 = vmatprep.subr.mxu0 0.0
  %2760 = vmatpush1.msra.mxu0 %v2320
  %2761 = vmatprep.subr.mxu0 0.0
  %2762 = vmatpush1.msra.mxu0 %v2321
  %2763 = vmatprep.subr.mxu0 0.0
  %2764 = vmatpush1.msra.mxu0 %v2322
  %2765 = vmatprep.subr.mxu0 0.0
  %2766 = vmatpush1.msra.mxu0 %v2323
  %2767 = vmatprep.subr.mxu0 0.0
  %2768 = vmatpush1.msra.mxu0 %v2324
  %2769 = vmatprep.subr.mxu0 0.0
  %2770 = vmatpush1.msra.mxu0 %v2325
  %2771 = vmatprep.subr.mxu0 0.0
  %2772 = vmatpush1.msra.mxu0 %v2326
  %2773 = vmatprep.subr.mxu0 0.0
  %2774 = vmatpush1.msra.mxu0 %v2327
  %2775 = vmatprep.subr.mxu0 0.0
  %2776 = vmatpush1.msra.mxu0 %v2328
  %2777 = vmatprep.subr.mxu0 0.0
  %2778 = vmatpush1.msra.mxu0 %v2329
  %2779 = vmatprep.subr.mxu0 0.0
  %2780 = vmatpush1.msra.mxu0 %v2330
  %2781 = vmatprep.subr.mxu0 0.0
  %2782 = vmatpush1.msra.mxu0 0.0
  %2783 = vmatprep.subr.mxu0 0.0
  %2784 = vmatpush1.msra.mxu0 0.0
  %2785 = vmatprep.subr.mxu0 0.0
  %2786 = vmatpush1.msra.mxu0 0.0
  %2787 = vmatprep.subr.mxu0 0.0
  %2788 = vmatpush1.msra.mxu0 0.0
  %2789 = vmatprep.subr.mxu0 0.0
  %2790 = vmatpush1.msra.mxu0 0.0
  %2791 = vmatprep.subr.mxu0 0.0
  %2792 = vmatpush1.msra.mxu0 0.0
  %2793 = vmatprep.subr.mxu0 0.0
  %2794 = vmatpush1.msra.mxu0 0.0
  %2795 = vmatprep.subr.mxu0 0.0
  %2796 = vmatpush1.msra.mxu0 0.0
  %2797 = vmatprep.subr.mxu0 0.0
  %2798 = vmatpush1.msra.mxu0 0.0
  %2799 = vmatprep.subr.mxu0 0.0
  %2800 = vmatpush1.msra.mxu0 0.0
  %2801 = vmatprep.subr.mxu0 0.0
  %2802 = vmatpush1.msra.mxu0 0.0
  %2803 = vmatprep.subr.mxu0 0.0
  %2804 = vmatpush1.msra.mxu0 0.0
  %2805 = vmatprep.subr.mxu0 0.0
  %2806 = vmatpush1.msra.mxu0 0.0
  %2807 = vmatprep.subr.mxu0 0.0
  %2808 = vmatpush1.msra.mxu0 0.0
  %2809 = vmatprep.subr.mxu0 0.0
  %2810 = vmatpush1.msra.mxu0 0.0
  %2811 = vmatprep.subr.mxu0 0.0
  %2812 = vmatpush1.msra.mxu0 0.0
  %2813 = vmatprep.subr.mxu0 0.0
  %2814 = vmatpush1.msra.mxu0 0.0
  %2815 = vmatprep.subr.mxu0 0.0
  %2816 = vmatpush1.msra.mxu0 0.0
  %2817 = vmatprep.subr.mxu0 0.0
  %2818 = vmatpush1.msra.mxu0 0.0
  %2819 = vmatprep.subr.mxu0 0.0
  %2820 = vmatpush1.msra.mxu0 0.0
  %2821 = vmatprep.mubr.f32.mxu0 0.0
  %2822 = vmatmul.mubr.f32.gmra.mrb[0].mxu0 %v2753
  %v2823 = vpop.f32.mrb[0].mxu0
  %v2824 = vadd.f32 %v2493, %v2823
  %v2825 = vpop.f32.mrb[0].mxu0
  %2826 = vmatprep.mubr.f32.mxu0 0.0
  %2827 = vmatmul.mubr.f32.gmra.mrb[0].mxu0 %v2755
  %v2828 = vpop.f32.mrb[0].mxu0
  %v2829 = vadd.f32 %v2498, %v2828
  %v2830 = vpop.f32.mrb[0].mxu0
  %2831 = vdwg.mxu0
  %v2832 = vsel %vm2421, %v2312, 0
  %v2834 = vsel %vm2421, %v2316, 0
  %2836 = vmatprep.subr.mxu0 0.0
  %2837 = vmatpush1.msra.mxu0 %v2331
  %2838 = vmatprep.subr.mxu0 0.0
  %2839 = vmatpush1.msra.mxu0 %v2332
  %2840 = vmatprep.subr.mxu0 0.0
  %2841 = vmatpush1.msra.mxu0 %v2333
  %2842 = vmatprep.subr.mxu0 0.0
  %2843 = vmatpush1.msra.mxu0 %v2334
  %2844 = vmatprep.subr.mxu0 0.0
  %2845 = vmatpush1.msra.mxu0 %v2335
  %2846 = vmatprep.subr.mxu0 0.0
  %2847 = vmatpush1.msra.mxu0 %v2336
  %2848 = vmatprep.subr.mxu0 0.0
  %2849 = vmatpush1.msra.mxu0 %v2337
  %2850 = vmatprep.subr.mxu0 0.0
  %2851 = vmatpush1.msra.mxu0 %v2338
  %2852 = vmatprep.subr.mxu0 0.0
  %2853 = vmatpush1.msra.mxu0 %v2339
  %2854 = vmatprep.subr.mxu0 0.0
  %2855 = vmatpush1.msra.mxu0 %v2340
  %2856 = vmatprep.subr.mxu0 0.0
  %2857 = vmatpush1.msra.mxu0 %v2341
  %2858 = vmatprep.subr.mxu0 0.0
  %2859 = vmatpush1.msra.mxu0 %v2342
  %2860 = vmatprep.subr.mxu0 0.0
  %2861 = vmatpush1.msra.mxu0 0.0
  %2862 = vmatprep.subr.mxu0 0.0
  %2863 = vmatpush1.msra.mxu0 0.0
  %2864 = vmatprep.subr.mxu0 0.0
  %2865 = vmatpush1.msra.mxu0 0.0
  %2866 = vmatprep.subr.mxu0 0.0
  %2867 = vmatpush1.msra.mxu0 0.0
  %2868 = vmatprep.subr.mxu0 0.0
  %2869 = vmatpush1.msra.mxu0 0.0
  %2870 = vmatprep.subr.mxu0 0.0
  %2871 = vmatpush1.msra.mxu0 0.0
  %2872 = vmatprep.subr.mxu0 0.0
  %2873 = vmatpush1.msra.mxu0 0.0
  %2874 = vmatprep.subr.mxu0 0.0
  %2875 = vmatpush1.msra.mxu0 0.0
  %2876 = vmatprep.subr.mxu0 0.0
  %2877 = vmatpush1.msra.mxu0 0.0
  %2878 = vmatprep.subr.mxu0 0.0
  %2879 = vmatpush1.msra.mxu0 0.0
  %2880 = vmatprep.subr.mxu0 0.0
  %2881 = vmatpush1.msra.mxu0 0.0
  %2882 = vmatprep.subr.mxu0 0.0
  %2883 = vmatpush1.msra.mxu0 0.0
  %2884 = vmatprep.subr.mxu0 0.0
  %2885 = vmatpush1.msra.mxu0 0.0
  %2886 = vmatprep.subr.mxu0 0.0
  %2887 = vmatpush1.msra.mxu0 0.0
  %2888 = vmatprep.subr.mxu0 0.0
  %2889 = vmatpush1.msra.mxu0 0.0
  %2890 = vmatprep.subr.mxu0 0.0
  %2891 = vmatpush1.msra.mxu0 0.0
  %2892 = vmatprep.subr.mxu0 0.0
  %2893 = vmatpush1.msra.mxu0 0.0
  %2894 = vmatprep.subr.mxu0 0.0
  %2895 = vmatpush1.msra.mxu0 0.0
  %2896 = vmatprep.subr.mxu0 0.0
  %2897 = vmatpush1.msra.mxu0 0.0
  %2898 = vmatprep.subr.mxu0 0.0
  %2899 = vmatpush1.msra.mxu0 0.0
  %2900 = vmatprep.mubr.f32.mxu0 0.0
  %2901 = vmatmul.mubr.f32.gmra.mrb[0].mxu0 %v2832
  %v2902 = vpop.f32.mrb[0].mxu0
  %v2903 = vadd.f32 %v2577, %v2902
  %v2904 = vpop.f32.mrb[0].mxu0
  %2905 = vmatprep.mubr.f32.mxu0 0.0
  %2906 = vmatmul.mubr.f32.gmra.mrb[0].mxu0 %v2834
  %v2907 = vpop.f32.mrb[0].mxu0
  %v2908 = vadd.f32 %v2582, %v2907
  %v2909 = vpop.f32.mrb[0].mxu0
  %2910 = vdwg.mxu0
  %v2911 = vsel %vm2421, %v2313, 0
  %v2913 = vsel %vm2421, %v2317, 0
  %2915 = vmatprep.subr.mxu0 0.0
  %2916 = vmatpush1.msra.mxu0 %v2343
  %2917 = vmatprep.subr.mxu0 0.0
  %2918 = vmatpush1.msra.mxu0 %v2344
  %2919 = vmatprep.subr.mxu0 0.0
  %2920 = vmatpush1.msra.mxu0 %v2345
  %2921 = vmatprep.subr.mxu0 0.0
  %2922 = vmatpush1.msra.mxu0 %v2346
  %2923 = vmatprep.subr.mxu0 0.0
  %2924 = vmatpush1.msra.mxu0 %v2347
  %2925 = vmatprep.subr.mxu0 0.0
  %2926 = vmatpush1.msra.mxu0 %v2348
  %2927 = vmatprep.subr.mxu0 0.0
  %2928 = vmatpush1.msra.mxu0 %v2349
  %2929 = vmatprep.subr.mxu0 0.0
  %2930 = vmatpush1.msra.mxu0 %v2350
  %2931 = vmatprep.subr.mxu0 0.0
  %2932 = vmatpush1.msra.mxu0 %v2351
  %2933 = vmatprep.subr.mxu0 0.0
  %2934 = vmatpush1.msra.mxu0 %v2352
  %2935 = vmatprep.subr.mxu0 0.0
  %2936 = vmatpush1.msra.mxu0 %v2353
  %2937 = vmatprep.subr.mxu0 0.0
  %2938 = vmatpush1.msra.mxu0 %v2354
  %2939 = vmatprep.subr.mxu0 0.0
  %2940 = vmatpush1.msra.mxu0 0.0
  %2941 = vmatprep.subr.mxu0 0.0
  %2942 = vmatpush1.msra.mxu0 0.0
  %2943 = vmatprep.subr.mxu0 0.0
  %2944 = vmatpush1.msra.mxu0 0.0
  %2945 = vmatprep.subr.mxu0 0.0
  %2946 = vmatpush1.msra.mxu0 0.0
  %2947 = vmatprep.subr.mxu0 0.0
  %2948 = vmatpush1.msra.mxu0 0.0
  %2949 = vmatprep.subr.mxu0 0.0
  %2950 = vmatpush1.msra.mxu0 0.0
  %2951 = vmatprep.subr.mxu0 0.0
  %2952 = vmatpush1.msra.mxu0 0.0
  %2953 = vmatprep.subr.mxu0 0.0
  %2954 = vmatpush1.msra.mxu0 0.0
  %2955 = vmatprep.subr.mxu0 0.0
  %2956 = vmatpush1.msra.mxu0 0.0
  %2957 = vmatprep.subr.mxu0 0.0
  %2958 = vmatpush1.msra.mxu0 0.0
  %2959 = vmatprep.subr.mxu0 0.0
  %2960 = vmatpush1.msra.mxu0 0.0
  %2961 = vmatprep.subr.mxu0 0.0
  %2962 = vmatpush1.msra.mxu0 0.0
  %2963 = vmatprep.subr.mxu0 0.0
  %2964 = vmatpush1.msra.mxu0 0.0
  %2965 = vmatprep.subr.mxu0 0.0
  %2966 = vmatpush1.msra.mxu0 0.0
  %2967 = vmatprep.subr.mxu0 0.0
  %2968 = vmatpush1.msra.mxu0 0.0
  %2969 = vmatprep.subr.mxu0 0.0
  %2970 = vmatpush1.msra.mxu0 0.0
  %2971 = vmatprep.subr.mxu0 0.0
  %2972 = vmatpush1.msra.mxu0 0.0
  %2973 = vmatprep.subr.mxu0 0.0
  %2974 = vmatpush1.msra.mxu0 0.0
  %2975 = vmatprep.subr.mxu0 0.0
  %2976 = vmatpush1.msra.mxu0 0.0
  %2977 = vmatprep.subr.mxu0 0.0
  %2978 = vmatpush1.msra.mxu0 0.0
  %2979 = vmatprep.mubr.f32.mxu0 0.0
  %2980 = vmatmul.mubr.f32.gmra.mrb[0].mxu0 %v2911
  %v2981 = vpop.f32.mrb[0].mxu0
  %v2982 = vadd.f32 %v2661, %v2981
  %v2983 = vpop.f32.mrb[0].mxu0
  %2984 = vmatprep.mubr.f32.mxu0 0.0
  %2985 = vmatmul.mubr.f32.gmra.mrb[0].mxu0 %v2913
  %v2986 = vpop.f32.mrb[0].mxu0
  %v2987 = vadd.f32 %v2666, %v2986
  %v2988 = vpop.f32.mrb[0].mxu0
  %2989 = vdwg.mxu0
  %v2990 = vsel %vm2421, %v2314, 0
  %v2992 = vsel %vm2421, %v2318, 0
  %2994 = vmatprep.subr.mxu0 0.0
  %2995 = vmatpush1.msra.mxu0 %v2355
  %2996 = vmatprep.subr.mxu0 0.0
  %2997 = vmatpush1.msra.mxu0 %v2356
  %2998 = vmatprep.subr.mxu0 0.0
  %2999 = vmatpush1.msra.mxu0 %v2357
  %3000 = vmatprep.subr.mxu0 0.0
  %3001 = vmatpush1.msra.mxu0 %v2358
  %3002 = vmatprep.subr.mxu0 0.0
  %3003 = vmatpush1.msra.mxu0 %v2359
  %3004 = vmatprep.subr.mxu0 0.0
  %3005 = vmatpush1.msra.mxu0 %v2360
  %3006 = vmatprep.subr.mxu0 0.0
  %3007 = vmatpush1.msra.mxu0 %v2361
  %3008 = vmatprep.subr.mxu0 0.0
  %3009 = vmatpush1.msra.mxu0 %v2362
  %3010 = vmatprep.subr.mxu0 0.0
  %3011 = vmatpush1.msra.mxu0 %v2363
  %3012 = vmatprep.subr.mxu0 0.0
  %3013 = vmatpush1.msra.mxu0 %v2364
  %3014 = vmatprep.subr.mxu0 0.0
  %3015 = vmatpush1.msra.mxu0 %v2365
  %3016 = vmatprep.subr.mxu0 0.0
  %3017 = vmatpush1.msra.mxu0 %v2366
  %3018 = vmatprep.subr.mxu0 0.0
  %3019 = vmatpush1.msra.mxu0 0.0
  %3020 = vmatprep.subr.mxu0 0.0
  %3021 = vmatpush1.msra.mxu0 0.0
  %3022 = vmatprep.subr.mxu0 0.0
  %3023 = vmatpush1.msra.mxu0 0.0
  %3024 = vmatprep.subr.mxu0 0.0
  %3025 = vmatpush1.msra.mxu0 0.0
  %3026 = vmatprep.subr.mxu0 0.0
  %3027 = vmatpush1.msra.mxu0 0.0
  %3028 = vmatprep.subr.mxu0 0.0
  %3029 = vmatpush1.msra.mxu0 0.0
  %3030 = vmatprep.subr.mxu0 0.0
  %3031 = vmatpush1.msra.mxu0 0.0
  %3032 = vmatprep.subr.mxu0 0.0
  %3033 = vmatpush1.msra.mxu0 0.0
  %3034 = vmatprep.subr.mxu0 0.0
  %3035 = vmatpush1.msra.mxu0 0.0
  %3036 = vmatprep.subr.mxu0 0.0
  %3037 = vmatpush1.msra.mxu0 0.0
  %3038 = vmatprep.subr.mxu0 0.0
  %3039 = vmatpush1.msra.mxu0 0.0
  %3040 = vmatprep.subr.mxu0 0.0
  %3041 = vmatpush1.msra.mxu0 0.0
  %3042 = vmatprep.subr.mxu0 0.0
  %3043 = vmatpush1.msra.mxu0 0.0
  %3044 = vmatprep.subr.mxu0 0.0
  %3045 = vmatpush1.msra.mxu0 0.0
  %3046 = vmatprep.subr.mxu0 0.0
  %3047 = vmatpush1.msra.mxu0 0.0
  %3048 = vmatprep.subr.mxu0 0.0
  %3049 = vmatpush1.msra.mxu0 0.0
  %3050 = vmatprep.subr.mxu0 0.0
  %3051 = vmatpush1.msra.mxu0 0.0
  %3052 = vmatprep.subr.mxu0 0.0
  %3053 = vmatpush1.msra.mxu0 0.0
  %3054 = vmatprep.subr.mxu0 0.0
  %3055 = vmatpush1.msra.mxu0 0.0
  %3056 = vmatprep.subr.mxu0 0.0
  %3057 = vmatpush1.msra.mxu0 0.0
  %3058 = vmatprep.mubr.f32.mxu0 0.0
  %3059 = vmatmul.mubr.f32.gmra.mrb[0].mxu0 %v2990
  %v3060 = vpop.f32.mrb[0].mxu0
  %v3061 = vadd.f32 %v2745, %v3060
  %v3062 = vpop.f32.mrb[0].mxu0
  %3063 = vmatprep.mubr.f32.mxu0 0.0
  %3064 = vmatmul.mubr.f32.gmra.mrb[0].mxu0 %v2992
  %v3065 = vpop.f32.mrb[0].mxu0
  %v3066 = vadd.f32 %v2750, %v3065
  %v3067 = vpop.f32.mrb[0].mxu0
  %3068 = vdwg.mxu0
  %s3069 = scalar_lea.vmem %s3, 768
  %v3070 = vld [vmem:[%s3069] sm:$0xff]
  %v3071 = vld [vmem:[%s3069 + $0x8] sm:$0xff]
  %v3072 = vld [vmem:[%s3069 + $0x10] sm:$0xff]
  %v3073 = vld [vmem:[%s3069 + $0x18] sm:$0xff]
  %v3074 = vld [vmem:[%s3069 + $0x20] sm:$0xff]
  %v3075 = vld [vmem:[%s3069 + $0x28] sm:$0xff]
  %v3076 = vld [vmem:[%s3069 + $0x30] sm:$0xff]
  %v3077 = vld [vmem:[%s3069 + $0x38] sm:$0xff]
  %v3078 = vld [vmem:[%s3069 + $0x40] sm:$0xff]
  %v3079 = vld [vmem:[%s3069 + $0x48] sm:$0xff]
  %v3080 = vld [vmem:[%s3069 + $0x50] sm:$0xff]
  %v3081 = vld [vmem:[%s3069 + $0x58] sm:$0xff]
  %v3082 = vld [vmem:[%s3069 + $0x60] sm:$0xff]
  %v3083 = vld [vmem:[%s3069 + $0x68] sm:$0xff]
  %v3084 = vld [vmem:[%s3069 + $0x70] sm:$0xff]
  %v3085 = vld [vmem:[%s3069 + $0x78] sm:$0xff]
  %v3086 = vld [vmem:[%s3069 + $0x80] sm:$0xff]
  %v3087 = vld [vmem:[%s3069 + $0x88] sm:$0xff]
  %v3088 = vld [vmem:[%s3069 + $0x90] sm:$0xff]
  %v3089 = vld [vmem:[%s3069 + $0x98] sm:$0xff]
  %v3090 = vld [vmem:[%s3069 + $0xa0] sm:$0xff]
  %v3091 = vld [vmem:[%s3069 + $0xa8] sm:$0xff]
  %v3092 = vld [vmem:[%s3069 + $0xb0] sm:$0xff]
  %v3093 = vld [vmem:[%s3069 + $0xb8] sm:$0xff]
  %v3094 = vld [vmem:[%s3069 + $0xc0] sm:$0xff]
  %v3095 = vld [vmem:[%s3069 + $0xc8] sm:$0xff]
  %v3096 = vld [vmem:[%s3069 + $0xd0] sm:$0xff]
  %v3097 = vld [vmem:[%s3069 + $0xd8] sm:$0xff]
  %v3098 = vld [vmem:[%s3069 + $0xe0] sm:$0xff]
  %v3099 = vld [vmem:[%s3069 + $0xe8] sm:$0xff]
  %v3100 = vld [vmem:[%s3069 + $0xf0] sm:$0xff]
  %v3101 = vld [vmem:[%s3069 + $0xf8] sm:$0xff]
  %v3102 = vld [vmem:[%s3069 + $0x100] sm:$0xff]
  %v3103 = vld [vmem:[%s3069 + $0x108] sm:$0xff]
  %v3104 = vld [vmem:[%s3069 + $0x110] sm:$0xff]
  %v3105 = vld [vmem:[%s3069 + $0x118] sm:$0xff]
  %v3106 = vld [vmem:[%s3069 + $0x120] sm:$0xff]
  %v3107 = vld [vmem:[%s3069 + $0x128] sm:$0xff]
  %v3108 = vld [vmem:[%s3069 + $0x130] sm:$0xff]
  %v3109 = vld [vmem:[%s3069 + $0x138] sm:$0xff]
  %v3110 = vld [vmem:[%s3069 + $0x140] sm:$0xff]
  %v3111 = vld [vmem:[%s3069 + $0x148] sm:$0xff]
  %v3112 = vld [vmem:[%s3069 + $0x150] sm:$0xff]
  %v3113 = vld [vmem:[%s3069 + $0x158] sm:$0xff]
  %v3114 = vld [vmem:[%s3069 + $0x160] sm:$0xff]
  %v3115 = vld [vmem:[%s3069 + $0x168] sm:$0xff]
  %v3116 = vld [vmem:[%s3069 + $0x170] sm:$0xff]
  %v3117 = vld [vmem:[%s3069 + $0x178] sm:$0xff]
  %v3118 = vrot.slane %v2311, 2
  %v3119 = vrot.slane %v2315, 2
  %v3120 = vsel %vm744, %v3118, %v3119
  %v3121 = vsel %vm2421, %v3120, 0
  %v3123 = vsel %vm2421, %v3119, 0
  %3125 = vmatprep.subr.mxu0 0.0
  %3126 = vmatpush1.msra.mxu0 %v3070
  %3127 = vmatprep.subr.mxu0 0.0
  %3128 = vmatpush1.msra.mxu0 %v3071
  %3129 = vmatprep.subr.mxu0 0.0
  %3130 = vmatpush1.msra.mxu0 %v3072
  %3131 = vmatprep.subr.mxu0 0.0
  %3132 = vmatpush1.msra.mxu0 %v3073
  %3133 = vmatprep.subr.mxu0 0.0
  %3134 = vmatpush1.msra.mxu0 %v3074
  %3135 = vmatprep.subr.mxu0 0.0
  %3136 = vmatpush1.msra.mxu0 %v3075
  %3137 = vmatprep.subr.mxu0 0.0
  %3138 = vmatpush1.msra.mxu0 %v3076
  %3139 = vmatprep.subr.mxu0 0.0
  %3140 = vmatpush1.msra.mxu0 %v3077
  %3141 = vmatprep.subr.mxu0 0.0
  %3142 = vmatpush1.msra.mxu0 %v3078
  %3143 = vmatprep.subr.mxu0 0.0
  %3144 = vmatpush1.msra.mxu0 %v3079
  %3145 = vmatprep.subr.mxu0 0.0
  %3146 = vmatpush1.msra.mxu0 %v3080
  %3147 = vmatprep.subr.mxu0 0.0
  %3148 = vmatpush1.msra.mxu0 %v3081
  %3149 = vmatprep.subr.mxu0 0.0
  %3150 = vmatpush1.msra.mxu0 0.0
  %3151 = vmatprep.subr.mxu0 0.0
  %3152 = vmatpush1.msra.mxu0 0.0
  %3153 = vmatprep.subr.mxu0 0.0
  %3154 = vmatpush1.msra.mxu0 0.0
  %3155 = vmatprep.subr.mxu0 0.0
  %3156 = vmatpush1.msra.mxu0 0.0
  %3157 = vmatprep.subr.mxu0 0.0
  %3158 = vmatpush1.msra.mxu0 0.0
  %3159 = vmatprep.subr.mxu0 0.0
  %3160 = vmatpush1.msra.mxu0 0.0
  %3161 = vmatprep.subr.mxu0 0.0
  %3162 = vmatpush1.msra.mxu0 0.0
  %3163 = vmatprep.subr.mxu0 0.0
  %3164 = vmatpush1.msra.mxu0 0.0
  %3165 = vmatprep.subr.mxu0 0.0
  %3166 = vmatpush1.msra.mxu0 0.0
  %3167 = vmatprep.subr.mxu0 0.0
  %3168 = vmatpush1.msra.mxu0 0.0
  %3169 = vmatprep.subr.mxu0 0.0
  %3170 = vmatpush1.msra.mxu0 0.0
  %3171 = vmatprep.subr.mxu0 0.0
  %3172 = vmatpush1.msra.mxu0 0.0
  %3173 = vmatprep.subr.mxu0 0.0
  %3174 = vmatpush1.msra.mxu0 0.0
  %3175 = vmatprep.subr.mxu0 0.0
  %3176 = vmatpush1.msra.mxu0 0.0
  %3177 = vmatprep.subr.mxu0 0.0
  %3178 = vmatpush1.msra.mxu0 0.0
  %3179 = vmatprep.subr.mxu0 0.0
  %3180 = vmatpush1.msra.mxu0 0.0
  %3181 = vmatprep.subr.mxu0 0.0
  %3182 = vmatpush1.msra.mxu0 0.0
  %3183 = vmatprep.subr.mxu0 0.0
  %3184 = vmatpush1.msra.mxu0 0.0
  %3185 = vmatprep.subr.mxu0 0.0
  %3186 = vmatpush1.msra.mxu0 0.0
  %3187 = vmatprep.subr.mxu0 0.0
  %3188 = vmatpush1.msra.mxu0 0.0
  %3189 = vmatprep.mubr.f32.mxu0 0.0
  %3190 = vmatmul.mubr.f32.gmra.mrb[0].mxu0 %v3121
  %v3191 = vpop.f32.mrb[0].mxu0
  %v3192 = vadd.f32 0.0, %v3191
  %v3193 = vpop.f32.mrb[0].mxu0
  %3194 = vmatprep.mubr.f32.mxu0 0.0
  %3195 = vmatmul.mubr.f32.gmra.mrb[0].mxu0 %v3123
  %v3196 = vpop.f32.mrb[0].mxu0
  %v3197 = vadd.f32 0.0, %v3196
  %v3198 = vpop.f32.mrb[0].mxu0
  %3199 = vdwg.mxu0
  %v3200 = vrot.slane %v2312, 2
  %v3201 = vrot.slane %v2316, 2
  %v3202 = vsel %vm744, %v3200, %v3201
  %v3203 = vsel %vm2421, %v3202, 0
  %v3205 = vsel %vm2421, %v3201, 0
  %3207 = vmatprep.subr.mxu0 0.0
  %3208 = vmatpush1.msra.mxu0 %v3082
  %3209 = vmatprep.subr.mxu0 0.0
  %3210 = vmatpush1.msra.mxu0 %v3083
  %3211 = vmatprep.subr.mxu0 0.0
  %3212 = vmatpush1.msra.mxu0 %v3084
  %3213 = vmatprep.subr.mxu0 0.0
  %3214 = vmatpush1.msra.mxu0 %v3085
  %3215 = vmatprep.subr.mxu0 0.0
  %3216 = vmatpush1.msra.mxu0 %v3086
  %3217 = vmatprep.subr.mxu0 0.0
  %3218 = vmatpush1.msra.mxu0 %v3087
  %3219 = vmatprep.subr.mxu0 0.0
  %3220 = vmatpush1.msra.mxu0 %v3088
  %3221 = vmatprep.subr.mxu0 0.0
  %3222 = vmatpush1.msra.mxu0 %v3089
  %3223 = vmatprep.subr.mxu0 0.0
  %3224 = vmatpush1.msra.mxu0 %v3090
  %3225 = vmatprep.subr.mxu0 0.0
  %3226 = vmatpush1.msra.mxu0 %v3091
  %3227 = vmatprep.subr.mxu0 0.0
  %3228 = vmatpush1.msra.mxu0 %v3092
  %3229 = vmatprep.subr.mxu0 0.0
  %3230 = vmatpush1.msra.mxu0 %v3093
  %3231 = vmatprep.subr.mxu0 0.0
  %3232 = vmatpush1.msra.mxu0 0.0
  %3233 = vmatprep.subr.mxu0 0.0
  %3234 = vmatpush1.msra.mxu0 0.0
  %3235 = vmatprep.subr.mxu0 0.0
  %3236 = vmatpush1.msra.mxu0 0.0
  %3237 = vmatprep.subr.mxu0 0.0
  %3238 = vmatpush1.msra.mxu0 0.0
  %3239 = vmatprep.subr.mxu0 0.0
  %3240 = vmatpush1.msra.mxu0 0.0
  %3241 = vmatprep.subr.mxu0 0.0
  %3242 = vmatpush1.msra.mxu0 0.0
  %3243 = vmatprep.subr.mxu0 0.0
  %3244 = vmatpush1.msra.mxu0 0.0
  %3245 = vmatprep.subr.mxu0 0.0
  %3246 = vmatpush1.msra.mxu0 0.0
  %3247 = vmatprep.subr.mxu0 0.0
  %3248 = vmatpush1.msra.mxu0 0.0
  %3249 = vmatprep.subr.mxu0 0.0
  %3250 = vmatpush1.msra.mxu0 0.0
  %3251 = vmatprep.subr.mxu0 0.0
  %3252 = vmatpush1.msra.mxu0 0.0
  %3253 = vmatprep.subr.mxu0 0.0
  %3254 = vmatpush1.msra.mxu0 0.0
  %3255 = vmatprep.subr.mxu0 0.0
  %3256 = vmatpush1.msra.mxu0 0.0
  %3257 = vmatprep.subr.mxu0 0.0
  %3258 = vmatpush1.msra.mxu0 0.0
  %3259 = vmatprep.subr.mxu0 0.0
  %3260 = vmatpush1.msra.mxu0 0.0
  %3261 = vmatprep.subr.mxu0 0.0
  %3262 = vmatpush1.msra.mxu0 0.0
  %3263 = vmatprep.subr.mxu0 0.0
  %3264 = vmatpush1.msra.mxu0 0.0
  %3265 = vmatprep.subr.mxu0 0.0
  %3266 = vmatpush1.msra.mxu0 0.0
  %3267 = vmatprep.subr.mxu0 0.0
  %3268 = vmatpush1.msra.mxu0 0.0
  %3269 = vmatprep.subr.mxu0 0.0
  %3270 = vmatpush1.msra.mxu0 0.0
  %3271 = vmatprep.mubr.f32.mxu0 0.0
  %3272 = vmatmul.mubr.f32.gmra.mrb[0].mxu0 %v3203
  %v3273 = vpop.f32.mrb[0].mxu0
  %v3274 = vadd.f32 0.0, %v3273
  %v3275 = vpop.f32.mrb[0].mxu0
  %3276 = vmatprep.mubr.f32.mxu0 0.0
  %3277 = vmatmul.mubr.f32.gmra.mrb[0].mxu0 %v3205
  %v3278 = vpop.f32.mrb[0].mxu0
  %v3279 = vadd.f32 0.0, %v3278
  %v3280 = vpop.f32.mrb[0].mxu0
  %3281 = vdwg.mxu0
  %v3282 = vrot.slane %v2313, 2
  %v3283 = vrot.slane %v2317, 2
  %v3284 = vsel %vm744, %v3282, %v3283
  %v3285 = vsel %vm2421, %v3284, 0
  %v3287 = vsel %vm2421, %v3283, 0
  %3289 = vmatprep.subr.mxu0 0.0
  %3290 = vmatpush1.msra.mxu0 %v3094
  %3291 = vmatprep.subr.mxu0 0.0
  %3292 = vmatpush1.msra.mxu0 %v3095
  %3293 = vmatprep.subr.mxu0 0.0
  %3294 = vmatpush1.msra.mxu0 %v3096
  %3295 = vmatprep.subr.mxu0 0.0
  %3296 = vmatpush1.msra.mxu0 %v3097
  %3297 = vmatprep.subr.mxu0 0.0
  %3298 = vmatpush1.msra.mxu0 %v3098
  %3299 = vmatprep.subr.mxu0 0.0
  %3300 = vmatpush1.msra.mxu0 %v3099
  %3301 = vmatprep.subr.mxu0 0.0
  %3302 = vmatpush1.msra.mxu0 %v3100
  %3303 = vmatprep.subr.mxu0 0.0
  %3304 = vmatpush1.msra.mxu0 %v3101
  %3305 = vmatprep.subr.mxu0 0.0
  %3306 = vmatpush1.msra.mxu0 %v3102
  %3307 = vmatprep.subr.mxu0 0.0
  %3308 = vmatpush1.msra.mxu0 %v3103
  %3309 = vmatprep.subr.mxu0 0.0
  %3310 = vmatpush1.msra.mxu0 %v3104
  %3311 = vmatprep.subr.mxu0 0.0
  %3312 = vmatpush1.msra.mxu0 %v3105
  %3313 = vmatprep.subr.mxu0 0.0
  %3314 = vmatpush1.msra.mxu0 0.0
  %3315 = vmatprep.subr.mxu0 0.0
  %3316 = vmatpush1.msra.mxu0 0.0
  %3317 = vmatprep.subr.mxu0 0.0
  %3318 = vmatpush1.msra.mxu0 0.0
  %3319 = vmatprep.subr.mxu0 0.0
  %3320 = vmatpush1.msra.mxu0 0.0
  %3321 = vmatprep.subr.mxu0 0.0
  %3322 = vmatpush1.msra.mxu0 0.0
  %3323 = vmatprep.subr.mxu0 0.0
  %3324 = vmatpush1.msra.mxu0 0.0
  %3325 = vmatprep.subr.mxu0 0.0
  %3326 = vmatpush1.msra.mxu0 0.0
  %3327 = vmatprep.subr.mxu0 0.0
  %3328 = vmatpush1.msra.mxu0 0.0
  %3329 = vmatprep.subr.mxu0 0.0
  %3330 = vmatpush1.msra.mxu0 0.0
  %3331 = vmatprep.subr.mxu0 0.0
  %3332 = vmatpush1.msra.mxu0 0.0
  %3333 = vmatprep.subr.mxu0 0.0
  %3334 = vmatpush1.msra.mxu0 0.0
  %3335 = vmatprep.subr.mxu0 0.0
  %3336 = vmatpush1.msra.mxu0 0.0
  %3337 = vmatprep.subr.mxu0 0.0
  %3338 = vmatpush1.msra.mxu0 0.0
  %3339 = vmatprep.subr.mxu0 0.0
  %3340 = vmatpush1.msra.mxu0 0.0
  %3341 = vmatprep.subr.mxu0 0.0
  %3342 = vmatpush1.msra.mxu0 0.0
  %3343 = vmatprep.subr.mxu0 0.0
  %3344 = vmatpush1.msra.mxu0 0.0
  %3345 = vmatprep.subr.mxu0 0.0
  %3346 = vmatpush1.msra.mxu0 0.0
  %3347 = vmatprep.subr.mxu0 0.0
  %3348 = vmatpush1.msra.mxu0 0.0
  %3349 = vmatprep.subr.mxu0 0.0
  %3350 = vmatpush1.msra.mxu0 0.0
  %3351 = vmatprep.subr.mxu0 0.0
  %3352 = vmatpush1.msra.mxu0 0.0
  %3353 = vmatprep.mubr.f32.mxu0 0.0
  %3354 = vmatmul.mubr.f32.gmra.mrb[0].mxu0 %v3285
  %v3355 = vpop.f32.mrb[0].mxu0
  %v3356 = vadd.f32 0.0, %v3355
  %v3357 = vpop.f32.mrb[0].mxu0
  %3358 = vmatprep.mubr.f32.mxu0 0.0
  %3359 = vmatmul.mubr.f32.gmra.mrb[0].mxu0 %v3287
  %v3360 = vpop.f32.mrb[0].mxu0
  %v3361 = vadd.f32 0.0, %v3360
  %v3362 = vpop.f32.mrb[0].mxu0
  %3363 = vdwg.mxu0
  %v3364 = vrot.slane %v2314, 2
  %v3365 = vrot.slane %v2318, 2
  %v3366 = vsel %vm744, %v3364, %v3365
  %v3367 = vsel %vm2421, %v3366, 0
  %v3369 = vsel %vm2421, %v3365, 0
  %3371 = vmatprep.subr.mxu0 0.0
  %3372 = vmatpush1.msra.mxu0 %v3106
  %3373 = vmatprep.subr.mxu0 0.0
  %3374 = vmatpush1.msra.mxu0 %v3107
  %3375 = vmatprep.subr.mxu0 0.0
  %3376 = vmatpush1.msra.mxu0 %v3108
  %3377 = vmatprep.subr.mxu0 0.0
  %3378 = vmatpush1.msra.mxu0 %v3109
  %3379 = vmatprep.subr.mxu0 0.0
  %3380 = vmatpush1.msra.mxu0 %v3110
  %3381 = vmatprep.subr.mxu0 0.0
  %3382 = vmatpush1.msra.mxu0 %v3111
  %3383 = vmatprep.subr.mxu0 0.0
  %3384 = vmatpush1.msra.mxu0 %v3112
  %3385 = vmatprep.subr.mxu0 0.0
  %3386 = vmatpush1.msra.mxu0 %v3113
  %3387 = vmatprep.subr.mxu0 0.0
  %3388 = vmatpush1.msra.mxu0 %v3114
  %3389 = vmatprep.subr.mxu0 0.0
  %3390 = vmatpush1.msra.mxu0 %v3115
  %3391 = vmatprep.subr.mxu0 0.0
  %3392 = vmatpush1.msra.mxu0 %v3116
  %3393 = vmatprep.subr.mxu0 0.0
  %3394 = vmatpush1.msra.mxu0 %v3117
  %3395 = vmatprep.subr.mxu0 0.0
  %3396 = vmatpush1.msra.mxu0 0.0
  %3397 = vmatprep.subr.mxu0 0.0
  %3398 = vmatpush1.msra.mxu0 0.0
  %3399 = vmatprep.subr.mxu0 0.0
  %3400 = vmatpush1.msra.mxu0 0.0
  %3401 = vmatprep.subr.mxu0 0.0
  %3402 = vmatpush1.msra.mxu0 0.0
  %3403 = vmatprep.subr.mxu0 0.0
  %3404 = vmatpush1.msra.mxu0 0.0
  %3405 = vmatprep.subr.mxu0 0.0
  %3406 = vmatpush1.msra.mxu0 0.0
  %3407 = vmatprep.subr.mxu0 0.0
  %3408 = vmatpush1.msra.mxu0 0.0
  %3409 = vmatprep.subr.mxu0 0.0
  %3410 = vmatpush1.msra.mxu0 0.0
  %3411 = vmatprep.subr.mxu0 0.0
  %3412 = vmatpush1.msra.mxu0 0.0
  %3413 = vmatprep.subr.mxu0 0.0
  %3414 = vmatpush1.msra.mxu0 0.0
  %3415 = vmatprep.subr.mxu0 0.0
  %3416 = vmatpush1.msra.mxu0 0.0
  %3417 = vmatprep.subr.mxu0 0.0
  %3418 = vmatpush1.msra.mxu0 0.0
  %3419 = vmatprep.subr.mxu0 0.0
  %3420 = vmatpush1.msra.mxu0 0.0
  %3421 = vmatprep.subr.mxu0 0.0
  %3422 = vmatpush1.msra.mxu0 0.0
  %3423 = vmatprep.subr.mxu0 0.0
  %3424 = vmatpush1.msra.mxu0 0.0
  %3425 = vmatprep.subr.mxu0 0.0
  %3426 = vmatpush1.msra.mxu0 0.0
  %3427 = vmatprep.subr.mxu0 0.0
  %3428 = vmatpush1.msra.mxu0 0.0
  %3429 = vmatprep.subr.mxu0 0.0
  %3430 = vmatpush1.msra.mxu0 0.0
  %3431 = vmatprep.subr.mxu0 0.0
  %3432 = vmatpush1.msra.mxu0 0.0
  %3433 = vmatprep.subr.mxu0 0.0
  %3434 = vmatpush1.msra.mxu0 0.0
  %3435 = vmatprep.mubr.f32.mxu0 0.0
  %3436 = vmatmul.mubr.f32.gmra.mrb[0].mxu0 %v3367
  %v3437 = vpop.f32.mrb[0].mxu0
  %v3438 = vadd.f32 0.0, %v3437
  %v3439 = vpop.f32.mrb[0].mxu0
  %3440 = vmatprep.mubr.f32.mxu0 0.0
  %3441 = vmatmul.mubr.f32.gmra.mrb[0].mxu0 %v3369
  %v3442 = vpop.f32.mrb[0].mxu0
  %v3443 = vadd.f32 0.0, %v3442
  %v3444 = vpop.f32.mrb[0].mxu0
  %3445 = vdwg.mxu0
  %v3446 = vadd.f32 %v2824, %v3192
  %v3447 = vadd.f32 %v2829, %v3197
  %v3448 = vadd.f32 %v2903, %v3274
  %v3449 = vadd.f32 %v2908, %v3279
  %v3450 = vadd.f32 %v2982, %v3356
  %v3451 = vadd.f32 %v2987, %v3361
  %v3452 = vadd.f32 %v3061, %v3438
  %v3453 = vadd.f32 %v3066, %v3443
  %v3454 = vld [vmem:[%s7] sm:$0x1]
  %v3456 = vlaneseq
  %v3457 = vshrl.u32 %v3456, 7
  %v3458 = vsub.s32 0, %v3457
  %v3459 = vrot.slane %v3454, %v3458
  %v3461 = vadd.f32 %v3446, %v3459
  %v3462 = vadd.f32 %v3447, %v3459
  %v3463 = vadd.f32 %v3448, %v3459
  %v3464 = vadd.f32 %v3449, %v3459
  %v3465 = vadd.f32 %v3450, %v3459
  %v3466 = vadd.f32 %v3451, %v3459
  %v3467 = vadd.f32 %v3452, %v3459
  %v3468 = vadd.f32 %v3453, %v3459
  %v3469 = vxor.u32 %v3461, 2147483648
  %v3470 = vxor.u32 %v3462, 2147483648
  %v3471 = vxor.u32 %v3463, 2147483648
  %v3472 = vxor.u32 %v3464, 2147483648
  %v3473 = vxor.u32 %v3465, 2147483648
  %v3474 = vxor.u32 %v3466, 2147483648
  %v3475 = vxor.u32 %v3467, 2147483648
  %v3476 = vxor.u32 %v3468, 2147483648
  %v3477 = vmul.f32 %v3469, 1.442695
  %v3478 = vpow.pop %v3477
  %v3479 = vmul.f32 %v3470, 1.442695
  %v3480 = vpow.pop %v3479
  %v3481 = vmul.f32 %v3471, 1.442695
  %v3482 = vpow.pop %v3481
  %v3483 = vmul.f32 %v3472, 1.442695
  %v3484 = vpow.pop %v3483
  %v3485 = vmul.f32 %v3473, 1.442695
  %v3486 = vpow.pop %v3485
  %v3487 = vmul.f32 %v3474, 1.442695
  %v3488 = vpow.pop %v3487
  %v3489 = vmul.f32 %v3475, 1.442695
  %v3490 = vpow.pop %v3489
  %v3491 = vmul.f32 %v3476, 1.442695
  %v3492 = vpow.pop %v3491
  %v3493 = vadd.f32 %v3478, 1.0
  %v3494 = vadd.f32 %v3480, 1.0
  %v3495 = vadd.f32 %v3482, 1.0
  %v3496 = vadd.f32 %v3484, 1.0
  %v3497 = vadd.f32 %v3486, 1.0
  %v3498 = vadd.f32 %v3488, 1.0
  %v3499 = vadd.f32 %v3490, 1.0
  %v3500 = vadd.f32 %v3492, 1.0
  %v3501 = vrcp.pop %v3493
  %v3502 = vmul.f32 1.0, %v3501
  %v3503 = vrcp.pop %v3494
  %v3504 = vmul.f32 1.0, %v3503
  %v3505 = vrcp.pop %v3495
  %v3506 = vmul.f32 1.0, %v3505
  %v3507 = vrcp.pop %v3496
  %v3508 = vmul.f32 1.0, %v3507
  %v3509 = vrcp.pop %v3497
  %v3510 = vmul.f32 1.0, %v3509
  %v3511 = vrcp.pop %v3498
  %v3512 = vmul.f32 1.0, %v3511
  %v3513 = vrcp.pop %v3499
  %v3514 = vmul.f32 1.0, %v3513
  %v3515 = vrcp.pop %v3500
  %v3516 = vmul.f32 1.0, %v3515
  %v3525 = vrot.slane %v3502, 6
  %v3526 = vrot.slane %v3504, 6
  %v3527 = vsel %vm2290, %v3525, %v3526
  %v3528 = vrot.slane %v3506, 6
  %v3529 = vrot.slane %v3508, 6
  %v3530 = vsel %vm2290, %v3528, %v3529
  %v3531 = vrot.slane %v3510, 6
  %v3532 = vrot.slane %v3512, 6
  %v3533 = vsel %vm2290, %v3531, %v3532
  %v3534 = vrot.slane %v3514, 6
  %v3535 = vrot.slane %v3516, 6
  %v3536 = vsel %vm2290, %v3534, %v3535
  %v3541 = vsel %vm2290, 0.0, %v3525
  %v3542 = vsel %vm2290, 0.0, %v3528
  %v3543 = vsel %vm2290, 0.0, %v3531
  %v3544 = vsel %vm2290, 0.0, %v3534
  %v3545 = vld [vmem:[%s4] sm:$0xff]
  %v3546 = vld [vmem:[%s4 + $0x8] sm:$0xff]
  %v3547 = vld [vmem:[%s4 + $0x10] sm:$0xff]
  %v3548 = vld [vmem:[%s4 + $0x18] sm:$0xff]
  %v3549 = vld [vmem:[%s4 + $0x20] sm:$0xff]
  %v3550 = vld [vmem:[%s4 + $0x28] sm:$0xff]
  %v3551 = vld [vmem:[%s4 + $0x30] sm:$0xff]
  %v3552 = vld [vmem:[%s4 + $0x38] sm:$0xff]
  %v3553 = vld [vmem:[%s4 + $0x40] sm:$0xff]
  %v3554 = vld [vmem:[%s4 + $0x48] sm:$0xff]
  %v3555 = vld [vmem:[%s4 + $0x50] sm:$0xff]
  %v3556 = vld [vmem:[%s4 + $0x58] sm:$0xff]
  %v3557 = vld [vmem:[%s4 + $0x60] sm:$0xff]
  %v3558 = vld [vmem:[%s4 + $0x68] sm:$0xff]
  %v3559 = vld [vmem:[%s4 + $0x70] sm:$0xff]
  %v3560 = vld [vmem:[%s4 + $0x78] sm:$0xff]
  %v3561 = vld [vmem:[%s4 + $0x80] sm:$0xff]
  %v3562 = vld [vmem:[%s4 + $0x88] sm:$0xff]
  %v3563 = vld [vmem:[%s4 + $0x90] sm:$0xff]
  %v3564 = vld [vmem:[%s4 + $0x98] sm:$0xff]
  %v3565 = vld [vmem:[%s4 + $0xa0] sm:$0xff]
  %v3566 = vld [vmem:[%s4 + $0xa8] sm:$0xff]
  %v3567 = vld [vmem:[%s4 + $0xb0] sm:$0xff]
  %v3568 = vld [vmem:[%s4 + $0xb8] sm:$0xff]
  %v3569 = vld [vmem:[%s4 + $0xc0] sm:$0xff]
  %v3570 = vld [vmem:[%s4 + $0xc8] sm:$0xff]
  %v3571 = vld [vmem:[%s4 + $0xd0] sm:$0xff]
  %v3572 = vld [vmem:[%s4 + $0xd8] sm:$0xff]
  %s3573 = scalar_lea.vmem %s4, 224
  %v3574 = vld [vmem:[%s3573] sm:$0xff]
  %v3575 = vld [vmem:[%s3573 + $0x8] sm:$0xff]
  %v3576 = vld [vmem:[%s3573 + $0x10] sm:$0xff]
  %v3577 = vld [vmem:[%s3573 + $0x18] sm:$0xff]
  %v3578 = vld [vmem:[%s3573 + $0x20] sm:$0xff]
  %v3579 = vld [vmem:[%s3573 + $0x28] sm:$0xff]
  %v3580 = vld [vmem:[%s3573 + $0x30] sm:$0xff]
  %v3581 = vld [vmem:[%s3573 + $0x38] sm:$0xff]
  %v3582 = vld [vmem:[%s3573 + $0x40] sm:$0xff]
  %v3583 = vld [vmem:[%s3573 + $0x48] sm:$0xff]
  %v3584 = vld [vmem:[%s3573 + $0x50] sm:$0xff]
  %v3585 = vld [vmem:[%s3573 + $0x58] sm:$0xff]
  %v3586 = vld [vmem:[%s3573 + $0x60] sm:$0xff]
  %v3587 = vld [vmem:[%s3573 + $0x68] sm:$0xff]
  %v3588 = vld [vmem:[%s3573 + $0x70] sm:$0xff]
  %v3589 = vld [vmem:[%s3573 + $0x78] sm:$0xff]
  %v3590 = vld [vmem:[%s3573 + $0x80] sm:$0xff]
  %v3591 = vld [vmem:[%s3573 + $0x88] sm:$0xff]
  %v3592 = vld [vmem:[%s3573 + $0x90] sm:$0xff]
  %v3593 = vld [vmem:[%s3573 + $0x98] sm:$0xff]
  %v3594 = vld [vmem:[%s3573 + $0xa0] sm:$0xff]
  %v3595 = vld [vmem:[%s3573 + $0xa8] sm:$0xff]
  %v3596 = vld [vmem:[%s3573 + $0xb0] sm:$0xff]
  %v3597 = vld [vmem:[%s3573 + $0xb8] sm:$0xff]
  %v3598 = vld [vmem:[%s3573 + $0xc0] sm:$0xff]
  %v3599 = vld [vmem:[%s3573 + $0xc8] sm:$0xff]
  %v3600 = vld [vmem:[%s3573 + $0xd0] sm:$0xff]
  %v3601 = vld [vmem:[%s3573 + $0xd8] sm:$0xff]
  %v3604 = vrot.slane %v3541, 1
  %v3605 = vrot.slane %v3527, 1
  %v3606 = vsel %vm75, %v3604, %v3605
  %v3607 = vrot.slane 0.0, 1
  %v3608 = vsel %vm75, %v3605, %v3607
  %v3609 = vsel %vm1206, %v3606, 0
  %v3611 = vsel %vm1206, %v3608, 0
  %3613 = vmatprep.subr.mxu0 0.0
  %3614 = vmatpush1.msra.mxu0 %v3574
  %3615 = vmatprep.subr.mxu0 0.0
  %3616 = vmatpush1.msra.mxu0 %v3575
  %3617 = vmatprep.subr.mxu0 0.0
  %3618 = vmatpush1.msra.mxu0 %v3576
  %3619 = vmatprep.subr.mxu0 0.0
  %3620 = vmatpush1.msra.mxu0 %v3577
  %3621 = vmatprep.subr.mxu0 0.0
  %3622 = vmatpush1.msra.mxu0 %v3578
  %3623 = vmatprep.subr.mxu0 0.0
  %3624 = vmatpush1.msra.mxu0 %v3579
  %3625 = vmatprep.subr.mxu0 0.0
  %3626 = vmatpush1.msra.mxu0 %v3580
  %3627 = vmatprep.subr.mxu0 0.0
  %3628 = vmatpush1.msra.mxu0 0.0
  %3629 = vmatprep.subr.mxu0 0.0
  %3630 = vmatpush1.msra.mxu0 0.0
  %3631 = vmatprep.subr.mxu0 0.0
  %3632 = vmatpush1.msra.mxu0 0.0
  %3633 = vmatprep.subr.mxu0 0.0
  %3634 = vmatpush1.msra.mxu0 0.0
  %3635 = vmatprep.subr.mxu0 0.0
  %3636 = vmatpush1.msra.mxu0 0.0
  %3637 = vmatprep.subr.mxu0 0.0
  %3638 = vmatpush1.msra.mxu0 0.0
  %3639 = vmatprep.subr.mxu0 0.0
  %3640 = vmatpush1.msra.mxu0 0.0
  %3641 = vmatprep.subr.mxu0 0.0
  %3642 = vmatpush1.msra.mxu0 0.0
  %3643 = vmatprep.subr.mxu0 0.0
  %3644 = vmatpush1.msra.mxu0 0.0
  %3645 = vmatprep.subr.mxu0 0.0
  %3646 = vmatpush1.msra.mxu0 0.0
  %3647 = vmatprep.subr.mxu0 0.0
  %3648 = vmatpush1.msra.mxu0 0.0
  %3649 = vmatprep.subr.mxu0 0.0
  %3650 = vmatpush1.msra.mxu0 0.0
  %3651 = vmatprep.subr.mxu0 0.0
  %3652 = vmatpush1.msra.mxu0 0.0
  %3653 = vmatprep.subr.mxu0 0.0
  %3654 = vmatpush1.msra.mxu0 0.0
  %3655 = vmatprep.subr.mxu0 0.0
  %3656 = vmatpush1.msra.mxu0 0.0
  %3657 = vmatprep.subr.mxu0 0.0
  %3658 = vmatpush1.msra.mxu0 0.0
  %3659 = vmatprep.subr.mxu0 0.0
  %3660 = vmatpush1.msra.mxu0 0.0
  %3661 = vmatprep.subr.mxu0 0.0
  %3662 = vmatpush1.msra.mxu0 0.0
  %3663 = vmatprep.subr.mxu0 0.0
  %3664 = vmatpush1.msra.mxu0 0.0
  %3665 = vmatprep.subr.mxu0 0.0
  %3666 = vmatpush1.msra.mxu0 0.0
  %3667 = vmatprep.subr.mxu0 0.0
  %3668 = vmatpush1.msra.mxu0 0.0
  %3669 = vmatprep.subr.mxu0 0.0
  %3670 = vmatpush1.msra.mxu0 0.0
  %3671 = vmatprep.subr.mxu0 0.0
  %3672 = vmatpush1.msra.mxu0 0.0
  %3673 = vmatprep.subr.mxu0 0.0
  %3674 = vmatpush1.msra.mxu0 0.0
  %3675 = vmatprep.subr.mxu0 0.0
  %3676 = vmatpush1.msra.mxu0 0.0
  %3677 = vmatprep.mubr.f32.mxu0 0.0
  %3678 = vmatmul.mubr.f32.gmra.mrb[0].mxu0 %v3609
  %v3679 = vpop.f32.mrb[0].mxu0
  %v3680 = vadd.f32 0.0, %v3679
  %v3681 = vpop.f32.mrb[0].mxu0
  %3682 = vmatprep.mubr.f32.mxu0 0.0
  %3683 = vmatmul.mubr.f32.gmra.mrb[0].mxu0 %v3611
  %v3684 = vpop.f32.mrb[0].mxu0
  %v3685 = vadd.f32 0.0, %v3684
  %v3686 = vpop.f32.mrb[0].mxu0
  %3687 = vdwg.mxu0
  %v3689 = vrot.slane %v3542, 1
  %v3690 = vrot.slane %v3530, 1
  %v3691 = vsel %vm75, %v3689, %v3690
  %v3692 = vsel %vm75, %v3690, %v3607
  %v3693 = vsel %vm1206, %v3691, 0
  %v3695 = vsel %vm1206, %v3692, 0
  %3697 = vmatprep.subr.mxu0 0.0
  %3698 = vmatpush1.msra.mxu0 %v3581
  %3699 = vmatprep.subr.mxu0 0.0
  %3700 = vmatpush1.msra.mxu0 %v3582
  %3701 = vmatprep.subr.mxu0 0.0
  %3702 = vmatpush1.msra.mxu0 %v3583
  %3703 = vmatprep.subr.mxu0 0.0
  %3704 = vmatpush1.msra.mxu0 %v3584
  %3705 = vmatprep.subr.mxu0 0.0
  %3706 = vmatpush1.msra.mxu0 %v3585
  %3707 = vmatprep.subr.mxu0 0.0
  %3708 = vmatpush1.msra.mxu0 %v3586
  %3709 = vmatprep.subr.mxu0 0.0
  %3710 = vmatpush1.msra.mxu0 %v3587
  %3711 = vmatprep.subr.mxu0 0.0
  %3712 = vmatpush1.msra.mxu0 0.0
  %3713 = vmatprep.subr.mxu0 0.0
  %3714 = vmatpush1.msra.mxu0 0.0
  %3715 = vmatprep.subr.mxu0 0.0
  %3716 = vmatpush1.msra.mxu0 0.0
  %3717 = vmatprep.subr.mxu0 0.0
  %3718 = vmatpush1.msra.mxu0 0.0
  %3719 = vmatprep.subr.mxu0 0.0
  %3720 = vmatpush1.msra.mxu0 0.0
  %3721 = vmatprep.subr.mxu0 0.0
  %3722 = vmatpush1.msra.mxu0 0.0
  %3723 = vmatprep.subr.mxu0 0.0
  %3724 = vmatpush1.msra.mxu0 0.0
  %3725 = vmatprep.subr.mxu0 0.0
  %3726 = vmatpush1.msra.mxu0 0.0
  %3727 = vmatprep.subr.mxu0 0.0
  %3728 = vmatpush1.msra.mxu0 0.0
  %3729 = vmatprep.subr.mxu0 0.0
  %3730 = vmatpush1.msra.mxu0 0.0
  %3731 = vmatprep.subr.mxu0 0.0
  %3732 = vmatpush1.msra.mxu0 0.0
  %3733 = vmatprep.subr.mxu0 0.0
  %3734 = vmatpush1.msra.mxu0 0.0
  %3735 = vmatprep.subr.mxu0 0.0
  %3736 = vmatpush1.msra.mxu0 0.0
  %3737 = vmatprep.subr.mxu0 0.0
  %3738 = vmatpush1.msra.mxu0 0.0
  %3739 = vmatprep.subr.mxu0 0.0
  %3740 = vmatpush1.msra.mxu0 0.0
  %3741 = vmatprep.subr.mxu0 0.0
  %3742 = vmatpush1.msra.mxu0 0.0
  %3743 = vmatprep.subr.mxu0 0.0
  %3744 = vmatpush1.msra.mxu0 0.0
  %3745 = vmatprep.subr.mxu0 0.0
  %3746 = vmatpush1.msra.mxu0 0.0
  %3747 = vmatprep.subr.mxu0 0.0
  %3748 = vmatpush1.msra.mxu0 0.0
  %3749 = vmatprep.subr.mxu0 0.0
  %3750 = vmatpush1.msra.mxu0 0.0
  %3751 = vmatprep.subr.mxu0 0.0
  %3752 = vmatpush1.msra.mxu0 0.0
  %3753 = vmatprep.subr.mxu0 0.0
  %3754 = vmatpush1.msra.mxu0 0.0
  %3755 = vmatprep.subr.mxu0 0.0
  %3756 = vmatpush1.msra.mxu0 0.0
  %3757 = vmatprep.subr.mxu0 0.0
  %3758 = vmatpush1.msra.mxu0 0.0
  %3759 = vmatprep.subr.mxu0 0.0
  %3760 = vmatpush1.msra.mxu0 0.0
  %3761 = vmatprep.mubr.f32.mxu0 0.0
  %3762 = vmatmul.mubr.f32.gmra.mrb[0].mxu0 %v3693
  %v3763 = vpop.f32.mrb[0].mxu0
  %v3764 = vadd.f32 0.0, %v3763
  %v3765 = vpop.f32.mrb[0].mxu0
  %3766 = vmatprep.mubr.f32.mxu0 0.0
  %3767 = vmatmul.mubr.f32.gmra.mrb[0].mxu0 %v3695
  %v3768 = vpop.f32.mrb[0].mxu0
  %v3769 = vadd.f32 0.0, %v3768
  %v3770 = vpop.f32.mrb[0].mxu0
  %3771 = vdwg.mxu0
  %v3773 = vrot.slane %v3543, 1
  %v3774 = vrot.slane %v3533, 1
  %v3775 = vsel %vm75, %v3773, %v3774
  %v3776 = vsel %vm75, %v3774, %v3607
  %v3777 = vsel %vm1206, %v3775, 0
  %v3779 = vsel %vm1206, %v3776, 0
  %3781 = vmatprep.subr.mxu0 0.0
  %3782 = vmatpush1.msra.mxu0 %v3588
  %3783 = vmatprep.subr.mxu0 0.0
  %3784 = vmatpush1.msra.mxu0 %v3589
  %3785 = vmatprep.subr.mxu0 0.0
  %3786 = vmatpush1.msra.mxu0 %v3590
  %3787 = vmatprep.subr.mxu0 0.0
  %3788 = vmatpush1.msra.mxu0 %v3591
  %3789 = vmatprep.subr.mxu0 0.0
  %3790 = vmatpush1.msra.mxu0 %v3592
  %3791 = vmatprep.subr.mxu0 0.0
  %3792 = vmatpush1.msra.mxu0 %v3593
  %3793 = vmatprep.subr.mxu0 0.0
  %3794 = vmatpush1.msra.mxu0 %v3594
  %3795 = vmatprep.subr.mxu0 0.0
  %3796 = vmatpush1.msra.mxu0 0.0
  %3797 = vmatprep.subr.mxu0 0.0
  %3798 = vmatpush1.msra.mxu0 0.0
  %3799 = vmatprep.subr.mxu0 0.0
  %3800 = vmatpush1.msra.mxu0 0.0
  %3801 = vmatprep.subr.mxu0 0.0
  %3802 = vmatpush1.msra.mxu0 0.0
  %3803 = vmatprep.subr.mxu0 0.0
  %3804 = vmatpush1.msra.mxu0 0.0
  %3805 = vmatprep.subr.mxu0 0.0
  %3806 = vmatpush1.msra.mxu0 0.0
  %3807 = vmatprep.subr.mxu0 0.0
  %3808 = vmatpush1.msra.mxu0 0.0
  %3809 = vmatprep.subr.mxu0 0.0
  %3810 = vmatpush1.msra.mxu0 0.0
  %3811 = vmatprep.subr.mxu0 0.0
  %3812 = vmatpush1.msra.mxu0 0.0
  %3813 = vmatprep.subr.mxu0 0.0
  %3814 = vmatpush1.msra.mxu0 0.0
  %3815 = vmatprep.subr.mxu0 0.0
  %3816 = vmatpush1.msra.mxu0 0.0
  %3817 = vmatprep.subr.mxu0 0.0
  %3818 = vmatpush1.msra.mxu0 0.0
  %3819 = vmatprep.subr.mxu0 0.0
  %3820 = vmatpush1.msra.mxu0 0.0
  %3821 = vmatprep.subr.mxu0 0.0
  %3822 = vmatpush1.msra.mxu0 0.0
  %3823 = vmatprep.subr.mxu0 0.0
  %3824 = vmatpush1.msra.mxu0 0.0
  %3825 = vmatprep.subr.mxu0 0.0
  %3826 = vmatpush1.msra.mxu0 0.0
  %3827 = vmatprep.subr.mxu0 0.0
  %3828 = vmatpush1.msra.mxu0 0.0
  %3829 = vmatprep.subr.mxu0 0.0
  %3830 = vmatpush1.msra.mxu0 0.0
  %3831 = vmatprep.subr.mxu0 0.0
  %3832 = vmatpush1.msra.mxu0 0.0
  %3833 = vmatprep.subr.mxu0 0.0
  %3834 = vmatpush1.msra.mxu0 0.0
  %3835 = vmatprep.subr.mxu0 0.0
  %3836 = vmatpush1.msra.mxu0 0.0
  %3837 = vmatprep.subr.mxu0 0.0
  %3838 = vmatpush1.msra.mxu0 0.0
  %3839 = vmatprep.subr.mxu0 0.0
  %3840 = vmatpush1.msra.mxu0 0.0
  %3841 = vmatprep.subr.mxu0 0.0
  %3842 = vmatpush1.msra.mxu0 0.0
  %3843 = vmatprep.subr.mxu0 0.0
  %3844 = vmatpush1.msra.mxu0 0.0
  %3845 = vmatprep.mubr.f32.mxu0 0.0
  %3846 = vmatmul.mubr.f32.gmra.mrb[0].mxu0 %v3777
  %v3847 = vpop.f32.mrb[0].mxu0
  %v3848 = vadd.f32 0.0, %v3847
  %v3849 = vpop.f32.mrb[0].mxu0
  %3850 = vmatprep.mubr.f32.mxu0 0.0
  %3851 = vmatmul.mubr.f32.gmra.mrb[0].mxu0 %v3779
  %v3852 = vpop.f32.mrb[0].mxu0
  %v3853 = vadd.f32 0.0, %v3852
  %v3854 = vpop.f32.mrb[0].mxu0
  %3855 = vdwg.mxu0
  %v3857 = vrot.slane %v3544, 1
  %v3858 = vrot.slane %v3536, 1
  %v3859 = vsel %vm75, %v3857, %v3858
  %v3860 = vsel %vm75, %v3858, %v3607
  %v3861 = vsel %vm1206, %v3859, 0
  %v3863 = vsel %vm1206, %v3860, 0
  %3865 = vmatprep.subr.mxu0 0.0
  %3866 = vmatpush1.msra.mxu0 %v3595
  %3867 = vmatprep.subr.mxu0 0.0
  %3868 = vmatpush1.msra.mxu0 %v3596
  %3869 = vmatprep.subr.mxu0 0.0
  %3870 = vmatpush1.msra.mxu0 %v3597
  %3871 = vmatprep.subr.mxu0 0.0
  %3872 = vmatpush1.msra.mxu0 %v3598
  %3873 = vmatprep.subr.mxu0 0.0
  %3874 = vmatpush1.msra.mxu0 %v3599
  %3875 = vmatprep.subr.mxu0 0.0
  %3876 = vmatpush1.msra.mxu0 %v3600
  %3877 = vmatprep.subr.mxu0 0.0
  %3878 = vmatpush1.msra.mxu0 %v3601
  %3879 = vmatprep.subr.mxu0 0.0
  %3880 = vmatpush1.msra.mxu0 0.0
  %3881 = vmatprep.subr.mxu0 0.0
  %3882 = vmatpush1.msra.mxu0 0.0
  %3883 = vmatprep.subr.mxu0 0.0
  %3884 = vmatpush1.msra.mxu0 0.0
  %3885 = vmatprep.subr.mxu0 0.0
  %3886 = vmatpush1.msra.mxu0 0.0
  %3887 = vmatprep.subr.mxu0 0.0
  %3888 = vmatpush1.msra.mxu0 0.0
  %3889 = vmatprep.subr.mxu0 0.0
  %3890 = vmatpush1.msra.mxu0 0.0
  %3891 = vmatprep.subr.mxu0 0.0
  %3892 = vmatpush1.msra.mxu0 0.0
  %3893 = vmatprep.subr.mxu0 0.0
  %3894 = vmatpush1.msra.mxu0 0.0
  %3895 = vmatprep.subr.mxu0 0.0
  %3896 = vmatpush1.msra.mxu0 0.0
  %3897 = vmatprep.subr.mxu0 0.0
  %3898 = vmatpush1.msra.mxu0 0.0
  %3899 = vmatprep.subr.mxu0 0.0
  %3900 = vmatpush1.msra.mxu0 0.0
  %3901 = vmatprep.subr.mxu0 0.0
  %3902 = vmatpush1.msra.mxu0 0.0
  %3903 = vmatprep.subr.mxu0 0.0
  %3904 = vmatpush1.msra.mxu0 0.0
  %3905 = vmatprep.subr.mxu0 0.0
  %3906 = vmatpush1.msra.mxu0 0.0
  %3907 = vmatprep.subr.mxu0 0.0
  %3908 = vmatpush1.msra.mxu0 0.0
  %3909 = vmatprep.subr.mxu0 0.0
  %3910 = vmatpush1.msra.mxu0 0.0
  %3911 = vmatprep.subr.mxu0 0.0
  %3912 = vmatpush1.msra.mxu0 0.0
  %3913 = vmatprep.subr.mxu0 0.0
  %3914 = vmatpush1.msra.mxu0 0.0
  %3915 = vmatprep.subr.mxu0 0.0
  %3916 = vmatpush1.msra.mxu0 0.0
  %3917 = vmatprep.subr.mxu0 0.0
  %3918 = vmatpush1.msra.mxu0 0.0
  %3919 = vmatprep.subr.mxu0 0.0
  %3920 = vmatpush1.msra.mxu0 0.0
  %3921 = vmatprep.subr.mxu0 0.0
  %3922 = vmatpush1.msra.mxu0 0.0
  %3923 = vmatprep.subr.mxu0 0.0
  %3924 = vmatpush1.msra.mxu0 0.0
  %3925 = vmatprep.subr.mxu0 0.0
  %3926 = vmatpush1.msra.mxu0 0.0
  %3927 = vmatprep.subr.mxu0 0.0
  %3928 = vmatpush1.msra.mxu0 0.0
  %3929 = vmatprep.mubr.f32.mxu0 0.0
  %3930 = vmatmul.mubr.f32.gmra.mrb[0].mxu0 %v3861
  %v3931 = vpop.f32.mrb[0].mxu0
  %v3932 = vadd.f32 0.0, %v3931
  %v3933 = vpop.f32.mrb[0].mxu0
  %3934 = vmatprep.mubr.f32.mxu0 0.0
  %3935 = vmatmul.mubr.f32.gmra.mrb[0].mxu0 %v3863
  %v3936 = vpop.f32.mrb[0].mxu0
  %v3937 = vadd.f32 0.0, %v3936
  %v3938 = vpop.f32.mrb[0].mxu0
  %3939 = vdwg.mxu0
  %v3940 = vsel %vm1206, %v3541, 0
  %v3942 = vsel %vm1206, %v3527, 0
  %3944 = vmatprep.subr.mxu0 0.0
  %3945 = vmatpush1.msra.mxu0 %v3545
  %3946 = vmatprep.subr.mxu0 0.0
  %3947 = vmatpush1.msra.mxu0 %v3546
  %3948 = vmatprep.subr.mxu0 0.0
  %3949 = vmatpush1.msra.mxu0 %v3547
  %3950 = vmatprep.subr.mxu0 0.0
  %3951 = vmatpush1.msra.mxu0 %v3548
  %3952 = vmatprep.subr.mxu0 0.0
  %3953 = vmatpush1.msra.mxu0 %v3549
  %3954 = vmatprep.subr.mxu0 0.0
  %3955 = vmatpush1.msra.mxu0 %v3550
  %3956 = vmatprep.subr.mxu0 0.0
  %3957 = vmatpush1.msra.mxu0 %v3551
  %3958 = vmatprep.subr.mxu0 0.0
  %3959 = vmatpush1.msra.mxu0 0.0
  %3960 = vmatprep.subr.mxu0 0.0
  %3961 = vmatpush1.msra.mxu0 0.0
  %3962 = vmatprep.subr.mxu0 0.0
  %3963 = vmatpush1.msra.mxu0 0.0
  %3964 = vmatprep.subr.mxu0 0.0
  %3965 = vmatpush1.msra.mxu0 0.0
  %3966 = vmatprep.subr.mxu0 0.0
  %3967 = vmatpush1.msra.mxu0 0.0
  %3968 = vmatprep.subr.mxu0 0.0
  %3969 = vmatpush1.msra.mxu0 0.0
  %3970 = vmatprep.subr.mxu0 0.0
  %3971 = vmatpush1.msra.mxu0 0.0
  %3972 = vmatprep.subr.mxu0 0.0
  %3973 = vmatpush1.msra.mxu0 0.0
  %3974 = vmatprep.subr.mxu0 0.0
  %3975 = vmatpush1.msra.mxu0 0.0
  %3976 = vmatprep.subr.mxu0 0.0
  %3977 = vmatpush1.msra.mxu0 0.0
  %3978 = vmatprep.subr.mxu0 0.0
  %3979 = vmatpush1.msra.mxu0 0.0
  %3980 = vmatprep.subr.mxu0 0.0
  %3981 = vmatpush1.msra.mxu0 0.0
  %3982 = vmatprep.subr.mxu0 0.0
  %3983 = vmatpush1.msra.mxu0 0.0
  %3984 = vmatprep.subr.mxu0 0.0
  %3985 = vmatpush1.msra.mxu0 0.0
  %3986 = vmatprep.subr.mxu0 0.0
  %3987 = vmatpush1.msra.mxu0 0.0
  %3988 = vmatprep.subr.mxu0 0.0
  %3989 = vmatpush1.msra.mxu0 0.0
  %3990 = vmatprep.subr.mxu0 0.0
  %3991 = vmatpush1.msra.mxu0 0.0
  %3992 = vmatprep.subr.mxu0 0.0
  %3993 = vmatpush1.msra.mxu0 0.0
  %3994 = vmatprep.subr.mxu0 0.0
  %3995 = vmatpush1.msra.mxu0 0.0
  %3996 = vmatprep.subr.mxu0 0.0
  %3997 = vmatpush1.msra.mxu0 0.0
  %3998 = vmatprep.subr.mxu0 0.0
  %3999 = vmatpush1.msra.mxu0 0.0
  %4000 = vmatprep.subr.mxu0 0.0
  %4001 = vmatpush1.msra.mxu0 0.0
  %4002 = vmatprep.subr.mxu0 0.0
  %4003 = vmatpush1.msra.mxu0 0.0
  %4004 = vmatprep.subr.mxu0 0.0
  %4005 = vmatpush1.msra.mxu0 0.0
  %4006 = vmatprep.subr.mxu0 0.0
  %4007 = vmatpush1.msra.mxu0 0.0
  %4008 = vmatprep.mubr.f32.mxu0 0.0
  %4009 = vmatmul.mubr.f32.gmra.mrb[0].mxu0 %v3940
  %v4010 = vpop.f32.mrb[0].mxu0
  %v4011 = vadd.f32 %v3680, %v4010
  %v4012 = vpop.f32.mrb[0].mxu0
  %4013 = vmatprep.mubr.f32.mxu0 0.0
  %4014 = vmatmul.mubr.f32.gmra.mrb[0].mxu0 %v3942
  %v4015 = vpop.f32.mrb[0].mxu0
  %v4016 = vadd.f32 %v3685, %v4015
  %v4017 = vpop.f32.mrb[0].mxu0
  %4018 = vdwg.mxu0
  %v4019 = vsel %vm1206, %v3542, 0
  %v4021 = vsel %vm1206, %v3530, 0
  %4023 = vmatprep.subr.mxu0 0.0
  %4024 = vmatpush1.msra.mxu0 %v3552
  %4025 = vmatprep.subr.mxu0 0.0
  %4026 = vmatpush1.msra.mxu0 %v3553
  %4027 = vmatprep.subr.mxu0 0.0
  %4028 = vmatpush1.msra.mxu0 %v3554
  %4029 = vmatprep.subr.mxu0 0.0
  %4030 = vmatpush1.msra.mxu0 %v3555
  %4031 = vmatprep.subr.mxu0 0.0
  %4032 = vmatpush1.msra.mxu0 %v3556
  %4033 = vmatprep.subr.mxu0 0.0
  %4034 = vmatpush1.msra.mxu0 %v3557
  %4035 = vmatprep.subr.mxu0 0.0
  %4036 = vmatpush1.msra.mxu0 %v3558
  %4037 = vmatprep.subr.mxu0 0.0
  %4038 = vmatpush1.msra.mxu0 0.0
  %4039 = vmatprep.subr.mxu0 0.0
  %4040 = vmatpush1.msra.mxu0 0.0
  %4041 = vmatprep.subr.mxu0 0.0
  %4042 = vmatpush1.msra.mxu0 0.0
  %4043 = vmatprep.subr.mxu0 0.0
  %4044 = vmatpush1.msra.mxu0 0.0
  %4045 = vmatprep.subr.mxu0 0.0
  %4046 = vmatpush1.msra.mxu0 0.0
  %4047 = vmatprep.subr.mxu0 0.0
  %4048 = vmatpush1.msra.mxu0 0.0
  %4049 = vmatprep.subr.mxu0 0.0
  %4050 = vmatpush1.msra.mxu0 0.0
  %4051 = vmatprep.subr.mxu0 0.0
  %4052 = vmatpush1.msra.mxu0 0.0
  %4053 = vmatprep.subr.mxu0 0.0
  %4054 = vmatpush1.msra.mxu0 0.0
  %4055 = vmatprep.subr.mxu0 0.0
  %4056 = vmatpush1.msra.mxu0 0.0
  %4057 = vmatprep.subr.mxu0 0.0
  %4058 = vmatpush1.msra.mxu0 0.0
  %4059 = vmatprep.subr.mxu0 0.0
  %4060 = vmatpush1.msra.mxu0 0.0
  %4061 = vmatprep.subr.mxu0 0.0
  %4062 = vmatpush1.msra.mxu0 0.0
  %4063 = vmatprep.subr.mxu0 0.0
  %4064 = vmatpush1.msra.mxu0 0.0
  %4065 = vmatprep.subr.mxu0 0.0
  %4066 = vmatpush1.msra.mxu0 0.0
  %4067 = vmatprep.subr.mxu0 0.0
  %4068 = vmatpush1.msra.mxu0 0.0
  %4069 = vmatprep.subr.mxu0 0.0
  %4070 = vmatpush1.msra.mxu0 0.0
  %4071 = vmatprep.subr.mxu0 0.0
  %4072 = vmatpush1.msra.mxu0 0.0
  %4073 = vmatprep.subr.mxu0 0.0
  %4074 = vmatpush1.msra.mxu0 0.0
  %4075 = vmatprep.subr.mxu0 0.0
  %4076 = vmatpush1.msra.mxu0 0.0
  %4077 = vmatprep.subr.mxu0 0.0
  %4078 = vmatpush1.msra.mxu0 0.0
  %4079 = vmatprep.subr.mxu0 0.0
  %4080 = vmatpush1.msra.mxu0 0.0
  %4081 = vmatprep.subr.mxu0 0.0
  %4082 = vmatpush1.msra.mxu0 0.0
  %4083 = vmatprep.subr.mxu0 0.0
  %4084 = vmatpush1.msra.mxu0 0.0
  %4085 = vmatprep.subr.mxu0 0.0
  %4086 = vmatpush1.msra.mxu0 0.0
  %4087 = vmatprep.mubr.f32.mxu0 0.0
  %4088 = vmatmul.mubr.f32.gmra.mrb[0].mxu0 %v4019
  %v4089 = vpop.f32.mrb[0].mxu0
  %v4090 = vadd.f32 %v3764, %v4089
  %v4091 = vpop.f32.mrb[0].mxu0
  %4092 = vmatprep.mubr.f32.mxu0 0.0
  %4093 = vmatmul.mubr.f32.gmra.mrb[0].mxu0 %v4021
  %v4094 = vpop.f32.mrb[0].mxu0
  %v4095 = vadd.f32 %v3769, %v4094
  %v4096 = vpop.f32.mrb[0].mxu0
  %4097 = vdwg.mxu0
  %v4098 = vsel %vm1206, %v3543, 0
  %v4100 = vsel %vm1206, %v3533, 0
  %4102 = vmatprep.subr.mxu0 0.0
  %4103 = vmatpush1.msra.mxu0 %v3559
  %4104 = vmatprep.subr.mxu0 0.0
  %4105 = vmatpush1.msra.mxu0 %v3560
  %4106 = vmatprep.subr.mxu0 0.0
  %4107 = vmatpush1.msra.mxu0 %v3561
  %4108 = vmatprep.subr.mxu0 0.0
  %4109 = vmatpush1.msra.mxu0 %v3562
  %4110 = vmatprep.subr.mxu0 0.0
  %4111 = vmatpush1.msra.mxu0 %v3563
  %4112 = vmatprep.subr.mxu0 0.0
  %4113 = vmatpush1.msra.mxu0 %v3564
  %4114 = vmatprep.subr.mxu0 0.0
  %4115 = vmatpush1.msra.mxu0 %v3565
  %4116 = vmatprep.subr.mxu0 0.0
  %4117 = vmatpush1.msra.mxu0 0.0
  %4118 = vmatprep.subr.mxu0 0.0
  %4119 = vmatpush1.msra.mxu0 0.0
  %4120 = vmatprep.subr.mxu0 0.0
  %4121 = vmatpush1.msra.mxu0 0.0
  %4122 = vmatprep.subr.mxu0 0.0
  %4123 = vmatpush1.msra.mxu0 0.0
  %4124 = vmatprep.subr.mxu0 0.0
  %4125 = vmatpush1.msra.mxu0 0.0
  %4126 = vmatprep.subr.mxu0 0.0
  %4127 = vmatpush1.msra.mxu0 0.0
  %4128 = vmatprep.subr.mxu0 0.0
  %4129 = vmatpush1.msra.mxu0 0.0
  %4130 = vmatprep.subr.mxu0 0.0
  %4131 = vmatpush1.msra.mxu0 0.0
  %4132 = vmatprep.subr.mxu0 0.0
  %4133 = vmatpush1.msra.mxu0 0.0
  %4134 = vmatprep.subr.mxu0 0.0
  %4135 = vmatpush1.msra.mxu0 0.0
  %4136 = vmatprep.subr.mxu0 0.0
  %4137 = vmatpush1.msra.mxu0 0.0
  %4138 = vmatprep.subr.mxu0 0.0
  %4139 = vmatpush1.msra.mxu0 0.0
  %4140 = vmatprep.subr.mxu0 0.0
  %4141 = vmatpush1.msra.mxu0 0.0
  %4142 = vmatprep.subr.mxu0 0.0
  %4143 = vmatpush1.msra.mxu0 0.0
  %4144 = vmatprep.subr.mxu0 0.0
  %4145 = vmatpush1.msra.mxu0 0.0
  %4146 = vmatprep.subr.mxu0 0.0
  %4147 = vmatpush1.msra.mxu0 0.0
  %4148 = vmatprep.subr.mxu0 0.0
  %4149 = vmatpush1.msra.mxu0 0.0
  %4150 = vmatprep.subr.mxu0 0.0
  %4151 = vmatpush1.msra.mxu0 0.0
  %4152 = vmatprep.subr.mxu0 0.0
  %4153 = vmatpush1.msra.mxu0 0.0
  %4154 = vmatprep.subr.mxu0 0.0
  %4155 = vmatpush1.msra.mxu0 0.0
  %4156 = vmatprep.subr.mxu0 0.0
  %4157 = vmatpush1.msra.mxu0 0.0
  %4158 = vmatprep.subr.mxu0 0.0
  %4159 = vmatpush1.msra.mxu0 0.0
  %4160 = vmatprep.subr.mxu0 0.0
  %4161 = vmatpush1.msra.mxu0 0.0
  %4162 = vmatprep.subr.mxu0 0.0
  %4163 = vmatpush1.msra.mxu0 0.0
  %4164 = vmatprep.subr.mxu0 0.0
  %4165 = vmatpush1.msra.mxu0 0.0
  %4166 = vmatprep.mubr.f32.mxu0 0.0
  %4167 = vmatmul.mubr.f32.gmra.mrb[0].mxu0 %v4098
  %v4168 = vpop.f32.mrb[0].mxu0
  %v4169 = vadd.f32 %v3848, %v4168
  %v4170 = vpop.f32.mrb[0].mxu0
  %4171 = vmatprep.mubr.f32.mxu0 0.0
  %4172 = vmatmul.mubr.f32.gmra.mrb[0].mxu0 %v4100
  %v4173 = vpop.f32.mrb[0].mxu0
  %v4174 = vadd.f32 %v3853, %v4173
  %v4175 = vpop.f32.mrb[0].mxu0
  %4176 = vdwg.mxu0
  %v4177 = vsel %vm1206, %v3544, 0
  %v4179 = vsel %vm1206, %v3536, 0
  %4181 = vmatprep.subr.mxu0 0.0
  %4182 = vmatpush1.msra.mxu0 %v3566
  %4183 = vmatprep.subr.mxu0 0.0
  %4184 = vmatpush1.msra.mxu0 %v3567
  %4185 = vmatprep.subr.mxu0 0.0
  %4186 = vmatpush1.msra.mxu0 %v3568
  %4187 = vmatprep.subr.mxu0 0.0
  %4188 = vmatpush1.msra.mxu0 %v3569
  %4189 = vmatprep.subr.mxu0 0.0
  %4190 = vmatpush1.msra.mxu0 %v3570
  %4191 = vmatprep.subr.mxu0 0.0
  %4192 = vmatpush1.msra.mxu0 %v3571
  %4193 = vmatprep.subr.mxu0 0.0
  %4194 = vmatpush1.msra.mxu0 %v3572
  %4195 = vmatprep.subr.mxu0 0.0
  %4196 = vmatpush1.msra.mxu0 0.0
  %4197 = vmatprep.subr.mxu0 0.0
  %4198 = vmatpush1.msra.mxu0 0.0
  %4199 = vmatprep.subr.mxu0 0.0
  %4200 = vmatpush1.msra.mxu0 0.0
  %4201 = vmatprep.subr.mxu0 0.0
  %4202 = vmatpush1.msra.mxu0 0.0
  %4203 = vmatprep.subr.mxu0 0.0
  %4204 = vmatpush1.msra.mxu0 0.0
  %4205 = vmatprep.subr.mxu0 0.0
  %4206 = vmatpush1.msra.mxu0 0.0
  %4207 = vmatprep.subr.mxu0 0.0
  %4208 = vmatpush1.msra.mxu0 0.0
  %4209 = vmatprep.subr.mxu0 0.0
  %4210 = vmatpush1.msra.mxu0 0.0
  %4211 = vmatprep.subr.mxu0 0.0
  %4212 = vmatpush1.msra.mxu0 0.0
  %4213 = vmatprep.subr.mxu0 0.0
  %4214 = vmatpush1.msra.mxu0 0.0
  %4215 = vmatprep.subr.mxu0 0.0
  %4216 = vmatpush1.msra.mxu0 0.0
  %4217 = vmatprep.subr.mxu0 0.0
  %4218 = vmatpush1.msra.mxu0 0.0
  %4219 = vmatprep.subr.mxu0 0.0
  %4220 = vmatpush1.msra.mxu0 0.0
  %4221 = vmatprep.subr.mxu0 0.0
  %4222 = vmatpush1.msra.mxu0 0.0
  %4223 = vmatprep.subr.mxu0 0.0
  %4224 = vmatpush1.msra.mxu0 0.0
  %4225 = vmatprep.subr.mxu0 0.0
  %4226 = vmatpush1.msra.mxu0 0.0
  %4227 = vmatprep.subr.mxu0 0.0
  %4228 = vmatpush1.msra.mxu0 0.0
  %4229 = vmatprep.subr.mxu0 0.0
  %4230 = vmatpush1.msra.mxu0 0.0
  %4231 = vmatprep.subr.mxu0 0.0
  %4232 = vmatpush1.msra.mxu0 0.0
  %4233 = vmatprep.subr.mxu0 0.0
  %4234 = vmatpush1.msra.mxu0 0.0
  %4235 = vmatprep.subr.mxu0 0.0
  %4236 = vmatpush1.msra.mxu0 0.0
  %4237 = vmatprep.subr.mxu0 0.0
  %4238 = vmatpush1.msra.mxu0 0.0
  %4239 = vmatprep.subr.mxu0 0.0
  %4240 = vmatpush1.msra.mxu0 0.0
  %4241 = vmatprep.subr.mxu0 0.0
  %4242 = vmatpush1.msra.mxu0 0.0
  %4243 = vmatprep.subr.mxu0 0.0
  %4244 = vmatpush1.msra.mxu0 0.0
  %4245 = vmatprep.mubr.f32.mxu0 0.0
  %4246 = vmatmul.mubr.f32.gmra.mrb[0].mxu0 %v4177
  %v4247 = vpop.f32.mrb[0].mxu0
  %v4248 = vadd.f32 %v3932, %v4247
  %v4249 = vpop.f32.mrb[0].mxu0
  %4250 = vmatprep.mubr.f32.mxu0 0.0
  %4251 = vmatmul.mubr.f32.gmra.mrb[0].mxu0 %v4179
  %v4252 = vpop.f32.mrb[0].mxu0
  %v4253 = vadd.f32 %v3937, %v4252
  %v4254 = vpop.f32.mrb[0].mxu0
  %4255 = vdwg.mxu0
  %s4256 = scalar_lea.vmem %s4, 448
  %v4257 = vld [vmem:[%s4256] sm:$0xff]
  %v4258 = vld [vmem:[%s4256 + $0x8] sm:$0xff]
  %v4259 = vld [vmem:[%s4256 + $0x10] sm:$0xff]
  %v4260 = vld [vmem:[%s4256 + $0x18] sm:$0xff]
  %v4261 = vld [vmem:[%s4256 + $0x20] sm:$0xff]
  %v4262 = vld [vmem:[%s4256 + $0x28] sm:$0xff]
  %v4263 = vld [vmem:[%s4256 + $0x30] sm:$0xff]
  %v4264 = vld [vmem:[%s4256 + $0x38] sm:$0xff]
  %v4265 = vld [vmem:[%s4256 + $0x40] sm:$0xff]
  %v4266 = vld [vmem:[%s4256 + $0x48] sm:$0xff]
  %v4267 = vld [vmem:[%s4256 + $0x50] sm:$0xff]
  %v4268 = vld [vmem:[%s4256 + $0x58] sm:$0xff]
  %v4269 = vld [vmem:[%s4256 + $0x60] sm:$0xff]
  %v4270 = vld [vmem:[%s4256 + $0x68] sm:$0xff]
  %v4271 = vld [vmem:[%s4256 + $0x70] sm:$0xff]
  %v4272 = vld [vmem:[%s4256 + $0x78] sm:$0xff]
  %v4273 = vld [vmem:[%s4256 + $0x80] sm:$0xff]
  %v4274 = vld [vmem:[%s4256 + $0x88] sm:$0xff]
  %v4275 = vld [vmem:[%s4256 + $0x90] sm:$0xff]
  %v4276 = vld [vmem:[%s4256 + $0x98] sm:$0xff]
  %v4277 = vld [vmem:[%s4256 + $0xa0] sm:$0xff]
  %v4278 = vld [vmem:[%s4256 + $0xa8] sm:$0xff]
  %v4279 = vld [vmem:[%s4256 + $0xb0] sm:$0xff]
  %v4280 = vld [vmem:[%s4256 + $0xb8] sm:$0xff]
  %v4281 = vld [vmem:[%s4256 + $0xc0] sm:$0xff]
  %v4282 = vld [vmem:[%s4256 + $0xc8] sm:$0xff]
  %v4283 = vld [vmem:[%s4256 + $0xd0] sm:$0xff]
  %v4284 = vld [vmem:[%s4256 + $0xd8] sm:$0xff]
  %v4285 = vrot.slane %v3541, 2
  %v4286 = vrot.slane %v3527, 2
  %v4287 = vsel %vm744, %v4285, %v4286
  %v4288 = vrot.slane 0.0, 2
  %v4289 = vsel %vm744, %v4286, %v4288
  %v4290 = vsel %vm1206, %v4287, 0
  %v4292 = vsel %vm1206, %v4289, 0
  %4294 = vmatprep.subr.mxu0 0.0
  %4295 = vmatpush1.msra.mxu0 %v4257
  %4296 = vmatprep.subr.mxu0 0.0
  %4297 = vmatpush1.msra.mxu0 %v4258
  %4298 = vmatprep.subr.mxu0 0.0
  %4299 = vmatpush1.msra.mxu0 %v4259
  %4300 = vmatprep.subr.mxu0 0.0
  %4301 = vmatpush1.msra.mxu0 %v4260
  %4302 = vmatprep.subr.mxu0 0.0
  %4303 = vmatpush1.msra.mxu0 %v4261
  %4304 = vmatprep.subr.mxu0 0.0
  %4305 = vmatpush1.msra.mxu0 %v4262
  %4306 = vmatprep.subr.mxu0 0.0
  %4307 = vmatpush1.msra.mxu0 %v4263
  %4308 = vmatprep.subr.mxu0 0.0
  %4309 = vmatpush1.msra.mxu0 0.0
  %4310 = vmatprep.subr.mxu0 0.0
  %4311 = vmatpush1.msra.mxu0 0.0
  %4312 = vmatprep.subr.mxu0 0.0
  %4313 = vmatpush1.msra.mxu0 0.0
  %4314 = vmatprep.subr.mxu0 0.0
  %4315 = vmatpush1.msra.mxu0 0.0
  %4316 = vmatprep.subr.mxu0 0.0
  %4317 = vmatpush1.msra.mxu0 0.0
  %4318 = vmatprep.subr.mxu0 0.0
  %4319 = vmatpush1.msra.mxu0 0.0
  %4320 = vmatprep.subr.mxu0 0.0
  %4321 = vmatpush1.msra.mxu0 0.0
  %4322 = vmatprep.subr.mxu0 0.0
  %4323 = vmatpush1.msra.mxu0 0.0
  %4324 = vmatprep.subr.mxu0 0.0
  %4325 = vmatpush1.msra.mxu0 0.0
  %4326 = vmatprep.subr.mxu0 0.0
  %4327 = vmatpush1.msra.mxu0 0.0
  %4328 = vmatprep.subr.mxu0 0.0
  %4329 = vmatpush1.msra.mxu0 0.0
  %4330 = vmatprep.subr.mxu0 0.0
  %4331 = vmatpush1.msra.mxu0 0.0
  %4332 = vmatprep.subr.mxu0 0.0
  %4333 = vmatpush1.msra.mxu0 0.0
  %4334 = vmatprep.subr.mxu0 0.0
  %4335 = vmatpush1.msra.mxu0 0.0
  %4336 = vmatprep.subr.mxu0 0.0
  %4337 = vmatpush1.msra.mxu0 0.0
  %4338 = vmatprep.subr.mxu0 0.0
  %4339 = vmatpush1.msra.mxu0 0.0
  %4340 = vmatprep.subr.mxu0 0.0
  %4341 = vmatpush1.msra.mxu0 0.0
  %4342 = vmatprep.subr.mxu0 0.0
  %4343 = vmatpush1.msra.mxu0 0.0
  %4344 = vmatprep.subr.mxu0 0.0
  %4345 = vmatpush1.msra.mxu0 0.0
  %4346 = vmatprep.subr.mxu0 0.0
  %4347 = vmatpush1.msra.mxu0 0.0
  %4348 = vmatprep.subr.mxu0 0.0
  %4349 = vmatpush1.msra.mxu0 0.0
  %4350 = vmatprep.subr.mxu0 0.0
  %4351 = vmatpush1.msra.mxu0 0.0
  %4352 = vmatprep.subr.mxu0 0.0
  %4353 = vmatpush1.msra.mxu0 0.0
  %4354 = vmatprep.subr.mxu0 0.0
  %4355 = vmatpush1.msra.mxu0 0.0
  %4356 = vmatprep.subr.mxu0 0.0
  %4357 = vmatpush1.msra.mxu0 0.0
  %4358 = vmatprep.mubr.f32.mxu0 0.0
  %4359 = vmatmul.mubr.f32.gmra.mrb[0].mxu0 %v4290
  %v4360 = vpop.f32.mrb[0].mxu0
  %v4361 = vadd.f32 0.0, %v4360
  %v4362 = vpop.f32.mrb[0].mxu0
  %4363 = vmatprep.mubr.f32.mxu0 0.0
  %4364 = vmatmul.mubr.f32.gmra.mrb[0].mxu0 %v4292
  %v4365 = vpop.f32.mrb[0].mxu0
  %v4366 = vadd.f32 0.0, %v4365
  %v4367 = vpop.f32.mrb[0].mxu0
  %4368 = vdwg.mxu0
  %v4369 = vrot.slane %v3542, 2
  %v4370 = vrot.slane %v3530, 2
  %v4371 = vsel %vm744, %v4369, %v4370
  %v4372 = vsel %vm744, %v4370, %v4288
  %v4373 = vsel %vm1206, %v4371, 0
  %v4375 = vsel %vm1206, %v4372, 0
  %4377 = vmatprep.subr.mxu0 0.0
  %4378 = vmatpush1.msra.mxu0 %v4264
  %4379 = vmatprep.subr.mxu0 0.0
  %4380 = vmatpush1.msra.mxu0 %v4265
  %4381 = vmatprep.subr.mxu0 0.0
  %4382 = vmatpush1.msra.mxu0 %v4266
  %4383 = vmatprep.subr.mxu0 0.0
  %4384 = vmatpush1.msra.mxu0 %v4267
  %4385 = vmatprep.subr.mxu0 0.0
  %4386 = vmatpush1.msra.mxu0 %v4268
  %4387 = vmatprep.subr.mxu0 0.0
  %4388 = vmatpush1.msra.mxu0 %v4269
  %4389 = vmatprep.subr.mxu0 0.0
  %4390 = vmatpush1.msra.mxu0 %v4270
  %4391 = vmatprep.subr.mxu0 0.0
  %4392 = vmatpush1.msra.mxu0 0.0
  %4393 = vmatprep.subr.mxu0 0.0
  %4394 = vmatpush1.msra.mxu0 0.0
  %4395 = vmatprep.subr.mxu0 0.0
  %4396 = vmatpush1.msra.mxu0 0.0
  %4397 = vmatprep.subr.mxu0 0.0
  %4398 = vmatpush1.msra.mxu0 0.0
  %4399 = vmatprep.subr.mxu0 0.0
  %4400 = vmatpush1.msra.mxu0 0.0
  %4401 = vmatprep.subr.mxu0 0.0
  %4402 = vmatpush1.msra.mxu0 0.0
  %4403 = vmatprep.subr.mxu0 0.0
  %4404 = vmatpush1.msra.mxu0 0.0
  %4405 = vmatprep.subr.mxu0 0.0
  %4406 = vmatpush1.msra.mxu0 0.0
  %4407 = vmatprep.subr.mxu0 0.0
  %4408 = vmatpush1.msra.mxu0 0.0
  %4409 = vmatprep.subr.mxu0 0.0
  %4410 = vmatpush1.msra.mxu0 0.0
  %4411 = vmatprep.subr.mxu0 0.0
  %4412 = vmatpush1.msra.mxu0 0.0
  %4413 = vmatprep.subr.mxu0 0.0
  %4414 = vmatpush1.msra.mxu0 0.0
  %4415 = vmatprep.subr.mxu0 0.0
  %4416 = vmatpush1.msra.mxu0 0.0
  %4417 = vmatprep.subr.mxu0 0.0
  %4418 = vmatpush1.msra.mxu0 0.0
  %4419 = vmatprep.subr.mxu0 0.0
  %4420 = vmatpush1.msra.mxu0 0.0
  %4421 = vmatprep.subr.mxu0 0.0
  %4422 = vmatpush1.msra.mxu0 0.0
  %4423 = vmatprep.subr.mxu0 0.0
  %4424 = vmatpush1.msra.mxu0 0.0
  %4425 = vmatprep.subr.mxu0 0.0
  %4426 = vmatpush1.msra.mxu0 0.0
  %4427 = vmatprep.subr.mxu0 0.0
  %4428 = vmatpush1.msra.mxu0 0.0
  %4429 = vmatprep.subr.mxu0 0.0
  %4430 = vmatpush1.msra.mxu0 0.0
  %4431 = vmatprep.subr.mxu0 0.0
  %4432 = vmatpush1.msra.mxu0 0.0
  %4433 = vmatprep.subr.mxu0 0.0
  %4434 = vmatpush1.msra.mxu0 0.0
  %4435 = vmatprep.subr.mxu0 0.0
  %4436 = vmatpush1.msra.mxu0 0.0
  %4437 = vmatprep.subr.mxu0 0.0
  %4438 = vmatpush1.msra.mxu0 0.0
  %4439 = vmatprep.subr.mxu0 0.0
  %4440 = vmatpush1.msra.mxu0 0.0
  %4441 = vmatprep.mubr.f32.mxu0 0.0
  %4442 = vmatmul.mubr.f32.gmra.mrb[0].mxu0 %v4373
  %v4443 = vpop.f32.mrb[0].mxu0
  %v4444 = vadd.f32 0.0, %v4443
  %v4445 = vpop.f32.mrb[0].mxu0
  %4446 = vmatprep.mubr.f32.mxu0 0.0
  %4447 = vmatmul.mubr.f32.gmra.mrb[0].mxu0 %v4375
  %v4448 = vpop.f32.mrb[0].mxu0
  %v4449 = vadd.f32 0.0, %v4448
  %v4450 = vpop.f32.mrb[0].mxu0
  %4451 = vdwg.mxu0
  %v4452 = vrot.slane %v3543, 2
  %v4453 = vrot.slane %v3533, 2
  %v4454 = vsel %vm744, %v4452, %v4453
  %v4455 = vsel %vm744, %v4453, %v4288
  %v4456 = vsel %vm1206, %v4454, 0
  %v4458 = vsel %vm1206, %v4455, 0
  %4460 = vmatprep.subr.mxu0 0.0
  %4461 = vmatpush1.msra.mxu0 %v4271
  %4462 = vmatprep.subr.mxu0 0.0
  %4463 = vmatpush1.msra.mxu0 %v4272
  %4464 = vmatprep.subr.mxu0 0.0
  %4465 = vmatpush1.msra.mxu0 %v4273
  %4466 = vmatprep.subr.mxu0 0.0
  %4467 = vmatpush1.msra.mxu0 %v4274
  %4468 = vmatprep.subr.mxu0 0.0
  %4469 = vmatpush1.msra.mxu0 %v4275
  %4470 = vmatprep.subr.mxu0 0.0
  %4471 = vmatpush1.msra.mxu0 %v4276
  %4472 = vmatprep.subr.mxu0 0.0
  %4473 = vmatpush1.msra.mxu0 %v4277
  %4474 = vmatprep.subr.mxu0 0.0
  %4475 = vmatpush1.msra.mxu0 0.0
  %4476 = vmatprep.subr.mxu0 0.0
  %4477 = vmatpush1.msra.mxu0 0.0
  %4478 = vmatprep.subr.mxu0 0.0
  %4479 = vmatpush1.msra.mxu0 0.0
  %4480 = vmatprep.subr.mxu0 0.0
  %4481 = vmatpush1.msra.mxu0 0.0
  %4482 = vmatprep.subr.mxu0 0.0
  %4483 = vmatpush1.msra.mxu0 0.0
  %4484 = vmatprep.subr.mxu0 0.0
  %4485 = vmatpush1.msra.mxu0 0.0
  %4486 = vmatprep.subr.mxu0 0.0
  %4487 = vmatpush1.msra.mxu0 0.0
  %4488 = vmatprep.subr.mxu0 0.0
  %4489 = vmatpush1.msra.mxu0 0.0
  %4490 = vmatprep.subr.mxu0 0.0
  %4491 = vmatpush1.msra.mxu0 0.0
  %4492 = vmatprep.subr.mxu0 0.0
  %4493 = vmatpush1.msra.mxu0 0.0
  %4494 = vmatprep.subr.mxu0 0.0
  %4495 = vmatpush1.msra.mxu0 0.0
  %4496 = vmatprep.subr.mxu0 0.0
  %4497 = vmatpush1.msra.mxu0 0.0
  %4498 = vmatprep.subr.mxu0 0.0
  %4499 = vmatpush1.msra.mxu0 0.0
  %4500 = vmatprep.subr.mxu0 0.0
  %4501 = vmatpush1.msra.mxu0 0.0
  %4502 = vmatprep.subr.mxu0 0.0
  %4503 = vmatpush1.msra.mxu0 0.0
  %4504 = vmatprep.subr.mxu0 0.0
  %4505 = vmatpush1.msra.mxu0 0.0
  %4506 = vmatprep.subr.mxu0 0.0
  %4507 = vmatpush1.msra.mxu0 0.0
  %4508 = vmatprep.subr.mxu0 0.0
  %4509 = vmatpush1.msra.mxu0 0.0
  %4510 = vmatprep.subr.mxu0 0.0
  %4511 = vmatpush1.msra.mxu0 0.0
  %4512 = vmatprep.subr.mxu0 0.0
  %4513 = vmatpush1.msra.mxu0 0.0
  %4514 = vmatprep.subr.mxu0 0.0
  %4515 = vmatpush1.msra.mxu0 0.0
  %4516 = vmatprep.subr.mxu0 0.0
  %4517 = vmatpush1.msra.mxu0 0.0
  %4518 = vmatprep.subr.mxu0 0.0
  %4519 = vmatpush1.msra.mxu0 0.0
  %4520 = vmatprep.subr.mxu0 0.0
  %4521 = vmatpush1.msra.mxu0 0.0
  %4522 = vmatprep.subr.mxu0 0.0
  %4523 = vmatpush1.msra.mxu0 0.0
  %4524 = vmatprep.mubr.f32.mxu0 0.0
  %4525 = vmatmul.mubr.f32.gmra.mrb[0].mxu0 %v4456
  %v4526 = vpop.f32.mrb[0].mxu0
  %v4527 = vadd.f32 0.0, %v4526
  %v4528 = vpop.f32.mrb[0].mxu0
  %4529 = vmatprep.mubr.f32.mxu0 0.0
  %4530 = vmatmul.mubr.f32.gmra.mrb[0].mxu0 %v4458
  %v4531 = vpop.f32.mrb[0].mxu0
  %v4532 = vadd.f32 0.0, %v4531
  %v4533 = vpop.f32.mrb[0].mxu0
  %4534 = vdwg.mxu0
  %v4535 = vrot.slane %v3544, 2
  %v4536 = vrot.slane %v3536, 2
  %v4537 = vsel %vm744, %v4535, %v4536
  %v4538 = vsel %vm744, %v4536, %v4288
  %v4539 = vsel %vm1206, %v4537, 0
  %v4541 = vsel %vm1206, %v4538, 0
  %4543 = vmatprep.subr.mxu0 0.0
  %4544 = vmatpush1.msra.mxu0 %v4278
  %4545 = vmatprep.subr.mxu0 0.0
  %4546 = vmatpush1.msra.mxu0 %v4279
  %4547 = vmatprep.subr.mxu0 0.0
  %4548 = vmatpush1.msra.mxu0 %v4280
  %4549 = vmatprep.subr.mxu0 0.0
  %4550 = vmatpush1.msra.mxu0 %v4281
  %4551 = vmatprep.subr.mxu0 0.0
  %4552 = vmatpush1.msra.mxu0 %v4282
  %4553 = vmatprep.subr.mxu0 0.0
  %4554 = vmatpush1.msra.mxu0 %v4283
  %4555 = vmatprep.subr.mxu0 0.0
  %4556 = vmatpush1.msra.mxu0 %v4284
  %4557 = vmatprep.subr.mxu0 0.0
  %4558 = vmatpush1.msra.mxu0 0.0
  %4559 = vmatprep.subr.mxu0 0.0
  %4560 = vmatpush1.msra.mxu0 0.0
  %4561 = vmatprep.subr.mxu0 0.0
  %4562 = vmatpush1.msra.mxu0 0.0
  %4563 = vmatprep.subr.mxu0 0.0
  %4564 = vmatpush1.msra.mxu0 0.0
  %4565 = vmatprep.subr.mxu0 0.0
  %4566 = vmatpush1.msra.mxu0 0.0
  %4567 = vmatprep.subr.mxu0 0.0
  %4568 = vmatpush1.msra.mxu0 0.0
  %4569 = vmatprep.subr.mxu0 0.0
  %4570 = vmatpush1.msra.mxu0 0.0
  %4571 = vmatprep.subr.mxu0 0.0
  %4572 = vmatpush1.msra.mxu0 0.0
  %4573 = vmatprep.subr.mxu0 0.0
  %4574 = vmatpush1.msra.mxu0 0.0
  %4575 = vmatprep.subr.mxu0 0.0
  %4576 = vmatpush1.msra.mxu0 0.0
  %4577 = vmatprep.subr.mxu0 0.0
  %4578 = vmatpush1.msra.mxu0 0.0
  %4579 = vmatprep.subr.mxu0 0.0
  %4580 = vmatpush1.msra.mxu0 0.0
  %4581 = vmatprep.subr.mxu0 0.0
  %4582 = vmatpush1.msra.mxu0 0.0
  %4583 = vmatprep.subr.mxu0 0.0
  %4584 = vmatpush1.msra.mxu0 0.0
  %4585 = vmatprep.subr.mxu0 0.0
  %4586 = vmatpush1.msra.mxu0 0.0
  %4587 = vmatprep.subr.mxu0 0.0
  %4588 = vmatpush1.msra.mxu0 0.0
  %4589 = vmatprep.subr.mxu0 0.0
  %4590 = vmatpush1.msra.mxu0 0.0
  %4591 = vmatprep.subr.mxu0 0.0
  %4592 = vmatpush1.msra.mxu0 0.0
  %4593 = vmatprep.subr.mxu0 0.0
  %4594 = vmatpush1.msra.mxu0 0.0
  %4595 = vmatprep.subr.mxu0 0.0
  %4596 = vmatpush1.msra.mxu0 0.0
  %4597 = vmatprep.subr.mxu0 0.0
  %4598 = vmatpush1.msra.mxu0 0.0
  %4599 = vmatprep.subr.mxu0 0.0
  %4600 = vmatpush1.msra.mxu0 0.0
  %4601 = vmatprep.subr.mxu0 0.0
  %4602 = vmatpush1.msra.mxu0 0.0
  %4603 = vmatprep.subr.mxu0 0.0
  %4604 = vmatpush1.msra.mxu0 0.0
  %4605 = vmatprep.subr.mxu0 0.0
  %4606 = vmatpush1.msra.mxu0 0.0
  %4607 = vmatprep.mubr.f32.mxu0 0.0
  %4608 = vmatmul.mubr.f32.gmra.mrb[0].mxu0 %v4539
  %v4609 = vpop.f32.mrb[0].mxu0
  %v4610 = vadd.f32 0.0, %v4609
  %v4611 = vpop.f32.mrb[0].mxu0
  %4612 = vmatprep.mubr.f32.mxu0 0.0
  %4613 = vmatmul.mubr.f32.gmra.mrb[0].mxu0 %v4541
  %v4614 = vpop.f32.mrb[0].mxu0
  %v4615 = vadd.f32 0.0, %v4614
  %v4616 = vpop.f32.mrb[0].mxu0
  %4617 = vdwg.mxu0
  %v4618 = vadd.f32 %v4011, %v4361
  %v4619 = vadd.f32 %v4016, %v4366
  %v4620 = vadd.f32 %v4090, %v4444
  %v4621 = vadd.f32 %v4095, %v4449
  %v4622 = vadd.f32 %v4169, %v4527
  %v4623 = vadd.f32 %v4174, %v4532
  %v4624 = vadd.f32 %v4248, %v4610
  %v4625 = vadd.f32 %v4253, %v4615
  %v4626 = vld [vmem:[%s8] sm:$0x1]
  %v4628 = vlaneseq
  %v4629 = vshrl.u32 %v4628, 7
  %v4630 = vsub.s32 0, %v4629
  %v4631 = vrot.slane %v4626, %v4630
  %v4633 = vadd.f32 %v4618, %v4631
  %v4634 = vadd.f32 %v4619, %v4631
  %v4635 = vadd.f32 %v4620, %v4631
  %v4636 = vadd.f32 %v4621, %v4631
  %v4637 = vadd.f32 %v4622, %v4631
  %v4638 = vadd.f32 %v4623, %v4631
  %v4639 = vadd.f32 %v4624, %v4631
  %v4640 = vadd.f32 %v4625, %v4631
  %v4641 = vxor.u32 %v4633, 2147483648
  %v4642 = vxor.u32 %v4634, 2147483648
  %v4643 = vxor.u32 %v4635, 2147483648
  %v4644 = vxor.u32 %v4636, 2147483648
  %v4645 = vxor.u32 %v4637, 2147483648
  %v4646 = vxor.u32 %v4638, 2147483648
  %v4647 = vxor.u32 %v4639, 2147483648
  %v4648 = vxor.u32 %v4640, 2147483648
  %v4649 = vmul.f32 %v4641, 1.442695
  %v4650 = vpow.pop %v4649
  %v4651 = vmul.f32 %v4642, 1.442695
  %v4652 = vpow.pop %v4651
  %v4653 = vmul.f32 %v4643, 1.442695
  %v4654 = vpow.pop %v4653
  %v4655 = vmul.f32 %v4644, 1.442695
  %v4656 = vpow.pop %v4655
  %v4657 = vmul.f32 %v4645, 1.442695
  %v4658 = vpow.pop %v4657
  %v4659 = vmul.f32 %v4646, 1.442695
  %v4660 = vpow.pop %v4659
  %v4661 = vmul.f32 %v4647, 1.442695
  %v4662 = vpow.pop %v4661
  %v4663 = vmul.f32 %v4648, 1.442695
  %v4664 = vpow.pop %v4663
  %v4665 = vadd.f32 %v4650, 1.0
  %v4666 = vadd.f32 %v4652, 1.0
  %v4667 = vadd.f32 %v4654, 1.0
  %v4668 = vadd.f32 %v4656, 1.0
  %v4669 = vadd.f32 %v4658, 1.0
  %v4670 = vadd.f32 %v4660, 1.0
  %v4671 = vadd.f32 %v4662, 1.0
  %v4672 = vadd.f32 %v4664, 1.0
  %v4673 = vrcp.pop %v4665
  %v4674 = vmul.f32 1.0, %v4673
  %v4675 = vrcp.pop %v4666
  %v4676 = vmul.f32 1.0, %v4675
  %v4677 = vrcp.pop %v4667
  %v4678 = vmul.f32 1.0, %v4677
  %v4679 = vrcp.pop %v4668
  %v4680 = vmul.f32 1.0, %v4679
  %v4681 = vrcp.pop %v4669
  %v4682 = vmul.f32 1.0, %v4681
  %v4683 = vrcp.pop %v4670
  %v4684 = vmul.f32 1.0, %v4683
  %v4685 = vrcp.pop %v4671
  %v4686 = vmul.f32 1.0, %v4685
  %v4687 = vrcp.pop %v4672
  %v4688 = vmul.f32 1.0, %v4687
  %4689 = vst.msk [vmem:[%s9] sm:$0xff] %vm79, %v4674
  %4690 = vst.msk [vmem:[%s9 + $0x8] sm:$0xff] %vm79, %v4676
  %4691 = vst.msk [vmem:[%s9 + $0x10] sm:$0xff] %vm79, %v4678
  %4692 = vst.msk [vmem:[%s9 + $0x18] sm:$0xff] %vm79, %v4680
  %4693 = vst.msk [vmem:[%s9 + $0x20] sm:$0xff] %vm79, %v4682
  %4694 = vst.msk [vmem:[%s9 + $0x28] sm:$0xff] %vm79, %v4684
  %4695 = vst.msk [vmem:[%s9 + $0x30] sm:$0xff] %vm79, %v4686
  %4696 = vst.msk [vmem:[%s9 + $0x38] sm:$0xff] %vm79, %v4688
  // Predicated region
  $region38: #{_forward_impl.1} parent=0 // pred_check
    _
  $region39: #{_forward_impl.1} parent=0 // pred_check_branch
    %4698 = sbr.rel (0) target = $region41
  $region40: #{_forward_impl.1} parent=0 // pred_region
    _
  $region41: #{_forward_impl.1} parent=0 // pred_fallthru
    _
  // Predicated region
  $region42: #{_forward_impl.1} parent=0 // pred_check
    _
  $region43: #{_forward_impl.1} parent=0 // pred_check_branch
    %4700 = sbr.rel (0) target = $region45
  $region44: #{_forward_impl.1} parent=0 // pred_region
    _
  $region45: #{_forward_impl.1} parent=0 // pred_fallthru
    _

</llo_original>
